<compile_context>
chip_gen: v7x
topology: tpu7x:2x2x1
jax: 0.10.0
libtpu: 0.0.40
codegen_flags: <defaults>
</compile_context>

<pallas_src>
import functools
import math

import jax
import jax.numpy as jnp
from jax import lax
from jax.experimental import pallas as pl
from jax.experimental.pallas import tpu as pltpu

NEG_INF = -1e30  # finite large-negative mask value (no NaN from inf - inf)


def _round_up(x, m):
    return (x + m - 1) // m * m


# ---------------------------------------------------------------------------
# Kernel 1: fused QKV projection  y = x @ Wqkv + b   (bf16 MXU, f32 accumulate)
# ---------------------------------------------------------------------------
def _qkv_proj_kernel(x_ref, w_ref, b_ref, o_ref):
    y = jnp.dot(x_ref[...], w_ref[...], preferred_element_type=jnp.float32)
    o_ref[...] = (y + b_ref[...]).astype(o_ref.dtype)   # bias add in f32 on VPU


def qkv_projection(x2, w_qkv, b_qkv, *, tm=512, out_dtype=jnp.bfloat16):
    """x2: [N, D] -> [N_pad, 3*D] (out_dtype). Extra padded rows are harmless."""
    n, d = x2.shape
    d3 = w_qkv.shape[1]
    tm = min(tm, _round_up(n, 256))
    n_pad = _round_up(n, tm)
    if n_pad != n:
        x2 = jnp.pad(x2, ((0, n_pad - n), (0, 0)))

    flops = 2 * n_pad * d * d3
    bytes_accessed = (n_pad * d * x2.dtype.itemsize
                      + d * d3 * w_qkv.dtype.itemsize
                      + n_pad * d3 * jnp.dtype(out_dtype).itemsize)

    # TODO(synk): for large d_model (>= 2048) tile the 3*D output columns so the
    # resident Wqkv block also fits v7x's 64 MiB VMEM.
    return pl.pallas_call(
        _qkv_proj_kernel,
        out_shape=jax.ShapeDtypeStruct((n_pad, d3), out_dtype),
        grid_spec=pltpu.PrefetchScalarGridSpec(
            num_scalar_prefetch=0,
            grid=(n_pad // tm,),
            in_specs=[
                pl.BlockSpec((tm, d), lambda i: (i, 0)),    # x row tile
                pl.BlockSpec((d, d3), lambda i: (0, 0)),    # Wqkv (resident)
                pl.BlockSpec((1, d3), lambda i: (0, 0)),    # bias (f32)
            ],
            out_specs=pl.BlockSpec((tm, d3), lambda i: (i, 0)),
        ),
        compiler_params=pltpu.CompilerParams(
            dimension_semantics=("parallel",)),
        cost_estimate=pl.CostEstimate(flops=int(flops), transcendentals=0,
                                      bytes_accessed=int(bytes_accessed)),
    )(x2, w_qkv, b_qkv)


# ---------------------------------------------------------------------------
# Kernel 2: banded (sliding-window) attention, one band per grid step.
# q_ref: (Tq, Dh) -- already pre-scaled by 1/sqrt(Dh) via the projection.
# k_ref/v_ref: (S_pad, Dh) -- whole sequence for this (batch, head), resident.
# ---------------------------------------------------------------------------
def _band_attn_kernel(q_ref, k_ref, v_ref, o_ref, *,
                      block_q, band, window, w_pad, seq_len, seq_pad):
    qi = pl.program_id(1)
    q0 = qi * block_q                              # first query position
    start = jnp.clip(q0 - w_pad, 0, seq_pad - band)
    start = pl.multiple_of(start, 128)             # always a multiple of 128

    q = q_ref[...]                                 # (Tq, Dh)   bf16, pre-scaled
    k = k_ref[pl.ds(start, band), :]               # (band, Dh) bf16
    v = v_ref[pl.ds(start, band), :]               # (band, Dh) bf16

    # q @ k.T on the MXU, f32 accumulation.
    s = lax.dot_general(q, k, (((1,), (1,)), ((), ())),
                        preferred_element_type=jnp.float32)   # (Tq, band)

    # Band + boundary mask (true one-sided window + sequence-end mask).
    q_pos = q0 + lax.broadcasted_iota(jnp.int32, s.shape, 0)
    k_pos = start + lax.broadcasted_iota(jnp.int32, s.shape, 1)
    delta = q_pos - k_pos
    valid = (delta >= -window) & (delta <= window) & (k_pos < seq_len)
    s = jnp.where(valid, s, NEG_INF)

    # Single-pass softmax over the band (band covers the whole valid range, so
    # no online rescaling is needed).  Every real query row has its diagonal in
    # range, so masked entries underflow to exactly 0 after the max-shift.
    m = s.max(axis=-1, keepdims=True)
    p = jnp.exp(s - m)                             # f32 exp (safe on v5e..v7x)
    l = p.sum(axis=-1, keepdims=True)
    acc = lax.dot_general(p.astype(v.dtype), v, (((1,), (0,)), ((), ())),
                          preferred_element_type=jnp.float32)
    o_ref[...] = (acc * pl.reciprocal(l, approx=True)).astype(o_ref.dtype)


def longformer_self_attention(x, w_q, b_q, w_k, b_k, w_v, b_v, *,
                              n_heads, attention_window,
                              block_q=256, proj_rows=512,
                              compute_dtype=jnp.bfloat16):
    """Longformer 'sliding_chunks' local MHA (eval mode).

    x: [B, S, D].  w_*: [D, D] ([in, out] layout).  b_*: [D].
    attention_window = one-sided window w; each token attends to the 2w+1
    tokens centred on itself (clipped at the sequence ends).
    """
    b, s, d = x.shape
    h = n_heads
    assert d % h == 0
    dh = d // h
    w = attention_window
    scale = 1.0 / math.sqrt(dh)

    # ---- fused QKV projection (1/sqrt(dh) folded into the Q projection) ------
    w_qkv = jnp.concatenate([w_q * scale, w_k, w_v], axis=1).astype(compute_dtype)
    b_qkv = jnp.concatenate([b_q * scale, b_k, b_v]).reshape(1, 3 * d)
    b_qkv = b_qkv.astype(jnp.float32)

    tq = block_q
    s_pad = _round_up(s, tq)
    x_pad = jnp.pad(x, ((0, 0), (0, s_pad - s), (0, 0))) if s_pad != s else x
    x2 = x_pad.reshape(b * s_pad, d).astype(compute_dtype)

    # qkv layout: [row = batch*S_pad + pos, col = {q|k|v}*D + head*Dh + 0..Dh)
    qkv = qkv_projection(x2, w_qkv, b_qkv, tm=proj_rows, out_dtype=compute_dtype)

    # ---- banded attention -----------------------------------------------------
    n_q_blocks = s_pad // tq
    bh = b * h
    w_pad = _round_up(max(w, 1), 128)              # sublane/lane aligned halo
    band = min(s_pad, tq + 2 * w_pad)              # per-q-block kv band width

    # Read q/k/v directly from the projection layout; write output directly in
    # head-merged (B*S_pad, D) layout -> zero wrapper transposes in HBM.
    def q_map(hi, qi):
        return ((hi // h) * n_q_blocks + qi, hi % h)

    def k_map(hi, qi):
        return (hi // h, h + hi % h)

    def v_map(hi, qi):
        return (hi // h, 2 * h + hi % h)

    def o_map(hi, qi):
        return ((hi // h) * n_q_blocks + qi, hi % h)

    cbytes = jnp.dtype(compute_dtype).itemsize
    obytes = jnp.dtype(x.dtype).itemsize
    steps = bh * n_q_blocks
    flops = steps * 4 * tq * band * dh
    transcendentals = steps * tq * band
    bytes_accessed = (steps * tq * dh * cbytes        # q tiles
                      + bh * 2 * s_pad * dh * cbytes  # resident K/V per head
                      + steps * tq * dh * obytes)     # output tiles

    kernel = functools.partial(
        _band_attn_kernel, block_q=tq, band=band, window=w, w_pad=w_pad,
        seq_len=s, seq_pad=s_pad)

    out = pl.pallas_call(
        kernel,
        out_shape=jax.ShapeDtypeStruct((b * s_pad, d), x.dtype),
        grid_spec=pltpu.PrefetchScalarGridSpec(
            num_scalar_prefetch=0,
            grid=(bh, n_q_blocks),
            in_specs=[
                pl.BlockSpec((tq, dh), q_map),        # q tile
                pl.BlockSpec((s_pad, dh), k_map),     # K (resident per head)
                pl.BlockSpec((s_pad, dh), v_map),     # V (resident per head)
            ],
            out_specs=pl.BlockSpec((tq, dh), o_map),
        ),
        compiler_params=pltpu.CompilerParams(
            dimension_semantics=("parallel", "parallel")),
        cost_estimate=pl.CostEstimate(flops=int(flops),
                                      transcendentals=int(transcendentals),
                                      bytes_accessed=int(bytes_accessed)),
    )(qkv, qkv, qkv)

    out = out.reshape(b, s_pad, d)
    return out[:, :s, :] if s_pad != s else out


if __name__ == "__main__":
    key = jax.random.PRNGKey(0)
    batch, seq, d_model, n_heads = 2, 1000, 256, 2    # head_dim = 128 (lane-dense)
    window = 128                                      # one-sided window (2w+1 total)

    kx, kq, kk, kv_, kbq, kbk, kbv = jax.random.split(key, 7)
    bound = 1.0 / math.sqrt(d_model)
    x = jax.random.normal(kx, (batch, seq, d_model), jnp.float32)
    w_q = jax.random.uniform(kq, (d_model, d_model), jnp.float32, -bound, bound)
    w_k = jax.random.uniform(kk, (d_model, d_model), jnp.float32, -bound, bound)
    w_v = jax.random.uniform(kv_, (d_model, d_model), jnp.float32, -bound, bound)
    b_q = jax.random.uniform(kbq, (d_model,), jnp.float32, -bound, bound)
    b_k = jax.random.uniform(kbk, (d_model,), jnp.float32, -bound, bound)
    b_v = jax.random.uniform(kbv, (d_model,), jnp.float32, -bound, bound)

    y = longformer_self_attention(x, w_q, b_q, w_k, b_k, w_v, b_v,
                                  n_heads=n_heads, attention_window=window)
    y = jax.block_until_ready(y)

    # Pure-JAX f32 reference: dense banded attention (same math as Longformer
    # sliding_chunks + mask_invalid_locations, eval-mode dropout = identity).
    dh = d_model // n_heads

    def split_heads(z):
        return z.reshape(batch, seq, n_heads, dh).transpose(0, 2, 1, 3)

    qr = split_heads(x @ w_q + b_q) / math.sqrt(dh)
    kr = split_heads(x @ w_k + b_k)
    vr = split_heads(x @ w_v + b_v)
    scores = jnp.einsum("bhqd,bhkd->bhqk", qr, kr)
    pos = jnp.arange(seq)
    band_mask = jnp.abs(pos[:, None] - pos[None, :]) <= window
    scores = jnp.where(band_mask[None, None], scores, -jnp.inf)
    probs = jax.nn.softmax(scores, axis=-1)
    ref = jnp.einsum("bhqk,bhkd->bhqd", probs, vr)
    ref = ref.transpose(0, 2, 1, 3).reshape(batch, seq, d_model)

    assert y.shape == (batch, seq, d_model)
    err = float(jnp.max(jnp.abs(y - ref)))
    # bf16 MXU inputs with f32 accumulation -> loosened tolerance vs f32 ref.
    assert err < 5e-2, f"max abs error {err}"
    print("KERNEL_OK")
</pallas_src>

<mosaic_0001>
module attributes {stable_mosaic.version = 11 : i64} {
  func.func @_qkv_proj_kernel(%arg0: i32, %arg1: memref<512x256xbf16, #tpu.memory_space<vmem>>, %arg2: memref<256x768xbf16, #tpu.memory_space<vmem>>, %arg3: memref<1x768xf32, #tpu.memory_space<vmem>>, %arg4: memref<512x768xbf16, #tpu.memory_space<vmem>>) attributes {dimension_semantics = [#tpu.dimension_semantics<parallel>], iteration_bounds = array<i64: 4>, scalar_prefetch = 0 : i64, scratch_operands = 0 : i64, tpu.core_type = #tpu.core_type<tc>, window_params = [{transform_indices = @transform_0, window_bounds = array<i64: 512, 256>}, {pipeline_mode = #tpu.pipeline_mode<synchronous>, transform_indices = @transform_1, window_bounds = array<i64: 256, 768>}, {pipeline_mode = #tpu.pipeline_mode<synchronous>, transform_indices = @transform_2, window_bounds = array<i64: 1, 768>}, {transform_indices = @transform_3, window_bounds = array<i64: 512, 768>}]} {
    %c0 = arith.constant 0 : index
    %c0_0 = arith.constant 0 : index
    %0 = vector.load %arg1[%c0, %c0_0] : memref<512x256xbf16, #tpu.memory_space<vmem>>, vector<512x256xbf16>
    %c0_1 = arith.constant 0 : index
    %c0_2 = arith.constant 0 : index
    %1 = vector.load %arg2[%c0_1, %c0_2] : memref<256x768xbf16, #tpu.memory_space<vmem>>, vector<256x768xbf16>
    %cst = arith.constant dense<0.000000e+00> : vector<512x768xf32>
    %2 = tpu.matmul %0, %1, %cst {dimension_numbers = #tpu.dot_dimension_numbers<[1], [0], [0], [1], [0, 0, 1, 1], [], []>} : vector<512x256xbf16>, vector<256x768xbf16>, vector<512x768xf32> -> vector<512x768xf32>
    %c0_3 = arith.constant 0 : index
    %c0_4 = arith.constant 0 : index
    %3 = vector.load %arg3[%c0_3, %c0_4] : memref<1x768xf32, #tpu.memory_space<vmem>>, vector<1x768xf32>
    %4 = vector.broadcast %3 : vector<1x768xf32> to vector<512x768xf32>
    %5 = arith.addf %2, %4 : vector<512x768xf32>
    %6 = arith.truncf %5 : vector<512x768xf32> to vector<512x768xbf16>
    %c0_5 = arith.constant 0 : index
    %c0_6 = arith.constant 0 : index
    %7 = vector.load %arg4[%c0_5, %c0_6] : memref<512x768xbf16, #tpu.memory_space<vmem>>, vector<512x768xbf16>
    tpu.vector_store %arg4[%c0_5, %c0_6], %6 {strides = array<i32>} : memref<512x768xbf16, #tpu.memory_space<vmem>>, vector<512x768xbf16>,
    return
  }
  func.func @transform_0(%arg0: i32) -> (i32, i32) {
    %c0_i32 = arith.constant 0 : i32
    %c0_i32_0 = arith.constant 0 : i32
    return %arg0, %c0_i32 : i32, i32
  }
  func.func @transform_1(%arg0: i32) -> (i32, i32) {
    %c0_i32 = arith.constant 0 : i32
    %c0_i32_0 = arith.constant 0 : i32
    %c0_i32_1 = arith.constant 0 : i32
    return %c0_i32, %c0_i32_0 : i32, i32
  }
  func.func @transform_2(%arg0: i32) -> (i32, i32) {
    %c0_i32 = arith.constant 0 : i32
    %c0_i32_0 = arith.constant 0 : i32
    %c0_i32_1 = arith.constant 0 : i32
    return %c0_i32, %c0_i32_0 : i32, i32
  }
  func.func @transform_3(%arg0: i32) -> (i32, i32) {
    %c0_i32 = arith.constant 0 : i32
    %c0_i32_0 = arith.constant 0 : i32
    return %arg0, %c0_i32 : i32, i32
  }
}

</mosaic_0001>

<llo_original>
// kernel: tpu_custom_call.1
$region0: #{tpu_custom_call.1}
  #allocation0 [shape = 'u32[]', space=smem, size = 0x4, offset = 0x4, fixed_abs, tag = 'smem constant byte address 0x4 - core index']
  #allocation1 [shape = 'u32[144,128]{1,0:T(1,128)}', space=vmem, size = 0x12000, scoped, tag = 'internal scratch']
  %s0 = inlined_call_operand.hbm [shape: bf16[2048,256], index: 0, kind: input, shape index: {}]
  %s1 = inlined_call_operand.hbm [shape: bf16[256,768], index: 1, kind: input, shape index: {}]
  %s2 = inlined_call_operand.hbm [shape: f32[1,768], index: 2, kind: input, shape index: {}]
  %s3 = inlined_call_operand.hbm [shape: bf16[2048,768], index: 3, kind: output, shape index: {}]
  %s4 = sld [smem:[#allocation0]]
  $region57: #{tpu_custom_call.1} parent=0
    _
  %s6 = ssub.s32 1, %s4
  %s7 = scalar_select 0, %s6, %s4
  $region1: #{tpu_custom_call.1} parent=0
    #allocation2 [shape = 'u8[524288]{0}', space=vmem, size = 0x80000, scoped, tag = 'input window, operand 0']
    #allocation3 [shape = 's32[2]{0}', space=sflag, size = 0x8, scoped, tag = 'scoped memory for tpu_custom_call.1']
    #allocation4 [shape = 's32[2]{0}', space=sflag, size = 0x8, scoped, tag = 'scoped memory for tpu_custom_call.1']
    #allocation5 [shape = 'u8[393216]{0}', space=vmem, size = 0x60000, scoped, tag = 'input window, operand 1, single buffered']
    #allocation6 [shape = 's32[1]{0}', space=sflag, size = 0x4, scoped, tag = 'scoped memory for tpu_custom_call.1']
    #allocation7 [shape = 'u8[3072]{0}', space=vmem, size = 0xc00, scoped, tag = 'input window, operand 2, single buffered']
    #allocation8 [shape = 'u8[1572864]{0}', space=vmem, size = 0x180000, scoped, tag = 'output window, operand 0']
    %8 = vsyncpa [#allocation3], 0
    %s9 = scalar_lea.sflag [#allocation3], 1
    %10 = vsyncpa %s9, 0
    %11 = vsyncpa [#allocation6], 0
    %12 = vsyncpa [#allocation4], 0
    %s13 = scalar_lea.sflag [#allocation4], 1
    %14 = vsyncpa %s13, 0
    loop: start=0, step=1, limit=6
    $region2: #{tpu_custom_call.1} parent=1 // loop_pre_header
      _
    $region3: #{tpu_custom_call.1} parent=1 // loop_header
      %s16 = sphi 0, %s20
      %p17 = scmp.ge.s32.totalorder %s16, 6
      %s26 = sphi 0, %s28
      %s29 = sphi 0, %s26
      %s30 = sphi 0, %s29
      %s46 = sphi 0, %s30
      %s50 = sphi 0, %s50
      %s52 = sphi 0, %s50
      %s53 = sphi 0, %s52
      %s67 = sphi 0, %s53
      %s71 = sphi 0, %s71
      %s73 = sphi 0, %s71
      %s74 = sphi 0, %s73
      %s88 = sphi 0, %s74
      %s94 = sphi 0, %s96
      %s97 = sphi 0, %s94
      %s98 = sphi 0, %s97
      %s114 = sphi 0, %s98
    $region4: #{tpu_custom_call.1} parent=1 // loop_header_branch
      %19 = sbr.rel (%p17) target = $region8
    $region5: #{tpu_custom_call.1} parent=1 // loop_body
      %s21 = ssub.s32 %s16, 1
      %s22 = ssub.s32 %s16, 2
      %s23 = sadd.s32 %s16, 1
      %s24 = ssub.s32 %s16, %s23
      %p25 = scmp.eq.s32.totalorder %s24, 0
      %s27 = sadd.s32 %s26, 1
      %s28 = scalar_select %p25, %s26, %s27
      %p31 = pneg %p25
      %p32 = scmp.eq.s32.totalorder %s16, 3
      %p33 = por %p31, %p32
      %p34 = scmp.ne.s32.totalorder %s26, %s29
      %p35 = scmp.eq.s32.totalorder %s16, 0
      %p36 = por %p34, %p35
      %p37 = scmp.ne.s32.totalorder %s26, %s29
      %p38 = scmp.eq.s32.totalorder %s21, 3
      %p39 = por %p37, %p38
      %p40 = scmp.ne.s32.totalorder %s29, %s30
      %p41 = scmp.eq.s32.totalorder %s21, 0
      %p42 = por %p40, %p41
      %p43 = scmp.ne.s32.totalorder %s29, %s30
      %p44 = scmp.eq.s32.totalorder %s22, 3
      %p45 = por %p43, %p44
      %p47 = scmp.ne.s32.totalorder %s30, %s46
      %p48 = scmp.eq.s32.totalorder %s22, 0
      %p49 = por %p47, %p48
      %s51 = sadd.s32 %s50, 1
      %p54 = scmp.eq.s32.totalorder %s16, 3
      %p55 = scmp.ne.s32.totalorder %s50, %s52
      %p56 = scmp.eq.s32.totalorder %s16, 0
      %p57 = por %p55, %p56
      %p58 = scmp.ne.s32.totalorder %s50, %s52
      %p59 = scmp.eq.s32.totalorder %s21, 3
      %p60 = por %p58, %p59
      %p61 = scmp.ne.s32.totalorder %s52, %s53
      %p62 = scmp.eq.s32.totalorder %s21, 0
      %p63 = por %p61, %p62
      %p64 = scmp.ne.s32.totalorder %s52, %s53
      %p65 = scmp.eq.s32.totalorder %s22, 3
      %p66 = por %p64, %p65
      %p68 = scmp.ne.s32.totalorder %s53, %s67
      %p69 = scmp.eq.s32.totalorder %s22, 0
      %p70 = por %p68, %p69
      %s72 = sadd.s32 %s71, 1
      %p75 = scmp.eq.s32.totalorder %s16, 3
      %p76 = scmp.ne.s32.totalorder %s71, %s73
      %p77 = scmp.eq.s32.totalorder %s16, 0
      %p78 = por %p76, %p77
      %p79 = scmp.ne.s32.totalorder %s71, %s73
      %p80 = scmp.eq.s32.totalorder %s21, 3
      %p81 = por %p79, %p80
      %p82 = scmp.ne.s32.totalorder %s73, %s74
      %p83 = scmp.eq.s32.totalorder %s21, 0
      %p84 = por %p82, %p83
      %p85 = scmp.ne.s32.totalorder %s73, %s74
      %p86 = scmp.eq.s32.totalorder %s22, 3
      %p87 = por %p85, %p86
      %p89 = scmp.ne.s32.totalorder %s74, %s88
      %p90 = scmp.eq.s32.totalorder %s22, 0
      %p91 = por %p89, %p90
      %s92 = ssub.s32 %s16, %s23
      %p93 = scmp.eq.s32.totalorder %s92, 0
      %s95 = sadd.s32 %s94, 1
      %s96 = scalar_select %p93, %s94, %s95
      %p99 = pneg %p93
      %p100 = scmp.eq.s32.totalorder %s16, 3
      %p101 = por %p99, %p100
      %p102 = scmp.ne.s32.totalorder %s94, %s97
      %p103 = scmp.eq.s32.totalorder %s16, 0
      %p104 = por %p102, %p103
      %p105 = scmp.ne.s32.totalorder %s94, %s97
      %p106 = scmp.eq.s32.totalorder %s21, 3
      %p107 = por %p105, %p106
      %p108 = scmp.ne.s32.totalorder %s97, %s98
      %p109 = scmp.eq.s32.totalorder %s21, 0
      %p110 = por %p108, %p109
      %p111 = scmp.ne.s32.totalorder %s97, %s98
      %p112 = scmp.eq.s32.totalorder %s22, 3
      %p113 = por %p111, %p112
      %p115 = scmp.ne.s32.totalorder %s98, %s114
      %p116 = scmp.eq.s32.totalorder %s22, 0
      %p117 = por %p115, %p116
      %p118 = scmp.le.s32.totalorder 1, %s16
      %p119 = scmp.lt.s32.totalorder %s16, 5
      %p120 = pnand %p118, %p119
      %p121 = pneg %p120
      // Predicated region
      $region9: #{tpu_custom_call.1} parent=5 // pred_check
        _
      $region10: #{tpu_custom_call.1} parent=5 // pred_check_branch
        %123 = sbr.rel (%p120) target = $region12
      $region11: #{tpu_custom_call.1} parent=5 // pred_region
        %s124 = ssub.s32 %s16, 1
        // Predicated region
        $region13: #{tpu_custom_call.1} parent=11 // pred_check
          %p125 = pneg %p63
        $region14: #{tpu_custom_call.1} parent=11 // pred_check_branch
          %127 = sbr.rel (%p125) target = $region16
        $region15: #{tpu_custom_call.1} parent=11 // pred_region
          %s129 = ssub.s32 12288, 12288
          %130 = vsyncadd [#allocation6], %s129
          %s131 = sshll.u32 [#allocation5], 4
          %s132 = int_to_ptr.vmem [resolvable:$true] %s131
          %137 = dma.hbm_to_vmem [thread:$0]  %s1, 12288, %s132, [#allocation6], 384, 384, 24
        $region16: #{tpu_custom_call.1} parent=11 // pred_fallthru
          _
        // Predicated region
        $region17: #{tpu_custom_call.1} parent=11 // pred_check
          %p138 = pneg %p84
        $region18: #{tpu_custom_call.1} parent=11 // pred_check_branch
          %140 = sbr.rel (%p138) target = $region20
        $region19: #{tpu_custom_call.1} parent=11 // pred_region
          %s142 = ssub.s32 96, 96
          %143 = vsyncadd [#allocation6], %s142
          %s145 = sshll.u32 [#allocation7], 4
          %s146 = int_to_ptr.vmem [resolvable:$true] %s145
          %148 = dma.hbm_to_vmem [thread:$0]  %s2, 96, %s146, [#allocation6]
        $region20: #{tpu_custom_call.1} parent=11 // pred_fallthru
          _
      $region12: #{tpu_custom_call.1} parent=5 // pred_fallthru
        _
      %p149 = scmp.lt.s32.totalorder %s16, 4
      // Predicated region
      $region21: #{tpu_custom_call.1} parent=5 // pred_check
        %p150 = pneg %p149
      $region22: #{tpu_custom_call.1} parent=5 // pred_check_branch
        %152 = sbr.rel (%p150) target = $region24
      $region23: #{tpu_custom_call.1} parent=5 // pred_region
        // Predicated region
        $region25: #{tpu_custom_call.1} parent=23 // pred_check
          %p153 = pneg %p36
        $region26: #{tpu_custom_call.1} parent=23 // pred_check_branch
          %155 = sbr.rel (%p153) target = $region28
        $region27: #{tpu_custom_call.1} parent=23 // pred_region
          %s156 = sand.u32 %s26, 1
          %s157 = scalar_lea.sflag [#allocation3], %s156
          %s158 = sand.u32 %s26, 1
          %s159 = smul.addr %s158, 512
          %s160 = scalar_lea.vmem [#allocation2], %s159
          %s161 = smul.u32 64, %s16
          %s163 = ssub.s32 8192, 8192
          %164 = vsyncadd %s157, %s163
          %s165 = smul.addr %s161, 2
          %s166 = smul.addr %s165, 64
          %s167 = scalar_lea.hbm %s0, %s166
          %s168 = sshll.u32 %s160, 4
          %s169 = int_to_ptr.vmem [resolvable:$true] %s168
          %174 = dma.hbm_to_vmem [thread:$0]  %s167, 8192, %s169, %s157, 128, 128, 8
        $region28: #{tpu_custom_call.1} parent=23 // pred_fallthru
          _
      $region24: #{tpu_custom_call.1} parent=5 // pred_fallthru
        _
      %p175 = scmp.le.s32.totalorder 1, %s16
      %p176 = scmp.lt.s32.totalorder %s16, 5
      %p177 = pnand %p175, %p176
      %p178 = pneg %p177
      // Predicated region
      $region29: #{tpu_custom_call.1} parent=5 // pred_check
        _
      $region30: #{tpu_custom_call.1} parent=5 // pred_check_branch
        %180 = sbr.rel (%p177) target = $region32
      $region31: #{tpu_custom_call.1} parent=5 // pred_region
        %s181 = ssub.s32 %s16, 1
        %s182 = sand.u32 %s29, 1
        %s183 = scalar_lea.sflag [#allocation3], %s182
        %s184 = sand.u32 %s29, 1
        %s185 = smul.addr %s184, 512
        %s186 = scalar_lea.vmem [#allocation2], %s185
        // Predicated region
        $region33: #{tpu_custom_call.1} parent=31 // pred_check
          %p187 = pneg %p42
        $region34: #{tpu_custom_call.1} parent=31 // pred_check_branch
          %189 = sbr.rel (%p187) target = $region36
        $region35: #{tpu_custom_call.1} parent=31 // pred_region
          %190 = dma.done %s183, 8192
        $region36: #{tpu_custom_call.1} parent=31 // pred_fallthru
          _
        // Predicated region
        $region37: #{tpu_custom_call.1} parent=31 // pred_check
          %p191 = pneg %p63
        $region38: #{tpu_custom_call.1} parent=31 // pred_check_branch
          %193 = sbr.rel (%p191) target = $region40
        $region39: #{tpu_custom_call.1} parent=31 // pred_region
          %194 = dma.done [#allocation6], 12288
        $region40: #{tpu_custom_call.1} parent=31 // pred_fallthru
          _
        // Predicated region
        $region41: #{tpu_custom_call.1} parent=31 // pred_check
          %p195 = pneg %p84
        $region42: #{tpu_custom_call.1} parent=31 // pred_check_branch
          %197 = sbr.rel (%p195) target = $region44
        $region43: #{tpu_custom_call.1} parent=31 // pred_region
          %198 = dma.done [#allocation6], 96
        $region44: #{tpu_custom_call.1} parent=31 // pred_fallthru
          _
        %s199 = sand.u32 %s29, 1
        %s200 = scalar_lea.sflag [#allocation3], %s199
        %s201 = sand.u32 %s29, 1
        %s202 = smul.addr %s201, 512
        %s203 = scalar_lea.vmem [#allocation2], %s202
        %p204 = pneg %p42
        %p205 = pneg %p39
        %p206 = pneg %p63
        %p207 = pneg %p60
        %p208 = pneg %p84
        %p209 = pneg %p81
        %p210 = pneg %p110
        %p211 = pneg %p107
        %s212 = sand.u32 %s97, 1
        %s213 = scalar_lea.sflag [#allocation4], %s212
        %s214 = sand.u32 %s97, 1
        %s215 = smul.addr %s214, 1536
        %s216 = scalar_lea.vmem [#allocation8], %s215
        %s217 = smul.u32 64, %s21
        %s218 = smul.u32 64, %s21
        %v219 = vld [vmem:[%s186] sm:$0xff]
        %v220 = vld [vmem:[%s186 + $0x8] sm:$0xff]
        %v221 = vld [vmem:[%s186 + $0x10] sm:$0xff]
        %v222 = vld [vmem:[%s186 + $0x18] sm:$0xff]
        %v223 = vld [vmem:[%s186 + $0x20] sm:$0xff]
        %v224 = vld [vmem:[%s186 + $0x28] sm:$0xff]
        %v225 = vld [vmem:[%s186 + $0x30] sm:$0xff]
        %v226 = vld [vmem:[%s186 + $0x38] sm:$0xff]
        %v227 = vld [vmem:[%s186 + $0x40] sm:$0xff]
        %v228 = vld [vmem:[%s186 + $0x48] sm:$0xff]
        %v229 = vld [vmem:[%s186 + $0x50] sm:$0xff]
        %v230 = vld [vmem:[%s186 + $0x58] sm:$0xff]
        %v231 = vld [vmem:[%s186 + $0x60] sm:$0xff]
        %v232 = vld [vmem:[%s186 + $0x68] sm:$0xff]
        %v233 = vld [vmem:[%s186 + $0x70] sm:$0xff]
        %v234 = vld [vmem:[%s186 + $0x78] sm:$0xff]
        %v235 = vld [vmem:[%s186 + $0x80] sm:$0xff]
        %v236 = vld [vmem:[%s186 + $0x88] sm:$0xff]
        %v237 = vld [vmem:[%s186 + $0x90] sm:$0xff]
        %v238 = vld [vmem:[%s186 + $0x98] sm:$0xff]
        %v239 = vld [vmem:[%s186 + $0xa0] sm:$0xff]
        %v240 = vld [vmem:[%s186 + $0xa8] sm:$0xff]
        %v241 = vld [vmem:[%s186 + $0xb0] sm:$0xff]
        %v242 = vld [vmem:[%s186 + $0xb8] sm:$0xff]
        %v243 = vld [vmem:[%s186 + $0xc0] sm:$0xff]
        %v244 = vld [vmem:[%s186 + $0xc8] sm:$0xff]
        %v245 = vld [vmem:[%s186 + $0xd0] sm:$0xff]
        %v246 = vld [vmem:[%s186 + $0xd8] sm:$0xff]
        %v247 = vld [vmem:[%s186 + $0xe0] sm:$0xff]
        %v248 = vld [vmem:[%s186 + $0xe8] sm:$0xff]
        %v249 = vld [vmem:[%s186 + $0xf0] sm:$0xff]
        %v250 = vld [vmem:[%s186 + $0xf8] sm:$0xff]
        %v251 = vld [vmem:[%s186 + $0x100] sm:$0xff]
        %v252 = vld [vmem:[%s186 + $0x108] sm:$0xff]
        %v253 = vld [vmem:[%s186 + $0x110] sm:$0xff]
        %v254 = vld [vmem:[%s186 + $0x118] sm:$0xff]
        %v255 = vld [vmem:[%s186 + $0x120] sm:$0xff]
        %v256 = vld [vmem:[%s186 + $0x128] sm:$0xff]
        %v257 = vld [vmem:[%s186 + $0x130] sm:$0xff]
        %v258 = vld [vmem:[%s186 + $0x138] sm:$0xff]
        %v259 = vld [vmem:[%s186 + $0x140] sm:$0xff]
        %v260 = vld [vmem:[%s186 + $0x148] sm:$0xff]
        %v261 = vld [vmem:[%s186 + $0x150] sm:$0xff]
        %v262 = vld [vmem:[%s186 + $0x158] sm:$0xff]
        %v263 = vld [vmem:[%s186 + $0x160] sm:$0xff]
        %v264 = vld [vmem:[%s186 + $0x168] sm:$0xff]
        %v265 = vld [vmem:[%s186 + $0x170] sm:$0xff]
        %v266 = vld [vmem:[%s186 + $0x178] sm:$0xff]
        %v267 = vld [vmem:[%s186 + $0x180] sm:$0xff]
        %v268 = vld [vmem:[%s186 + $0x188] sm:$0xff]
        %v269 = vld [vmem:[%s186 + $0x190] sm:$0xff]
        %v270 = vld [vmem:[%s186 + $0x198] sm:$0xff]
        %v271 = vld [vmem:[%s186 + $0x1a0] sm:$0xff]
        %v272 = vld [vmem:[%s186 + $0x1a8] sm:$0xff]
        %v273 = vld [vmem:[%s186 + $0x1b0] sm:$0xff]
        %v274 = vld [vmem:[%s186 + $0x1b8] sm:$0xff]
        %v275 = vld [vmem:[%s186 + $0x1c0] sm:$0xff]
        %v276 = vld [vmem:[%s186 + $0x1c8] sm:$0xff]
        %v277 = vld [vmem:[%s186 + $0x1d0] sm:$0xff]
        %v278 = vld [vmem:[%s186 + $0x1d8] sm:$0xff]
        %v279 = vld [vmem:[%s186 + $0x1e0] sm:$0xff]
        %v280 = vld [vmem:[%s186 + $0x1e8] sm:$0xff]
        %v281 = vld [vmem:[%s186 + $0x1f0] sm:$0xff]
        %v282 = vld [vmem:[%s186 + $0x1f8] sm:$0xff]
        %v283 = vld [vmem:[#allocation5] sm:$0xff]
        %v284 = vld [vmem:[#allocation5 + $0x8] sm:$0xff]
        %v285 = vld [vmem:[#allocation5 + $0x10] sm:$0xff]
        %v286 = vld [vmem:[#allocation5 + $0x18] sm:$0xff]
        %v287 = vld [vmem:[#allocation5 + $0x20] sm:$0xff]
        %v288 = vld [vmem:[#allocation5 + $0x28] sm:$0xff]
        %v289 = vld [vmem:[#allocation5 + $0x30] sm:$0xff]
        %v290 = vld [vmem:[#allocation5 + $0x38] sm:$0xff]
        %v291 = vld [vmem:[#allocation5 + $0x40] sm:$0xff]
        %v292 = vld [vmem:[#allocation5 + $0x48] sm:$0xff]
        %v293 = vld [vmem:[#allocation5 + $0x50] sm:$0xff]
        %v294 = vld [vmem:[#allocation5 + $0x58] sm:$0xff]
        %v295 = vld [vmem:[#allocation5 + $0x60] sm:$0xff]
        %v296 = vld [vmem:[#allocation5 + $0x68] sm:$0xff]
        %v297 = vld [vmem:[#allocation5 + $0x70] sm:$0xff]
        %v298 = vld [vmem:[#allocation5 + $0x78] sm:$0xff]
        %v299 = vld [vmem:[#allocation5 + $0x80] sm:$0xff]
        %v300 = vld [vmem:[#allocation5 + $0x88] sm:$0xff]
        %v301 = vld [vmem:[#allocation5 + $0x90] sm:$0xff]
        %v302 = vld [vmem:[#allocation5 + $0x98] sm:$0xff]
        %v303 = vld [vmem:[#allocation5 + $0xa0] sm:$0xff]
        %v304 = vld [vmem:[#allocation5 + $0xa8] sm:$0xff]
        %v305 = vld [vmem:[#allocation5 + $0xb0] sm:$0xff]
        %v306 = vld [vmem:[#allocation5 + $0xb8] sm:$0xff]
        %v307 = vld [vmem:[#allocation5 + $0xc0] sm:$0xff]
        %v308 = vld [vmem:[#allocation5 + $0xc8] sm:$0xff]
        %v309 = vld [vmem:[#allocation5 + $0xd0] sm:$0xff]
        %v310 = vld [vmem:[#allocation5 + $0xd8] sm:$0xff]
        %v311 = vld [vmem:[#allocation5 + $0xe0] sm:$0xff]
        %v312 = vld [vmem:[#allocation5 + $0xe8] sm:$0xff]
        %v313 = vld [vmem:[#allocation5 + $0xf0] sm:$0xff]
        %v314 = vld [vmem:[#allocation5 + $0xf8] sm:$0xff]
        %v315 = vld [vmem:[#allocation5 + $0x100] sm:$0xff]
        %v316 = vld [vmem:[#allocation5 + $0x108] sm:$0xff]
        %v317 = vld [vmem:[#allocation5 + $0x110] sm:$0xff]
        %v318 = vld [vmem:[#allocation5 + $0x118] sm:$0xff]
        %v319 = vld [vmem:[#allocation5 + $0x120] sm:$0xff]
        %v320 = vld [vmem:[#allocation5 + $0x128] sm:$0xff]
        %v321 = vld [vmem:[#allocation5 + $0x130] sm:$0xff]
        %v322 = vld [vmem:[#allocation5 + $0x138] sm:$0xff]
        %v323 = vld [vmem:[#allocation5 + $0x140] sm:$0xff]
        %v324 = vld [vmem:[#allocation5 + $0x148] sm:$0xff]
        %v325 = vld [vmem:[#allocation5 + $0x150] sm:$0xff]
        %v326 = vld [vmem:[#allocation5 + $0x158] sm:$0xff]
        %v327 = vld [vmem:[#allocation5 + $0x160] sm:$0xff]
        %v328 = vld [vmem:[#allocation5 + $0x168] sm:$0xff]
        %v329 = vld [vmem:[#allocation5 + $0x170] sm:$0xff]
        %v330 = vld [vmem:[#allocation5 + $0x178] sm:$0xff]
        %v331 = vld [vmem:[#allocation5 + $0x180] sm:$0xff]
        %v332 = vld [vmem:[#allocation5 + $0x188] sm:$0xff]
        %v333 = vld [vmem:[#allocation5 + $0x190] sm:$0xff]
        %v334 = vld [vmem:[#allocation5 + $0x198] sm:$0xff]
        %v335 = vld [vmem:[#allocation5 + $0x1a0] sm:$0xff]
        %v336 = vld [vmem:[#allocation5 + $0x1a8] sm:$0xff]
        %v337 = vld [vmem:[#allocation5 + $0x1b0] sm:$0xff]
        %v338 = vld [vmem:[#allocation5 + $0x1b8] sm:$0xff]
        %v339 = vld [vmem:[#allocation5 + $0x1c0] sm:$0xff]
        %v340 = vld [vmem:[#allocation5 + $0x1c8] sm:$0xff]
        %v341 = vld [vmem:[#allocation5 + $0x1d0] sm:$0xff]
        %v342 = vld [vmem:[#allocation5 + $0x1d8] sm:$0xff]
        %v343 = vld [vmem:[#allocation5 + $0x1e0] sm:$0xff]
        %v344 = vld [vmem:[#allocation5 + $0x1e8] sm:$0xff]
        %v345 = vld [vmem:[#allocation5 + $0x1f0] sm:$0xff]
        %v346 = vld [vmem:[#allocation5 + $0x1f8] sm:$0xff]
        %v347 = vld [vmem:[#allocation5 + $0x200] sm:$0xff]
        %v348 = vld [vmem:[#allocation5 + $0x208] sm:$0xff]
        %v349 = vld [vmem:[#allocation5 + $0x210] sm:$0xff]
        %v350 = vld [vmem:[#allocation5 + $0x218] sm:$0xff]
        %v351 = vld [vmem:[#allocation5 + $0x220] sm:$0xff]
        %v352 = vld [vmem:[#allocation5 + $0x228] sm:$0xff]
        %v353 = vld [vmem:[#allocation5 + $0x230] sm:$0xff]
        %v354 = vld [vmem:[#allocation5 + $0x238] sm:$0xff]
        %v355 = vld [vmem:[#allocation5 + $0x240] sm:$0xff]
        %v356 = vld [vmem:[#allocation5 + $0x248] sm:$0xff]
        %v357 = vld [vmem:[#allocation5 + $0x250] sm:$0xff]
        %v358 = vld [vmem:[#allocation5 + $0x258] sm:$0xff]
        %v359 = vld [vmem:[#allocation5 + $0x260] sm:$0xff]
        %v360 = vld [vmem:[#allocation5 + $0x268] sm:$0xff]
        %v361 = vld [vmem:[#allocation5 + $0x270] sm:$0xff]
        %v362 = vld [vmem:[#allocation5 + $0x278] sm:$0xff]
        %v363 = vld [vmem:[#allocation5 + $0x280] sm:$0xff]
        %v364 = vld [vmem:[#allocation5 + $0x288] sm:$0xff]
        %v365 = vld [vmem:[#allocation5 + $0x290] sm:$0xff]
        %v366 = vld [vmem:[#allocation5 + $0x298] sm:$0xff]
        %v367 = vld [vmem:[#allocation5 + $0x2a0] sm:$0xff]
        %v368 = vld [vmem:[#allocation5 + $0x2a8] sm:$0xff]
        %v369 = vld [vmem:[#allocation5 + $0x2b0] sm:$0xff]
        %v370 = vld [vmem:[#allocation5 + $0x2b8] sm:$0xff]
        %v371 = vld [vmem:[#allocation5 + $0x2c0] sm:$0xff]
        %v372 = vld [vmem:[#allocation5 + $0x2c8] sm:$0xff]
        %v373 = vld [vmem:[#allocation5 + $0x2d0] sm:$0xff]
        %v374 = vld [vmem:[#allocation5 + $0x2d8] sm:$0xff]
        %v375 = vld [vmem:[#allocation5 + $0x2e0] sm:$0xff]
        %v376 = vld [vmem:[#allocation5 + $0x2e8] sm:$0xff]
        %v377 = vld [vmem:[#allocation5 + $0x2f0] sm:$0xff]
        %v378 = vld [vmem:[#allocation5 + $0x2f8] sm:$0xff]
        %v379 = vld [vmem:[#allocation7] sm:$0x3f]
        %v381 = vlaneseq
        %v382 = vshrl.u32 %v381, 7
        %v383 = vsub.s32 0, %v382
        %v384 = vrot.slane %v379, %v383
        %v385 = vlaneseq
        %v386 = vshrl.u32 %v385, 7
        %v387 = vsub.s32 1, %v386
        %v388 = vrot.slane %v379, %v387
        %v389 = vlaneseq
        %v390 = vshrl.u32 %v389, 7
        %v391 = vsub.s32 2, %v390
        %v392 = vrot.slane %v379, %v391
        %v393 = vlaneseq
        %v394 = vshrl.u32 %v393, 7
        %v395 = vsub.s32 3, %v394
        %v396 = vrot.slane %v379, %v395
        %v397 = vlaneseq
        %v398 = vshrl.u32 %v397, 7
        %v399 = vsub.s32 4, %v398
        %v400 = vrot.slane %v379, %v399
        %v401 = vlaneseq
        %v402 = vshrl.u32 %v401, 7
        %v403 = vsub.s32 5, %v402
        %v404 = vrot.slane %v379, %v403
        %v475 = vunpack.c.l.b16 %v219
        %v476 = vunpack.c.h.b16 %v219
        %v477 = vunpack.c.l.b16 %v220
        %v478 = vunpack.c.h.b16 %v220
        %v479 = vunpack.c.l.b16 %v221
        %v480 = vunpack.c.h.b16 %v221
        %v481 = vunpack.c.l.b16 %v222
        %v482 = vunpack.c.h.b16 %v222
        %v483 = vunpack.c.l.b16 %v223
        %v484 = vunpack.c.h.b16 %v223
        %v485 = vunpack.c.l.b16 %v224
        %v486 = vunpack.c.h.b16 %v224
        %v487 = vunpack.c.l.b16 %v225
        %v488 = vunpack.c.h.b16 %v225
        %v489 = vunpack.c.l.b16 %v226
        %v490 = vunpack.c.h.b16 %v226
        %v491 = vunpack.c.l.b16 %v227
        %v492 = vunpack.c.h.b16 %v227
        %v493 = vunpack.c.l.b16 %v228
        %v494 = vunpack.c.h.b16 %v228
        %v495 = vunpack.c.l.b16 %v229
        %v496 = vunpack.c.h.b16 %v229
        %v497 = vunpack.c.l.b16 %v230
        %v498 = vunpack.c.h.b16 %v230
        %v499 = vunpack.c.l.b16 %v231
        %v500 = vunpack.c.h.b16 %v231
        %v501 = vunpack.c.l.b16 %v232
        %v502 = vunpack.c.h.b16 %v232
        %v503 = vunpack.c.l.b16 %v233
        %v504 = vunpack.c.h.b16 %v233
        %v505 = vunpack.c.l.b16 %v234
        %v506 = vunpack.c.h.b16 %v234
        %v507 = vunpack.c.l.b16 %v235
        %v508 = vunpack.c.h.b16 %v235
        %v509 = vunpack.c.l.b16 %v236
        %v510 = vunpack.c.h.b16 %v236
        %v511 = vunpack.c.l.b16 %v237
        %v512 = vunpack.c.h.b16 %v237
        %v513 = vunpack.c.l.b16 %v238
        %v514 = vunpack.c.h.b16 %v238
        %v515 = vunpack.c.l.b16 %v239
        %v516 = vunpack.c.h.b16 %v239
        %v517 = vunpack.c.l.b16 %v240
        %v518 = vunpack.c.h.b16 %v240
        %v519 = vunpack.c.l.b16 %v241
        %v520 = vunpack.c.h.b16 %v241
        %v521 = vunpack.c.l.b16 %v242
        %v522 = vunpack.c.h.b16 %v242
        %v523 = vunpack.c.l.b16 %v243
        %v524 = vunpack.c.h.b16 %v243
        %v525 = vunpack.c.l.b16 %v244
        %v526 = vunpack.c.h.b16 %v244
        %v527 = vunpack.c.l.b16 %v245
        %v528 = vunpack.c.h.b16 %v245
        %v529 = vunpack.c.l.b16 %v246
        %v530 = vunpack.c.h.b16 %v246
        %v531 = vunpack.c.l.b16 %v247
        %v532 = vunpack.c.h.b16 %v247
        %v533 = vunpack.c.l.b16 %v248
        %v534 = vunpack.c.h.b16 %v248
        %v535 = vunpack.c.l.b16 %v249
        %v536 = vunpack.c.h.b16 %v249
        %v537 = vunpack.c.l.b16 %v250
        %v538 = vunpack.c.h.b16 %v250
        %v539 = vunpack.c.l.b16 %v251
        %v540 = vunpack.c.h.b16 %v251
        %v541 = vunpack.c.l.b16 %v252
        %v542 = vunpack.c.h.b16 %v252
        %v543 = vunpack.c.l.b16 %v253
        %v544 = vunpack.c.h.b16 %v253
        %v545 = vunpack.c.l.b16 %v254
        %v546 = vunpack.c.h.b16 %v254
        %v547 = vunpack.c.l.b16 %v255
        %v548 = vunpack.c.h.b16 %v255
        %v549 = vunpack.c.l.b16 %v256
        %v550 = vunpack.c.h.b16 %v256
        %v551 = vunpack.c.l.b16 %v257
        %v552 = vunpack.c.h.b16 %v257
        %v553 = vunpack.c.l.b16 %v258
        %v554 = vunpack.c.h.b16 %v258
        %v555 = vunpack.c.l.b16 %v259
        %v556 = vunpack.c.h.b16 %v259
        %v557 = vunpack.c.l.b16 %v260
        %v558 = vunpack.c.h.b16 %v260
        %v559 = vunpack.c.l.b16 %v261
        %v560 = vunpack.c.h.b16 %v261
        %v561 = vunpack.c.l.b16 %v262
        %v562 = vunpack.c.h.b16 %v262
        %v563 = vunpack.c.l.b16 %v263
        %v564 = vunpack.c.h.b16 %v263
        %v565 = vunpack.c.l.b16 %v264
        %v566 = vunpack.c.h.b16 %v264
        %v567 = vunpack.c.l.b16 %v265
        %v568 = vunpack.c.h.b16 %v265
        %v569 = vunpack.c.l.b16 %v266
        %v570 = vunpack.c.h.b16 %v266
        %v571 = vunpack.c.l.b16 %v267
        %v572 = vunpack.c.h.b16 %v267
        %v573 = vunpack.c.l.b16 %v268
        %v574 = vunpack.c.h.b16 %v268
        %v575 = vunpack.c.l.b16 %v269
        %v576 = vunpack.c.h.b16 %v269
        %v577 = vunpack.c.l.b16 %v270
        %v578 = vunpack.c.h.b16 %v270
        %v579 = vunpack.c.l.b16 %v271
        %v580 = vunpack.c.h.b16 %v271
        %v581 = vunpack.c.l.b16 %v272
        %v582 = vunpack.c.h.b16 %v272
        %v583 = vunpack.c.l.b16 %v273
        %v584 = vunpack.c.h.b16 %v273
        %v585 = vunpack.c.l.b16 %v274
        %v586 = vunpack.c.h.b16 %v274
        %v587 = vunpack.c.l.b16 %v275
        %v588 = vunpack.c.h.b16 %v275
        %v589 = vunpack.c.l.b16 %v276
        %v590 = vunpack.c.h.b16 %v276
        %v591 = vunpack.c.l.b16 %v277
        %v592 = vunpack.c.h.b16 %v277
        %v593 = vunpack.c.l.b16 %v278
        %v594 = vunpack.c.h.b16 %v278
        %v595 = vunpack.c.l.b16 %v279
        %v596 = vunpack.c.h.b16 %v279
        %v597 = vunpack.c.l.b16 %v280
        %v598 = vunpack.c.h.b16 %v280
        %v599 = vunpack.c.l.b16 %v281
        %v600 = vunpack.c.h.b16 %v281
        %v601 = vunpack.c.l.b16 %v282
        %v602 = vunpack.c.h.b16 %v282
        %v603 = vpack.c.b16 %v477, %v475
        %v604 = vpack.c.b16 %v478, %v476
        %v605 = vpack.c.b16 %v481, %v479
        %v606 = vpack.c.b16 %v482, %v480
        %v607 = vpack.c.b16 %v485, %v483
        %v608 = vpack.c.b16 %v486, %v484
        %v609 = vpack.c.b16 %v489, %v487
        %v610 = vpack.c.b16 %v490, %v488
        %v611 = vpack.c.b16 %v493, %v491
        %v612 = vpack.c.b16 %v494, %v492
        %v613 = vpack.c.b16 %v497, %v495
        %v614 = vpack.c.b16 %v498, %v496
        %v615 = vpack.c.b16 %v501, %v499
        %v616 = vpack.c.b16 %v502, %v500
        %v617 = vpack.c.b16 %v505, %v503
        %v618 = vpack.c.b16 %v506, %v504
        %v619 = vpack.c.b16 %v509, %v507
        %v620 = vpack.c.b16 %v510, %v508
        %v621 = vpack.c.b16 %v513, %v511
        %v622 = vpack.c.b16 %v514, %v512
        %v623 = vpack.c.b16 %v517, %v515
        %v624 = vpack.c.b16 %v518, %v516
        %v625 = vpack.c.b16 %v521, %v519
        %v626 = vpack.c.b16 %v522, %v520
        %v627 = vpack.c.b16 %v525, %v523
        %v628 = vpack.c.b16 %v526, %v524
        %v629 = vpack.c.b16 %v529, %v527
        %v630 = vpack.c.b16 %v530, %v528
        %v631 = vpack.c.b16 %v533, %v531
        %v632 = vpack.c.b16 %v534, %v532
        %v633 = vpack.c.b16 %v537, %v535
        %v634 = vpack.c.b16 %v538, %v536
        %v635 = vpack.c.b16 %v541, %v539
        %v636 = vpack.c.b16 %v542, %v540
        %v637 = vpack.c.b16 %v545, %v543
        %v638 = vpack.c.b16 %v546, %v544
        %v639 = vpack.c.b16 %v549, %v547
        %v640 = vpack.c.b16 %v550, %v548
        %v641 = vpack.c.b16 %v553, %v551
        %v642 = vpack.c.b16 %v554, %v552
        %v643 = vpack.c.b16 %v557, %v555
        %v644 = vpack.c.b16 %v558, %v556
        %v645 = vpack.c.b16 %v561, %v559
        %v646 = vpack.c.b16 %v562, %v560
        %v647 = vpack.c.b16 %v565, %v563
        %v648 = vpack.c.b16 %v566, %v564
        %v649 = vpack.c.b16 %v569, %v567
        %v650 = vpack.c.b16 %v570, %v568
        %v651 = vpack.c.b16 %v573, %v571
        %v652 = vpack.c.b16 %v574, %v572
        %v653 = vpack.c.b16 %v577, %v575
        %v654 = vpack.c.b16 %v578, %v576
        %v655 = vpack.c.b16 %v581, %v579
        %v656 = vpack.c.b16 %v582, %v580
        %v657 = vpack.c.b16 %v585, %v583
        %v658 = vpack.c.b16 %v586, %v584
        %v659 = vpack.c.b16 %v589, %v587
        %v660 = vpack.c.b16 %v590, %v588
        %v661 = vpack.c.b16 %v593, %v591
        %v662 = vpack.c.b16 %v594, %v592
        %v663 = vpack.c.b16 %v597, %v595
        %v664 = vpack.c.b16 %v598, %v596
        %v665 = vpack.c.b16 %v601, %v599
        %v666 = vpack.c.b16 %v602, %v600
        %v827 = vunpack.c.l.b16 %v283
        %v828 = vunpack.c.h.b16 %v283
        %v829 = vunpack.c.l.b16 %v284
        %v830 = vunpack.c.h.b16 %v284
        %v831 = vunpack.c.l.b16 %v285
        %v832 = vunpack.c.h.b16 %v285
        %v833 = vunpack.c.l.b16 %v286
        %v834 = vunpack.c.h.b16 %v286
        %v835 = vunpack.c.l.b16 %v287
        %v836 = vunpack.c.h.b16 %v287
        %v837 = vunpack.c.l.b16 %v288
        %v838 = vunpack.c.h.b16 %v288
        %v839 = vunpack.c.l.b16 %v289
        %v840 = vunpack.c.h.b16 %v289
        %v841 = vunpack.c.l.b16 %v290
        %v842 = vunpack.c.h.b16 %v290
        %v843 = vunpack.c.l.b16 %v291
        %v844 = vunpack.c.h.b16 %v291
        %v845 = vunpack.c.l.b16 %v292
        %v846 = vunpack.c.h.b16 %v292
        %v847 = vunpack.c.l.b16 %v293
        %v848 = vunpack.c.h.b16 %v293
        %v849 = vunpack.c.l.b16 %v294
        %v850 = vunpack.c.h.b16 %v294
        %v851 = vunpack.c.l.b16 %v295
        %v852 = vunpack.c.h.b16 %v295
        %v853 = vunpack.c.l.b16 %v296
        %v854 = vunpack.c.h.b16 %v296
        %v855 = vunpack.c.l.b16 %v297
        %v856 = vunpack.c.h.b16 %v297
        %v857 = vunpack.c.l.b16 %v298
        %v858 = vunpack.c.h.b16 %v298
        %v859 = vunpack.c.l.b16 %v299
        %v860 = vunpack.c.h.b16 %v299
        %v861 = vunpack.c.l.b16 %v300
        %v862 = vunpack.c.h.b16 %v300
        %v863 = vunpack.c.l.b16 %v301
        %v864 = vunpack.c.h.b16 %v301
        %v865 = vunpack.c.l.b16 %v302
        %v866 = vunpack.c.h.b16 %v302
        %v867 = vunpack.c.l.b16 %v303
        %v868 = vunpack.c.h.b16 %v303
        %v869 = vunpack.c.l.b16 %v304
        %v870 = vunpack.c.h.b16 %v304
        %v871 = vunpack.c.l.b16 %v305
        %v872 = vunpack.c.h.b16 %v305
        %v873 = vunpack.c.l.b16 %v306
        %v874 = vunpack.c.h.b16 %v306
        %v875 = vunpack.c.l.b16 %v307
        %v876 = vunpack.c.h.b16 %v307
        %v877 = vunpack.c.l.b16 %v308
        %v878 = vunpack.c.h.b16 %v308
        %v879 = vunpack.c.l.b16 %v309
        %v880 = vunpack.c.h.b16 %v309
        %v881 = vunpack.c.l.b16 %v310
        %v882 = vunpack.c.h.b16 %v310
        %v883 = vunpack.c.l.b16 %v311
        %v884 = vunpack.c.h.b16 %v311
        %v885 = vunpack.c.l.b16 %v312
        %v886 = vunpack.c.h.b16 %v312
        %v887 = vunpack.c.l.b16 %v313
        %v888 = vunpack.c.h.b16 %v313
        %v889 = vunpack.c.l.b16 %v314
        %v890 = vunpack.c.h.b16 %v314
        %v891 = vunpack.c.l.b16 %v315
        %v892 = vunpack.c.h.b16 %v315
        %v893 = vunpack.c.l.b16 %v316
        %v894 = vunpack.c.h.b16 %v316
        %v895 = vunpack.c.l.b16 %v317
        %v896 = vunpack.c.h.b16 %v317
        %v897 = vunpack.c.l.b16 %v318
        %v898 = vunpack.c.h.b16 %v318
        %v899 = vunpack.c.l.b16 %v319
        %v900 = vunpack.c.h.b16 %v319
        %v901 = vunpack.c.l.b16 %v320
        %v902 = vunpack.c.h.b16 %v320
        %v903 = vunpack.c.l.b16 %v321
        %v904 = vunpack.c.h.b16 %v321
        %v905 = vunpack.c.l.b16 %v322
        %v906 = vunpack.c.h.b16 %v322
        %v907 = vunpack.c.l.b16 %v323
        %v908 = vunpack.c.h.b16 %v323
        %v909 = vunpack.c.l.b16 %v324
        %v910 = vunpack.c.h.b16 %v324
        %v911 = vunpack.c.l.b16 %v325
        %v912 = vunpack.c.h.b16 %v325
        %v913 = vunpack.c.l.b16 %v326
        %v914 = vunpack.c.h.b16 %v326
        %v915 = vunpack.c.l.b16 %v327
        %v916 = vunpack.c.h.b16 %v327
        %v917 = vunpack.c.l.b16 %v328
        %v918 = vunpack.c.h.b16 %v328
        %v919 = vunpack.c.l.b16 %v329
        %v920 = vunpack.c.h.b16 %v329
        %v921 = vunpack.c.l.b16 %v330
        %v922 = vunpack.c.h.b16 %v330
        %v923 = vunpack.c.l.b16 %v331
        %v924 = vunpack.c.h.b16 %v331
        %v925 = vunpack.c.l.b16 %v332
        %v926 = vunpack.c.h.b16 %v332
        %v927 = vunpack.c.l.b16 %v333
        %v928 = vunpack.c.h.b16 %v333
        %v929 = vunpack.c.l.b16 %v334
        %v930 = vunpack.c.h.b16 %v334
        %v931 = vunpack.c.l.b16 %v335
        %v932 = vunpack.c.h.b16 %v335
        %v933 = vunpack.c.l.b16 %v336
        %v934 = vunpack.c.h.b16 %v336
        %v935 = vunpack.c.l.b16 %v337
        %v936 = vunpack.c.h.b16 %v337
        %v937 = vunpack.c.l.b16 %v338
        %v938 = vunpack.c.h.b16 %v338
        %v939 = vunpack.c.l.b16 %v339
        %v940 = vunpack.c.h.b16 %v339
        %v941 = vunpack.c.l.b16 %v340
        %v942 = vunpack.c.h.b16 %v340
        %v943 = vunpack.c.l.b16 %v341
        %v944 = vunpack.c.h.b16 %v341
        %v945 = vunpack.c.l.b16 %v342
        %v946 = vunpack.c.h.b16 %v342
        %v947 = vunpack.c.l.b16 %v343
        %v948 = vunpack.c.h.b16 %v343
        %v949 = vunpack.c.l.b16 %v344
        %v950 = vunpack.c.h.b16 %v344
        %v951 = vunpack.c.l.b16 %v345
        %v952 = vunpack.c.h.b16 %v345
        %v953 = vunpack.c.l.b16 %v346
        %v954 = vunpack.c.h.b16 %v346
        %v955 = vunpack.c.l.b16 %v347
        %v956 = vunpack.c.h.b16 %v347
        %v957 = vunpack.c.l.b16 %v348
        %v958 = vunpack.c.h.b16 %v348
        %v959 = vunpack.c.l.b16 %v349
        %v960 = vunpack.c.h.b16 %v349
        %v961 = vunpack.c.l.b16 %v350
        %v962 = vunpack.c.h.b16 %v350
        %v963 = vunpack.c.l.b16 %v351
        %v964 = vunpack.c.h.b16 %v351
        %v965 = vunpack.c.l.b16 %v352
        %v966 = vunpack.c.h.b16 %v352
        %v967 = vunpack.c.l.b16 %v353
        %v968 = vunpack.c.h.b16 %v353
        %v969 = vunpack.c.l.b16 %v354
        %v970 = vunpack.c.h.b16 %v354
        %v971 = vunpack.c.l.b16 %v355
        %v972 = vunpack.c.h.b16 %v355
        %v973 = vunpack.c.l.b16 %v356
        %v974 = vunpack.c.h.b16 %v356
        %v975 = vunpack.c.l.b16 %v357
        %v976 = vunpack.c.h.b16 %v357
        %v977 = vunpack.c.l.b16 %v358
        %v978 = vunpack.c.h.b16 %v358
        %v979 = vunpack.c.l.b16 %v359
        %v980 = vunpack.c.h.b16 %v359
        %v981 = vunpack.c.l.b16 %v360
        %v982 = vunpack.c.h.b16 %v360
        %v983 = vunpack.c.l.b16 %v361
        %v984 = vunpack.c.h.b16 %v361
        %v985 = vunpack.c.l.b16 %v362
        %v986 = vunpack.c.h.b16 %v362
        %v987 = vunpack.c.l.b16 %v363
        %v988 = vunpack.c.h.b16 %v363
        %v989 = vunpack.c.l.b16 %v364
        %v990 = vunpack.c.h.b16 %v364
        %v991 = vunpack.c.l.b16 %v365
        %v992 = vunpack.c.h.b16 %v365
        %v993 = vunpack.c.l.b16 %v366
        %v994 = vunpack.c.h.b16 %v366
        %v995 = vunpack.c.l.b16 %v367
        %v996 = vunpack.c.h.b16 %v367
        %v997 = vunpack.c.l.b16 %v368
        %v998 = vunpack.c.h.b16 %v368
        %v999 = vunpack.c.l.b16 %v369
        %v1000 = vunpack.c.h.b16 %v369
        %v1001 = vunpack.c.l.b16 %v370
        %v1002 = vunpack.c.h.b16 %v370
        %v1003 = vunpack.c.l.b16 %v371
        %v1004 = vunpack.c.h.b16 %v371
        %v1005 = vunpack.c.l.b16 %v372
        %v1006 = vunpack.c.h.b16 %v372
        %v1007 = vunpack.c.l.b16 %v373
        %v1008 = vunpack.c.h.b16 %v373
        %v1009 = vunpack.c.l.b16 %v374
        %v1010 = vunpack.c.h.b16 %v374
        %v1011 = vunpack.c.l.b16 %v375
        %v1012 = vunpack.c.h.b16 %v375
        %v1013 = vunpack.c.l.b16 %v376
        %v1014 = vunpack.c.h.b16 %v376
        %v1015 = vunpack.c.l.b16 %v377
        %v1016 = vunpack.c.h.b16 %v377
        %v1017 = vunpack.c.l.b16 %v378
        %v1018 = vunpack.c.h.b16 %v378
        %v1019 = vpack.c.b16 %v833, %v827
        %v1020 = vpack.c.b16 %v834, %v828
        %v1021 = vpack.c.b16 %v835, %v829
        %v1022 = vpack.c.b16 %v836, %v830
        %v1023 = vpack.c.b16 %v837, %v831
        %v1024 = vpack.c.b16 %v838, %v832
        %v1025 = vpack.c.b16 %v845, %v839
        %v1026 = vpack.c.b16 %v846, %v840
        %v1027 = vpack.c.b16 %v847, %v841
        %v1028 = vpack.c.b16 %v848, %v842
        %v1029 = vpack.c.b16 %v849, %v843
        %v1030 = vpack.c.b16 %v850, %v844
        %v1031 = vpack.c.b16 %v857, %v851
        %v1032 = vpack.c.b16 %v858, %v852
        %v1033 = vpack.c.b16 %v859, %v853
        %v1034 = vpack.c.b16 %v860, %v854
        %v1035 = vpack.c.b16 %v861, %v855
        %v1036 = vpack.c.b16 %v862, %v856
        %v1037 = vpack.c.b16 %v869, %v863
        %v1038 = vpack.c.b16 %v870, %v864
        %v1039 = vpack.c.b16 %v871, %v865
        %v1040 = vpack.c.b16 %v872, %v866
        %v1041 = vpack.c.b16 %v873, %v867
        %v1042 = vpack.c.b16 %v874, %v868
        %v1043 = vpack.c.b16 %v881, %v875
        %v1044 = vpack.c.b16 %v882, %v876
        %v1045 = vpack.c.b16 %v883, %v877
        %v1046 = vpack.c.b16 %v884, %v878
        %v1047 = vpack.c.b16 %v885, %v879
        %v1048 = vpack.c.b16 %v886, %v880
        %v1049 = vpack.c.b16 %v893, %v887
        %v1050 = vpack.c.b16 %v894, %v888
        %v1051 = vpack.c.b16 %v895, %v889
        %v1052 = vpack.c.b16 %v896, %v890
        %v1053 = vpack.c.b16 %v897, %v891
        %v1054 = vpack.c.b16 %v898, %v892
        %v1055 = vpack.c.b16 %v905, %v899
        %v1056 = vpack.c.b16 %v906, %v900
        %v1057 = vpack.c.b16 %v907, %v901
        %v1058 = vpack.c.b16 %v908, %v902
        %v1059 = vpack.c.b16 %v909, %v903
        %v1060 = vpack.c.b16 %v910, %v904
        %v1061 = vpack.c.b16 %v917, %v911
        %v1062 = vpack.c.b16 %v918, %v912
        %v1063 = vpack.c.b16 %v919, %v913
        %v1064 = vpack.c.b16 %v920, %v914
        %v1065 = vpack.c.b16 %v921, %v915
        %v1066 = vpack.c.b16 %v922, %v916
        %v1067 = vpack.c.b16 %v929, %v923
        %v1068 = vpack.c.b16 %v930, %v924
        %v1069 = vpack.c.b16 %v931, %v925
        %v1070 = vpack.c.b16 %v932, %v926
        %v1071 = vpack.c.b16 %v933, %v927
        %v1072 = vpack.c.b16 %v934, %v928
        %v1073 = vpack.c.b16 %v941, %v935
        %v1074 = vpack.c.b16 %v942, %v936
        %v1075 = vpack.c.b16 %v943, %v937
        %v1076 = vpack.c.b16 %v944, %v938
        %v1077 = vpack.c.b16 %v945, %v939
        %v1078 = vpack.c.b16 %v946, %v940
        %v1079 = vpack.c.b16 %v953, %v947
        %v1080 = vpack.c.b16 %v954, %v948
        %v1081 = vpack.c.b16 %v955, %v949
        %v1082 = vpack.c.b16 %v956, %v950
        %v1083 = vpack.c.b16 %v957, %v951
        %v1084 = vpack.c.b16 %v958, %v952
        %v1085 = vpack.c.b16 %v965, %v959
        %v1086 = vpack.c.b16 %v966, %v960
        %v1087 = vpack.c.b16 %v967, %v961
        %v1088 = vpack.c.b16 %v968, %v962
        %v1089 = vpack.c.b16 %v969, %v963
        %v1090 = vpack.c.b16 %v970, %v964
        %v1091 = vpack.c.b16 %v977, %v971
        %v1092 = vpack.c.b16 %v978, %v972
        %v1093 = vpack.c.b16 %v979, %v973
        %v1094 = vpack.c.b16 %v980, %v974
        %v1095 = vpack.c.b16 %v981, %v975
        %v1096 = vpack.c.b16 %v982, %v976
        %v1097 = vpack.c.b16 %v989, %v983
        %v1098 = vpack.c.b16 %v990, %v984
        %v1099 = vpack.c.b16 %v991, %v985
        %v1100 = vpack.c.b16 %v992, %v986
        %v1101 = vpack.c.b16 %v993, %v987
        %v1102 = vpack.c.b16 %v994, %v988
        %v1103 = vpack.c.b16 %v1001, %v995
        %v1104 = vpack.c.b16 %v1002, %v996
        %v1105 = vpack.c.b16 %v1003, %v997
        %v1106 = vpack.c.b16 %v1004, %v998
        %v1107 = vpack.c.b16 %v1005, %v999
        %v1108 = vpack.c.b16 %v1006, %v1000
        %v1109 = vpack.c.b16 %v1013, %v1007
        %v1110 = vpack.c.b16 %v1014, %v1008
        %v1111 = vpack.c.b16 %v1015, %v1009
        %v1112 = vpack.c.b16 %v1016, %v1010
        %v1113 = vpack.c.b16 %v1017, %v1011
        %v1114 = vpack.c.b16 %v1018, %v1012
        %1211 = vmatprep.subr.bf16.mxu0 %v1020
        %1212 = vmatpush1.bf16.msra.mxu0 %v1019
        %1213 = vmatprep.subr.bf16.mxu0 %v1026
        %1214 = vmatpush1.bf16.msra.mxu0 %v1025
        %1215 = vmatprep.subr.bf16.mxu0 %v1032
        %1216 = vmatpush1.bf16.msra.mxu0 %v1031
        %1217 = vmatprep.subr.bf16.mxu0 %v1038
        %1218 = vmatpush1.bf16.msra.mxu0 %v1037
        %1219 = vmatprep.subr.bf16.mxu0 %v1044
        %1220 = vmatpush1.bf16.msra.mxu0 %v1043
        %1221 = vmatprep.subr.bf16.mxu0 %v1050
        %1222 = vmatpush1.bf16.msra.mxu0 %v1049
        %1223 = vmatprep.subr.bf16.mxu0 %v1056
        %1224 = vmatpush1.bf16.msra.mxu0 %v1055
        %1225 = vmatprep.subr.bf16.mxu0 %v1062
        %1226 = vmatpush1.bf16.msra.mxu0 %v1061
        %1227 = vmatprep.subr.bf16.mxu0 %v1068
        %1228 = vmatpush1.bf16.msra.mxu0 %v1067
        %1229 = vmatprep.subr.bf16.mxu0 %v1074
        %1230 = vmatpush1.bf16.msra.mxu0 %v1073
        %1231 = vmatprep.subr.bf16.mxu0 %v1080
        %1232 = vmatpush1.bf16.msra.mxu0 %v1079
        %1233 = vmatprep.subr.bf16.mxu0 %v1086
        %1234 = vmatpush1.bf16.msra.mxu0 %v1085
        %1235 = vmatprep.subr.bf16.mxu0 %v1092
        %1236 = vmatpush1.bf16.msra.mxu0 %v1091
        %1237 = vmatprep.subr.bf16.mxu0 %v1098
        %1238 = vmatpush1.bf16.msra.mxu0 %v1097
        %1239 = vmatprep.subr.bf16.mxu0 %v1104
        %1240 = vmatpush1.bf16.msra.mxu0 %v1103
        %1241 = vmatprep.subr.bf16.mxu0 %v1110
        %1242 = vmatpush1.bf16.msra.mxu0 %v1109
        %1243 = vmatprep.mubr.bf16.mxu0 %v604
        %1244 = vmatmul.mubr.bf16.gmra.mrb[0].mxu0 %v603
        %v1245 = vpop.f32.mrb[0].mxu0
        %v1246 = vadd.f32 %v384, %v1245
        %v1247 = vpop.f32.mrb[0].mxu0
        %v1248 = vadd.f32 %v388, %v1247
        %v1249 = vpop.f32.mrb[0].mxu0
        %v1250 = vadd.f32 %v384, %v1249
        %v1251 = vpop.f32.mrb[0].mxu0
        %v1252 = vadd.f32 %v388, %v1251
        %1253 = vmatprep.mubr.bf16.mxu0 %v606
        %1254 = vmatmul.mubr.bf16.gmra.mrb[0].mxu0 %v605
        %v1255 = vpop.f32.mrb[0].mxu0
        %v1256 = vadd.f32 %v384, %v1255
        %v1257 = vpop.f32.mrb[0].mxu0
        %v1258 = vadd.f32 %v388, %v1257
        %v1259 = vpop.f32.mrb[0].mxu0
        %v1260 = vadd.f32 %v384, %v1259
        %v1261 = vpop.f32.mrb[0].mxu0
        %v1262 = vadd.f32 %v388, %v1261
        %1263 = vmatprep.mubr.bf16.mxu0 %v608
        %1264 = vmatmul.mubr.bf16.gmra.mrb[0].mxu0 %v607
        %v1265 = vpop.f32.mrb[0].mxu0
        %v1266 = vadd.f32 %v384, %v1265
        %v1267 = vpop.f32.mrb[0].mxu0
        %v1268 = vadd.f32 %v388, %v1267
        %v1269 = vpop.f32.mrb[0].mxu0
        %v1270 = vadd.f32 %v384, %v1269
        %v1271 = vpop.f32.mrb[0].mxu0
        %v1272 = vadd.f32 %v388, %v1271
        %1273 = vmatprep.mubr.bf16.mxu0 %v610
        %1274 = vmatmul.mubr.bf16.gmra.mrb[0].mxu0 %v609
        %v1275 = vpop.f32.mrb[0].mxu0
        %v1276 = vadd.f32 %v384, %v1275
        %v1277 = vpop.f32.mrb[0].mxu0
        %v1278 = vadd.f32 %v388, %v1277
        %v1279 = vpop.f32.mrb[0].mxu0
        %v1280 = vadd.f32 %v384, %v1279
        %v1281 = vpop.f32.mrb[0].mxu0
        %v1282 = vadd.f32 %v388, %v1281
        %1283 = vmatprep.mubr.bf16.mxu0 %v612
        %1284 = vmatmul.mubr.bf16.gmra.mrb[0].mxu0 %v611
        %v1285 = vpop.f32.mrb[0].mxu0
        %v1286 = vadd.f32 %v384, %v1285
        %v1287 = vpop.f32.mrb[0].mxu0
        %v1288 = vadd.f32 %v388, %v1287
        %v1289 = vpop.f32.mrb[0].mxu0
        %v1290 = vadd.f32 %v384, %v1289
        %v1291 = vpop.f32.mrb[0].mxu0
        %v1292 = vadd.f32 %v388, %v1291
        %1293 = vmatprep.mubr.bf16.mxu0 %v614
        %1294 = vmatmul.mubr.bf16.gmra.mrb[0].mxu0 %v613
        %v1295 = vpop.f32.mrb[0].mxu0
        %v1296 = vadd.f32 %v384, %v1295
        %v1297 = vpop.f32.mrb[0].mxu0
        %v1298 = vadd.f32 %v388, %v1297
        %v1299 = vpop.f32.mrb[0].mxu0
        %v1300 = vadd.f32 %v384, %v1299
        %v1301 = vpop.f32.mrb[0].mxu0
        %v1302 = vadd.f32 %v388, %v1301
        %1303 = vmatprep.mubr.bf16.mxu0 %v616
        %1304 = vmatmul.mubr.bf16.gmra.mrb[0].mxu0 %v615
        %v1305 = vpop.f32.mrb[0].mxu0
        %v1306 = vadd.f32 %v384, %v1305
        %v1307 = vpop.f32.mrb[0].mxu0
        %v1308 = vadd.f32 %v388, %v1307
        %v1309 = vpop.f32.mrb[0].mxu0
        %v1310 = vadd.f32 %v384, %v1309
        %v1311 = vpop.f32.mrb[0].mxu0
        %v1312 = vadd.f32 %v388, %v1311
        %1313 = vmatprep.mubr.bf16.mxu0 %v618
        %1314 = vmatmul.mubr.bf16.gmra.mrb[0].mxu0 %v617
        %v1315 = vpop.f32.mrb[0].mxu0
        %v1316 = vadd.f32 %v384, %v1315
        %v1317 = vpop.f32.mrb[0].mxu0
        %v1318 = vadd.f32 %v388, %v1317
        %v1319 = vpop.f32.mrb[0].mxu0
        %v1320 = vadd.f32 %v384, %v1319
        %v1321 = vpop.f32.mrb[0].mxu0
        %v1322 = vadd.f32 %v388, %v1321
        %1323 = vmatprep.mubr.bf16.mxu0 %v620
        %1324 = vmatmul.mubr.bf16.gmra.mrb[0].mxu0 %v619
        %v1325 = vpop.f32.mrb[0].mxu0
        %v1326 = vadd.f32 %v384, %v1325
        %v1327 = vpop.f32.mrb[0].mxu0
        %v1328 = vadd.f32 %v388, %v1327
        %v1329 = vpop.f32.mrb[0].mxu0
        %v1330 = vadd.f32 %v384, %v1329
        %v1331 = vpop.f32.mrb[0].mxu0
        %v1332 = vadd.f32 %v388, %v1331
        %1333 = vmatprep.mubr.bf16.mxu0 %v622
        %1334 = vmatmul.mubr.bf16.gmra.mrb[0].mxu0 %v621
        %v1335 = vpop.f32.mrb[0].mxu0
        %v1336 = vadd.f32 %v384, %v1335
        %v1337 = vpop.f32.mrb[0].mxu0
        %v1338 = vadd.f32 %v388, %v1337
        %v1339 = vpop.f32.mrb[0].mxu0
        %v1340 = vadd.f32 %v384, %v1339
        %v1341 = vpop.f32.mrb[0].mxu0
        %v1342 = vadd.f32 %v388, %v1341
        %1343 = vmatprep.mubr.bf16.mxu0 %v624
        %1344 = vmatmul.mubr.bf16.gmra.mrb[0].mxu0 %v623
        %v1345 = vpop.f32.mrb[0].mxu0
        %v1346 = vadd.f32 %v384, %v1345
        %v1347 = vpop.f32.mrb[0].mxu0
        %v1348 = vadd.f32 %v388, %v1347
        %v1349 = vpop.f32.mrb[0].mxu0
        %v1350 = vadd.f32 %v384, %v1349
        %v1351 = vpop.f32.mrb[0].mxu0
        %v1352 = vadd.f32 %v388, %v1351
        %1353 = vmatprep.mubr.bf16.mxu0 %v626
        %1354 = vmatmul.mubr.bf16.gmra.mrb[0].mxu0 %v625
        %v1355 = vpop.f32.mrb[0].mxu0
        %v1356 = vadd.f32 %v384, %v1355
        %v1357 = vpop.f32.mrb[0].mxu0
        %v1358 = vadd.f32 %v388, %v1357
        %v1359 = vpop.f32.mrb[0].mxu0
        %v1360 = vadd.f32 %v384, %v1359
        %v1361 = vpop.f32.mrb[0].mxu0
        %v1362 = vadd.f32 %v388, %v1361
        %1363 = vmatprep.mubr.bf16.mxu0 %v628
        %1364 = vmatmul.mubr.bf16.gmra.mrb[0].mxu0 %v627
        %v1365 = vpop.f32.mrb[0].mxu0
        %v1366 = vadd.f32 %v384, %v1365
        %v1367 = vpop.f32.mrb[0].mxu0
        %v1368 = vadd.f32 %v388, %v1367
        %v1369 = vpop.f32.mrb[0].mxu0
        %v1370 = vadd.f32 %v384, %v1369
        %v1371 = vpop.f32.mrb[0].mxu0
        %v1372 = vadd.f32 %v388, %v1371
        %1373 = vmatprep.mubr.bf16.mxu0 %v630
        %1374 = vmatmul.mubr.bf16.gmra.mrb[0].mxu0 %v629
        %v1375 = vpop.f32.mrb[0].mxu0
        %v1376 = vadd.f32 %v384, %v1375
        %v1377 = vpop.f32.mrb[0].mxu0
        %v1378 = vadd.f32 %v388, %v1377
        %v1379 = vpop.f32.mrb[0].mxu0
        %v1380 = vadd.f32 %v384, %v1379
        %v1381 = vpop.f32.mrb[0].mxu0
        %v1382 = vadd.f32 %v388, %v1381
        %1383 = vmatprep.mubr.bf16.mxu0 %v632
        %1384 = vmatmul.mubr.bf16.gmra.mrb[0].mxu0 %v631
        %v1385 = vpop.f32.mrb[0].mxu0
        %v1386 = vadd.f32 %v384, %v1385
        %v1387 = vpop.f32.mrb[0].mxu0
        %v1388 = vadd.f32 %v388, %v1387
        %v1389 = vpop.f32.mrb[0].mxu0
        %v1390 = vadd.f32 %v384, %v1389
        %v1391 = vpop.f32.mrb[0].mxu0
        %v1392 = vadd.f32 %v388, %v1391
        %1393 = vmatprep.mubr.bf16.mxu0 %v634
        %1394 = vmatmul.mubr.bf16.gmra.mrb[0].mxu0 %v633
        %v1395 = vpop.f32.mrb[0].mxu0
        %v1396 = vadd.f32 %v384, %v1395
        %v1397 = vpop.f32.mrb[0].mxu0
        %v1398 = vadd.f32 %v388, %v1397
        %v1399 = vpop.f32.mrb[0].mxu0
        %v1400 = vadd.f32 %v384, %v1399
        %v1401 = vpop.f32.mrb[0].mxu0
        %v1402 = vadd.f32 %v388, %v1401
        %1403 = vmatprep.mubr.bf16.mxu0 %v636
        %1404 = vmatmul.mubr.bf16.gmra.mrb[0].mxu0 %v635
        %v1405 = vpop.f32.mrb[0].mxu0
        %v1406 = vadd.f32 %v384, %v1405
        %v1407 = vpop.f32.mrb[0].mxu0
        %v1408 = vadd.f32 %v388, %v1407
        %v1409 = vpop.f32.mrb[0].mxu0
        %v1410 = vadd.f32 %v384, %v1409
        %v1411 = vpop.f32.mrb[0].mxu0
        %v1412 = vadd.f32 %v388, %v1411
        %1413 = vmatprep.mubr.bf16.mxu0 %v638
        %1414 = vmatmul.mubr.bf16.gmra.mrb[0].mxu0 %v637
        %v1415 = vpop.f32.mrb[0].mxu0
        %v1416 = vadd.f32 %v384, %v1415
        %v1417 = vpop.f32.mrb[0].mxu0
        %v1418 = vadd.f32 %v388, %v1417
        %v1419 = vpop.f32.mrb[0].mxu0
        %v1420 = vadd.f32 %v384, %v1419
        %v1421 = vpop.f32.mrb[0].mxu0
        %v1422 = vadd.f32 %v388, %v1421
        %1423 = vmatprep.mubr.bf16.mxu0 %v640
        %1424 = vmatmul.mubr.bf16.gmra.mrb[0].mxu0 %v639
        %v1425 = vpop.f32.mrb[0].mxu0
        %v1426 = vadd.f32 %v384, %v1425
        %v1427 = vpop.f32.mrb[0].mxu0
        %v1428 = vadd.f32 %v388, %v1427
        %v1429 = vpop.f32.mrb[0].mxu0
        %v1430 = vadd.f32 %v384, %v1429
        %v1431 = vpop.f32.mrb[0].mxu0
        %v1432 = vadd.f32 %v388, %v1431
        %1433 = vmatprep.mubr.bf16.mxu0 %v642
        %1434 = vmatmul.mubr.bf16.gmra.mrb[0].mxu0 %v641
        %v1435 = vpop.f32.mrb[0].mxu0
        %v1436 = vadd.f32 %v384, %v1435
        %v1437 = vpop.f32.mrb[0].mxu0
        %v1438 = vadd.f32 %v388, %v1437
        %v1439 = vpop.f32.mrb[0].mxu0
        %v1440 = vadd.f32 %v384, %v1439
        %v1441 = vpop.f32.mrb[0].mxu0
        %v1442 = vadd.f32 %v388, %v1441
        %1443 = vmatprep.mubr.bf16.mxu0 %v644
        %1444 = vmatmul.mubr.bf16.gmra.mrb[0].mxu0 %v643
        %v1445 = vpop.f32.mrb[0].mxu0
        %v1446 = vadd.f32 %v384, %v1445
        %v1447 = vpop.f32.mrb[0].mxu0
        %v1448 = vadd.f32 %v388, %v1447
        %v1449 = vpop.f32.mrb[0].mxu0
        %v1450 = vadd.f32 %v384, %v1449
        %v1451 = vpop.f32.mrb[0].mxu0
        %v1452 = vadd.f32 %v388, %v1451
        %1453 = vmatprep.mubr.bf16.mxu0 %v646
        %1454 = vmatmul.mubr.bf16.gmra.mrb[0].mxu0 %v645
        %v1455 = vpop.f32.mrb[0].mxu0
        %v1456 = vadd.f32 %v384, %v1455
        %v1457 = vpop.f32.mrb[0].mxu0
        %v1458 = vadd.f32 %v388, %v1457
        %v1459 = vpop.f32.mrb[0].mxu0
        %v1460 = vadd.f32 %v384, %v1459
        %v1461 = vpop.f32.mrb[0].mxu0
        %v1462 = vadd.f32 %v388, %v1461
        %1463 = vmatprep.mubr.bf16.mxu0 %v648
        %1464 = vmatmul.mubr.bf16.gmra.mrb[0].mxu0 %v647
        %v1465 = vpop.f32.mrb[0].mxu0
        %v1466 = vadd.f32 %v384, %v1465
        %v1467 = vpop.f32.mrb[0].mxu0
        %v1468 = vadd.f32 %v388, %v1467
        %v1469 = vpop.f32.mrb[0].mxu0
        %v1470 = vadd.f32 %v384, %v1469
        %v1471 = vpop.f32.mrb[0].mxu0
        %v1472 = vadd.f32 %v388, %v1471
        %1473 = vmatprep.mubr.bf16.mxu0 %v650
        %1474 = vmatmul.mubr.bf16.gmra.mrb[0].mxu0 %v649
        %v1475 = vpop.f32.mrb[0].mxu0
        %v1476 = vadd.f32 %v384, %v1475
        %v1477 = vpop.f32.mrb[0].mxu0
        %v1478 = vadd.f32 %v388, %v1477
        %v1479 = vpop.f32.mrb[0].mxu0
        %v1480 = vadd.f32 %v384, %v1479
        %v1481 = vpop.f32.mrb[0].mxu0
        %v1482 = vadd.f32 %v388, %v1481
        %1483 = vmatprep.mubr.bf16.mxu0 %v652
        %1484 = vmatmul.mubr.bf16.gmra.mrb[0].mxu0 %v651
        %v1485 = vpop.f32.mrb[0].mxu0
        %v1486 = vadd.f32 %v384, %v1485
        %v1487 = vpop.f32.mrb[0].mxu0
        %v1488 = vadd.f32 %v388, %v1487
        %v1489 = vpop.f32.mrb[0].mxu0
        %v1490 = vadd.f32 %v384, %v1489
        %v1491 = vpop.f32.mrb[0].mxu0
        %v1492 = vadd.f32 %v388, %v1491
        %1493 = vmatprep.mubr.bf16.mxu0 %v654
        %1494 = vmatmul.mubr.bf16.gmra.mrb[0].mxu0 %v653
        %v1495 = vpop.f32.mrb[0].mxu0
        %v1496 = vadd.f32 %v384, %v1495
        %v1497 = vpop.f32.mrb[0].mxu0
        %v1498 = vadd.f32 %v388, %v1497
        %v1499 = vpop.f32.mrb[0].mxu0
        %v1500 = vadd.f32 %v384, %v1499
        %v1501 = vpop.f32.mrb[0].mxu0
        %v1502 = vadd.f32 %v388, %v1501
        %1503 = vmatprep.mubr.bf16.mxu0 %v656
        %1504 = vmatmul.mubr.bf16.gmra.mrb[0].mxu0 %v655
        %v1505 = vpop.f32.mrb[0].mxu0
        %v1506 = vadd.f32 %v384, %v1505
        %v1507 = vpop.f32.mrb[0].mxu0
        %v1508 = vadd.f32 %v388, %v1507
        %v1509 = vpop.f32.mrb[0].mxu0
        %v1510 = vadd.f32 %v384, %v1509
        %v1511 = vpop.f32.mrb[0].mxu0
        %v1512 = vadd.f32 %v388, %v1511
        %1513 = vmatprep.mubr.bf16.mxu0 %v658
        %1514 = vmatmul.mubr.bf16.gmra.mrb[0].mxu0 %v657
        %v1515 = vpop.f32.mrb[0].mxu0
        %v1516 = vadd.f32 %v384, %v1515
        %v1517 = vpop.f32.mrb[0].mxu0
        %v1518 = vadd.f32 %v388, %v1517
        %v1519 = vpop.f32.mrb[0].mxu0
        %v1520 = vadd.f32 %v384, %v1519
        %v1521 = vpop.f32.mrb[0].mxu0
        %v1522 = vadd.f32 %v388, %v1521
        %1523 = vmatprep.mubr.bf16.mxu0 %v660
        %1524 = vmatmul.mubr.bf16.gmra.mrb[0].mxu0 %v659
        %v1525 = vpop.f32.mrb[0].mxu0
        %v1526 = vadd.f32 %v384, %v1525
        %v1527 = vpop.f32.mrb[0].mxu0
        %v1528 = vadd.f32 %v388, %v1527
        %v1529 = vpop.f32.mrb[0].mxu0
        %v1530 = vadd.f32 %v384, %v1529
        %v1531 = vpop.f32.mrb[0].mxu0
        %v1532 = vadd.f32 %v388, %v1531
        %1533 = vmatprep.mubr.bf16.mxu0 %v662
        %1534 = vmatmul.mubr.bf16.gmra.mrb[0].mxu0 %v661
        %v1535 = vpop.f32.mrb[0].mxu0
        %v1536 = vadd.f32 %v384, %v1535
        %v1537 = vpop.f32.mrb[0].mxu0
        %v1538 = vadd.f32 %v388, %v1537
        %v1539 = vpop.f32.mrb[0].mxu0
        %v1540 = vadd.f32 %v384, %v1539
        %v1541 = vpop.f32.mrb[0].mxu0
        %v1542 = vadd.f32 %v388, %v1541
        %1543 = vmatprep.mubr.bf16.mxu0 %v664
        %1544 = vmatmul.mubr.bf16.gmra.mrb[0].mxu0 %v663
        %v1545 = vpop.f32.mrb[0].mxu0
        %v1546 = vadd.f32 %v384, %v1545
        %v1547 = vpop.f32.mrb[0].mxu0
        %v1548 = vadd.f32 %v388, %v1547
        %v1549 = vpop.f32.mrb[0].mxu0
        %v1550 = vadd.f32 %v384, %v1549
        %v1551 = vpop.f32.mrb[0].mxu0
        %v1552 = vadd.f32 %v388, %v1551
        %1553 = vmatprep.mubr.bf16.mxu0 %v666
        %1554 = vmatmul.mubr.bf16.gmra.mrb[0].mxu0 %v665
        %v1555 = vpop.f32.mrb[0].mxu0
        %v1556 = vadd.f32 %v384, %v1555
        %v1557 = vpop.f32.mrb[0].mxu0
        %v1558 = vadd.f32 %v388, %v1557
        %v1559 = vpop.f32.mrb[0].mxu0
        %v1560 = vadd.f32 %v384, %v1559
        %v1561 = vpop.f32.mrb[0].mxu0
        %v1562 = vadd.f32 %v388, %v1561
        %1563 = vdwg.mxu0
        %1564 = vmatprep.subr.bf16.mxu0 %v1022
        %1565 = vmatpush1.bf16.msra.mxu0 %v1021
        %1566 = vmatprep.subr.bf16.mxu0 %v1028
        %1567 = vmatpush1.bf16.msra.mxu0 %v1027
        %1568 = vmatprep.subr.bf16.mxu0 %v1034
        %1569 = vmatpush1.bf16.msra.mxu0 %v1033
        %1570 = vmatprep.subr.bf16.mxu0 %v1040
        %1571 = vmatpush1.bf16.msra.mxu0 %v1039
        %1572 = vmatprep.subr.bf16.mxu0 %v1046
        %1573 = vmatpush1.bf16.msra.mxu0 %v1045
        %1574 = vmatprep.subr.bf16.mxu0 %v1052
        %1575 = vmatpush1.bf16.msra.mxu0 %v1051
        %1576 = vmatprep.subr.bf16.mxu0 %v1058
        %1577 = vmatpush1.bf16.msra.mxu0 %v1057
        %1578 = vmatprep.subr.bf16.mxu0 %v1064
        %1579 = vmatpush1.bf16.msra.mxu0 %v1063
        %1580 = vmatprep.subr.bf16.mxu0 %v1070
        %1581 = vmatpush1.bf16.msra.mxu0 %v1069
        %1582 = vmatprep.subr.bf16.mxu0 %v1076
        %1583 = vmatpush1.bf16.msra.mxu0 %v1075
        %1584 = vmatprep.subr.bf16.mxu0 %v1082
        %1585 = vmatpush1.bf16.msra.mxu0 %v1081
        %1586 = vmatprep.subr.bf16.mxu0 %v1088
        %1587 = vmatpush1.bf16.msra.mxu0 %v1087
        %1588 = vmatprep.subr.bf16.mxu0 %v1094
        %1589 = vmatpush1.bf16.msra.mxu0 %v1093
        %1590 = vmatprep.subr.bf16.mxu0 %v1100
        %1591 = vmatpush1.bf16.msra.mxu0 %v1099
        %1592 = vmatprep.subr.bf16.mxu0 %v1106
        %1593 = vmatpush1.bf16.msra.mxu0 %v1105
        %1594 = vmatprep.subr.bf16.mxu0 %v1112
        %1595 = vmatpush1.bf16.msra.mxu0 %v1111
        %1596 = vmatprep.mubr.bf16.mxu0 %v604
        %1597 = vmatmul.mubr.bf16.gmra.mrb[0].mxu0 %v603
        %v1598 = vpop.f32.mrb[0].mxu0
        %v1599 = vadd.f32 %v392, %v1598
        %v1600 = vpop.f32.mrb[0].mxu0
        %v1601 = vadd.f32 %v396, %v1600
        %v1602 = vpop.f32.mrb[0].mxu0
        %v1603 = vadd.f32 %v392, %v1602
        %v1604 = vpop.f32.mrb[0].mxu0
        %v1605 = vadd.f32 %v396, %v1604
        %1606 = vmatprep.mubr.bf16.mxu0 %v606
        %1607 = vmatmul.mubr.bf16.gmra.mrb[0].mxu0 %v605
        %v1608 = vpop.f32.mrb[0].mxu0
        %v1609 = vadd.f32 %v392, %v1608
        %v1610 = vpop.f32.mrb[0].mxu0
        %v1611 = vadd.f32 %v396, %v1610
        %v1612 = vpop.f32.mrb[0].mxu0
        %v1613 = vadd.f32 %v392, %v1612
        %v1614 = vpop.f32.mrb[0].mxu0
        %v1615 = vadd.f32 %v396, %v1614
        %1616 = vmatprep.mubr.bf16.mxu0 %v608
        %1617 = vmatmul.mubr.bf16.gmra.mrb[0].mxu0 %v607
        %v1618 = vpop.f32.mrb[0].mxu0
        %v1619 = vadd.f32 %v392, %v1618
        %v1620 = vpop.f32.mrb[0].mxu0
        %v1621 = vadd.f32 %v396, %v1620
        %v1622 = vpop.f32.mrb[0].mxu0
        %v1623 = vadd.f32 %v392, %v1622
        %v1624 = vpop.f32.mrb[0].mxu0
        %v1625 = vadd.f32 %v396, %v1624
        %1626 = vmatprep.mubr.bf16.mxu0 %v610
        %1627 = vmatmul.mubr.bf16.gmra.mrb[0].mxu0 %v609
        %v1628 = vpop.f32.mrb[0].mxu0
        %v1629 = vadd.f32 %v392, %v1628
        %v1630 = vpop.f32.mrb[0].mxu0
        %v1631 = vadd.f32 %v396, %v1630
        %v1632 = vpop.f32.mrb[0].mxu0
        %v1633 = vadd.f32 %v392, %v1632
        %v1634 = vpop.f32.mrb[0].mxu0
        %v1635 = vadd.f32 %v396, %v1634
        %1636 = vmatprep.mubr.bf16.mxu0 %v612
        %1637 = vmatmul.mubr.bf16.gmra.mrb[0].mxu0 %v611
        %v1638 = vpop.f32.mrb[0].mxu0
        %v1639 = vadd.f32 %v392, %v1638
        %v1640 = vpop.f32.mrb[0].mxu0
        %v1641 = vadd.f32 %v396, %v1640
        %v1642 = vpop.f32.mrb[0].mxu0
        %v1643 = vadd.f32 %v392, %v1642
        %v1644 = vpop.f32.mrb[0].mxu0
        %v1645 = vadd.f32 %v396, %v1644
        %1646 = vmatprep.mubr.bf16.mxu0 %v614
        %1647 = vmatmul.mubr.bf16.gmra.mrb[0].mxu0 %v613
        %v1648 = vpop.f32.mrb[0].mxu0
        %v1649 = vadd.f32 %v392, %v1648
        %v1650 = vpop.f32.mrb[0].mxu0
        %v1651 = vadd.f32 %v396, %v1650
        %v1652 = vpop.f32.mrb[0].mxu0
        %v1653 = vadd.f32 %v392, %v1652
        %v1654 = vpop.f32.mrb[0].mxu0
        %v1655 = vadd.f32 %v396, %v1654
        %1656 = vmatprep.mubr.bf16.mxu0 %v616
        %1657 = vmatmul.mubr.bf16.gmra.mrb[0].mxu0 %v615
        %v1658 = vpop.f32.mrb[0].mxu0
        %v1659 = vadd.f32 %v392, %v1658
        %v1660 = vpop.f32.mrb[0].mxu0
        %v1661 = vadd.f32 %v396, %v1660
        %v1662 = vpop.f32.mrb[0].mxu0
        %v1663 = vadd.f32 %v392, %v1662
        %v1664 = vpop.f32.mrb[0].mxu0
        %v1665 = vadd.f32 %v396, %v1664
        %1666 = vmatprep.mubr.bf16.mxu0 %v618
        %1667 = vmatmul.mubr.bf16.gmra.mrb[0].mxu0 %v617
        %v1668 = vpop.f32.mrb[0].mxu0
        %v1669 = vadd.f32 %v392, %v1668
        %v1670 = vpop.f32.mrb[0].mxu0
        %v1671 = vadd.f32 %v396, %v1670
        %v1672 = vpop.f32.mrb[0].mxu0
        %v1673 = vadd.f32 %v392, %v1672
        %v1674 = vpop.f32.mrb[0].mxu0
        %v1675 = vadd.f32 %v396, %v1674
        %1676 = vmatprep.mubr.bf16.mxu0 %v620
        %1677 = vmatmul.mubr.bf16.gmra.mrb[0].mxu0 %v619
        %v1678 = vpop.f32.mrb[0].mxu0
        %v1679 = vadd.f32 %v392, %v1678
        %v1680 = vpop.f32.mrb[0].mxu0
        %v1681 = vadd.f32 %v396, %v1680
        %v1682 = vpop.f32.mrb[0].mxu0
        %v1683 = vadd.f32 %v392, %v1682
        %v1684 = vpop.f32.mrb[0].mxu0
        %v1685 = vadd.f32 %v396, %v1684
        %1686 = vmatprep.mubr.bf16.mxu0 %v622
        %1687 = vmatmul.mubr.bf16.gmra.mrb[0].mxu0 %v621
        %v1688 = vpop.f32.mrb[0].mxu0
        %v1689 = vadd.f32 %v392, %v1688
        %v1690 = vpop.f32.mrb[0].mxu0
        %v1691 = vadd.f32 %v396, %v1690
        %v1692 = vpop.f32.mrb[0].mxu0
        %v1693 = vadd.f32 %v392, %v1692
        %v1694 = vpop.f32.mrb[0].mxu0
        %v1695 = vadd.f32 %v396, %v1694
        %1696 = vmatprep.mubr.bf16.mxu0 %v624
        %1697 = vmatmul.mubr.bf16.gmra.mrb[0].mxu0 %v623
        %v1698 = vpop.f32.mrb[0].mxu0
        %v1699 = vadd.f32 %v392, %v1698
        %v1700 = vpop.f32.mrb[0].mxu0
        %v1701 = vadd.f32 %v396, %v1700
        %v1702 = vpop.f32.mrb[0].mxu0
        %v1703 = vadd.f32 %v392, %v1702
        %v1704 = vpop.f32.mrb[0].mxu0
        %v1705 = vadd.f32 %v396, %v1704
        %1706 = vmatprep.mubr.bf16.mxu0 %v626
        %1707 = vmatmul.mubr.bf16.gmra.mrb[0].mxu0 %v625
        %v1708 = vpop.f32.mrb[0].mxu0
        %v1709 = vadd.f32 %v392, %v1708
        %v1710 = vpop.f32.mrb[0].mxu0
        %v1711 = vadd.f32 %v396, %v1710
        %v1712 = vpop.f32.mrb[0].mxu0
        %v1713 = vadd.f32 %v392, %v1712
        %v1714 = vpop.f32.mrb[0].mxu0
        %v1715 = vadd.f32 %v396, %v1714
        %1716 = vmatprep.mubr.bf16.mxu0 %v628
        %1717 = vmatmul.mubr.bf16.gmra.mrb[0].mxu0 %v627
        %v1718 = vpop.f32.mrb[0].mxu0
        %v1719 = vadd.f32 %v392, %v1718
        %v1720 = vpop.f32.mrb[0].mxu0
        %v1721 = vadd.f32 %v396, %v1720
        %v1722 = vpop.f32.mrb[0].mxu0
        %v1723 = vadd.f32 %v392, %v1722
        %v1724 = vpop.f32.mrb[0].mxu0
        %v1725 = vadd.f32 %v396, %v1724
        %1726 = vmatprep.mubr.bf16.mxu0 %v630
        %1727 = vmatmul.mubr.bf16.gmra.mrb[0].mxu0 %v629
        %v1728 = vpop.f32.mrb[0].mxu0
        %v1729 = vadd.f32 %v392, %v1728
        %v1730 = vpop.f32.mrb[0].mxu0
        %v1731 = vadd.f32 %v396, %v1730
        %v1732 = vpop.f32.mrb[0].mxu0
        %v1733 = vadd.f32 %v392, %v1732
        %v1734 = vpop.f32.mrb[0].mxu0
        %v1735 = vadd.f32 %v396, %v1734
        %1736 = vmatprep.mubr.bf16.mxu0 %v632
        %1737 = vmatmul.mubr.bf16.gmra.mrb[0].mxu0 %v631
        %v1738 = vpop.f32.mrb[0].mxu0
        %v1739 = vadd.f32 %v392, %v1738
        %v1740 = vpop.f32.mrb[0].mxu0
        %v1741 = vadd.f32 %v396, %v1740
        %v1742 = vpop.f32.mrb[0].mxu0
        %v1743 = vadd.f32 %v392, %v1742
        %v1744 = vpop.f32.mrb[0].mxu0
        %v1745 = vadd.f32 %v396, %v1744
        %1746 = vmatprep.mubr.bf16.mxu0 %v634
        %1747 = vmatmul.mubr.bf16.gmra.mrb[0].mxu0 %v633
        %v1748 = vpop.f32.mrb[0].mxu0
        %v1749 = vadd.f32 %v392, %v1748
        %v1750 = vpop.f32.mrb[0].mxu0
        %v1751 = vadd.f32 %v396, %v1750
        %v1752 = vpop.f32.mrb[0].mxu0
        %v1753 = vadd.f32 %v392, %v1752
        %v1754 = vpop.f32.mrb[0].mxu0
        %v1755 = vadd.f32 %v396, %v1754
        %1756 = vmatprep.mubr.bf16.mxu0 %v636
        %1757 = vmatmul.mubr.bf16.gmra.mrb[0].mxu0 %v635
        %v1758 = vpop.f32.mrb[0].mxu0
        %v1759 = vadd.f32 %v392, %v1758
        %v1760 = vpop.f32.mrb[0].mxu0
        %v1761 = vadd.f32 %v396, %v1760
        %v1762 = vpop.f32.mrb[0].mxu0
        %v1763 = vadd.f32 %v392, %v1762
        %v1764 = vpop.f32.mrb[0].mxu0
        %v1765 = vadd.f32 %v396, %v1764
        %1766 = vmatprep.mubr.bf16.mxu0 %v638
        %1767 = vmatmul.mubr.bf16.gmra.mrb[0].mxu0 %v637
        %v1768 = vpop.f32.mrb[0].mxu0
        %v1769 = vadd.f32 %v392, %v1768
        %v1770 = vpop.f32.mrb[0].mxu0
        %v1771 = vadd.f32 %v396, %v1770
        %v1772 = vpop.f32.mrb[0].mxu0
        %v1773 = vadd.f32 %v392, %v1772
        %v1774 = vpop.f32.mrb[0].mxu0
        %v1775 = vadd.f32 %v396, %v1774
        %1776 = vmatprep.mubr.bf16.mxu0 %v640
        %1777 = vmatmul.mubr.bf16.gmra.mrb[0].mxu0 %v639
        %v1778 = vpop.f32.mrb[0].mxu0
        %v1779 = vadd.f32 %v392, %v1778
        %v1780 = vpop.f32.mrb[0].mxu0
        %v1781 = vadd.f32 %v396, %v1780
        %v1782 = vpop.f32.mrb[0].mxu0
        %v1783 = vadd.f32 %v392, %v1782
        %v1784 = vpop.f32.mrb[0].mxu0
        %v1785 = vadd.f32 %v396, %v1784
        %1786 = vmatprep.mubr.bf16.mxu0 %v642
        %1787 = vmatmul.mubr.bf16.gmra.mrb[0].mxu0 %v641
        %v1788 = vpop.f32.mrb[0].mxu0
        %v1789 = vadd.f32 %v392, %v1788
        %v1790 = vpop.f32.mrb[0].mxu0
        %v1791 = vadd.f32 %v396, %v1790
        %v1792 = vpop.f32.mrb[0].mxu0
        %v1793 = vadd.f32 %v392, %v1792
        %v1794 = vpop.f32.mrb[0].mxu0
        %v1795 = vadd.f32 %v396, %v1794
        %1796 = vmatprep.mubr.bf16.mxu0 %v644
        %1797 = vmatmul.mubr.bf16.gmra.mrb[0].mxu0 %v643
        %v1798 = vpop.f32.mrb[0].mxu0
        %v1799 = vadd.f32 %v392, %v1798
        %v1800 = vpop.f32.mrb[0].mxu0
        %v1801 = vadd.f32 %v396, %v1800
        %v1802 = vpop.f32.mrb[0].mxu0
        %v1803 = vadd.f32 %v392, %v1802
        %v1804 = vpop.f32.mrb[0].mxu0
        %v1805 = vadd.f32 %v396, %v1804
        %1806 = vmatprep.mubr.bf16.mxu0 %v646
        %1807 = vmatmul.mubr.bf16.gmra.mrb[0].mxu0 %v645
        %v1808 = vpop.f32.mrb[0].mxu0
        %v1809 = vadd.f32 %v392, %v1808
        %v1810 = vpop.f32.mrb[0].mxu0
        %v1811 = vadd.f32 %v396, %v1810
        %v1812 = vpop.f32.mrb[0].mxu0
        %v1813 = vadd.f32 %v392, %v1812
        %v1814 = vpop.f32.mrb[0].mxu0
        %v1815 = vadd.f32 %v396, %v1814
        %1816 = vmatprep.mubr.bf16.mxu0 %v648
        %1817 = vmatmul.mubr.bf16.gmra.mrb[0].mxu0 %v647
        %v1818 = vpop.f32.mrb[0].mxu0
        %v1819 = vadd.f32 %v392, %v1818
        %v1820 = vpop.f32.mrb[0].mxu0
        %v1821 = vadd.f32 %v396, %v1820
        %v1822 = vpop.f32.mrb[0].mxu0
        %v1823 = vadd.f32 %v392, %v1822
        %v1824 = vpop.f32.mrb[0].mxu0
        %v1825 = vadd.f32 %v396, %v1824
        %1826 = vmatprep.mubr.bf16.mxu0 %v650
        %1827 = vmatmul.mubr.bf16.gmra.mrb[0].mxu0 %v649
        %v1828 = vpop.f32.mrb[0].mxu0
        %v1829 = vadd.f32 %v392, %v1828
        %v1830 = vpop.f32.mrb[0].mxu0
        %v1831 = vadd.f32 %v396, %v1830
        %v1832 = vpop.f32.mrb[0].mxu0
        %v1833 = vadd.f32 %v392, %v1832
        %v1834 = vpop.f32.mrb[0].mxu0
        %v1835 = vadd.f32 %v396, %v1834
        %1836 = vmatprep.mubr.bf16.mxu0 %v652
        %1837 = vmatmul.mubr.bf16.gmra.mrb[0].mxu0 %v651
        %v1838 = vpop.f32.mrb[0].mxu0
        %v1839 = vadd.f32 %v392, %v1838
        %v1840 = vpop.f32.mrb[0].mxu0
        %v1841 = vadd.f32 %v396, %v1840
        %v1842 = vpop.f32.mrb[0].mxu0
        %v1843 = vadd.f32 %v392, %v1842
        %v1844 = vpop.f32.mrb[0].mxu0
        %v1845 = vadd.f32 %v396, %v1844
        %1846 = vmatprep.mubr.bf16.mxu0 %v654
        %1847 = vmatmul.mubr.bf16.gmra.mrb[0].mxu0 %v653
        %v1848 = vpop.f32.mrb[0].mxu0
        %v1849 = vadd.f32 %v392, %v1848
        %v1850 = vpop.f32.mrb[0].mxu0
        %v1851 = vadd.f32 %v396, %v1850
        %v1852 = vpop.f32.mrb[0].mxu0
        %v1853 = vadd.f32 %v392, %v1852
        %v1854 = vpop.f32.mrb[0].mxu0
        %v1855 = vadd.f32 %v396, %v1854
        %1856 = vmatprep.mubr.bf16.mxu0 %v656
        %1857 = vmatmul.mubr.bf16.gmra.mrb[0].mxu0 %v655
        %v1858 = vpop.f32.mrb[0].mxu0
        %v1859 = vadd.f32 %v392, %v1858
        %v1860 = vpop.f32.mrb[0].mxu0
        %v1861 = vadd.f32 %v396, %v1860
        %v1862 = vpop.f32.mrb[0].mxu0
        %v1863 = vadd.f32 %v392, %v1862
        %v1864 = vpop.f32.mrb[0].mxu0
        %v1865 = vadd.f32 %v396, %v1864
        %1866 = vmatprep.mubr.bf16.mxu0 %v658
        %1867 = vmatmul.mubr.bf16.gmra.mrb[0].mxu0 %v657
        %v1868 = vpop.f32.mrb[0].mxu0
        %v1869 = vadd.f32 %v392, %v1868
        %v1870 = vpop.f32.mrb[0].mxu0
        %v1871 = vadd.f32 %v396, %v1870
        %v1872 = vpop.f32.mrb[0].mxu0
        %v1873 = vadd.f32 %v392, %v1872
        %v1874 = vpop.f32.mrb[0].mxu0
        %v1875 = vadd.f32 %v396, %v1874
        %1876 = vmatprep.mubr.bf16.mxu0 %v660
        %1877 = vmatmul.mubr.bf16.gmra.mrb[0].mxu0 %v659
        %v1878 = vpop.f32.mrb[0].mxu0
        %v1879 = vadd.f32 %v392, %v1878
        %v1880 = vpop.f32.mrb[0].mxu0
        %v1881 = vadd.f32 %v396, %v1880
        %v1882 = vpop.f32.mrb[0].mxu0
        %v1883 = vadd.f32 %v392, %v1882
        %v1884 = vpop.f32.mrb[0].mxu0
        %v1885 = vadd.f32 %v396, %v1884
        %1886 = vmatprep.mubr.bf16.mxu0 %v662
        %1887 = vmatmul.mubr.bf16.gmra.mrb[0].mxu0 %v661
        %v1888 = vpop.f32.mrb[0].mxu0
        %v1889 = vadd.f32 %v392, %v1888
        %v1890 = vpop.f32.mrb[0].mxu0
        %v1891 = vadd.f32 %v396, %v1890
        %v1892 = vpop.f32.mrb[0].mxu0
        %v1893 = vadd.f32 %v392, %v1892
        %v1894 = vpop.f32.mrb[0].mxu0
        %v1895 = vadd.f32 %v396, %v1894
        %1896 = vmatprep.mubr.bf16.mxu0 %v664
        %1897 = vmatmul.mubr.bf16.gmra.mrb[0].mxu0 %v663
        %v1898 = vpop.f32.mrb[0].mxu0
        %v1899 = vadd.f32 %v392, %v1898
        %v1900 = vpop.f32.mrb[0].mxu0
        %v1901 = vadd.f32 %v396, %v1900
        %v1902 = vpop.f32.mrb[0].mxu0
        %v1903 = vadd.f32 %v392, %v1902
        %v1904 = vpop.f32.mrb[0].mxu0
        %v1905 = vadd.f32 %v396, %v1904
        %1906 = vmatprep.mubr.bf16.mxu0 %v666
        %1907 = vmatmul.mubr.bf16.gmra.mrb[0].mxu0 %v665
        %v1908 = vpop.f32.mrb[0].mxu0
        %v1909 = vadd.f32 %v392, %v1908
        %v1910 = vpop.f32.mrb[0].mxu0
        %v1911 = vadd.f32 %v396, %v1910
        %v1912 = vpop.f32.mrb[0].mxu0
        %v1913 = vadd.f32 %v392, %v1912
        %v1914 = vpop.f32.mrb[0].mxu0
        %v1915 = vadd.f32 %v396, %v1914
        %1916 = vdwg.mxu0
        %1917 = vmatprep.subr.bf16.mxu0 %v1024
        %1918 = vmatpush1.bf16.msra.mxu0 %v1023
        %1919 = vmatprep.subr.bf16.mxu0 %v1030
        %1920 = vmatpush1.bf16.msra.mxu0 %v1029
        %1921 = vmatprep.subr.bf16.mxu0 %v1036
        %1922 = vmatpush1.bf16.msra.mxu0 %v1035
        %1923 = vmatprep.subr.bf16.mxu0 %v1042
        %1924 = vmatpush1.bf16.msra.mxu0 %v1041
        %1925 = vmatprep.subr.bf16.mxu0 %v1048
        %1926 = vmatpush1.bf16.msra.mxu0 %v1047
        %1927 = vmatprep.subr.bf16.mxu0 %v1054
        %1928 = vmatpush1.bf16.msra.mxu0 %v1053
        %1929 = vmatprep.subr.bf16.mxu0 %v1060
        %1930 = vmatpush1.bf16.msra.mxu0 %v1059
        %1931 = vmatprep.subr.bf16.mxu0 %v1066
        %1932 = vmatpush1.bf16.msra.mxu0 %v1065
        %1933 = vmatprep.subr.bf16.mxu0 %v1072
        %1934 = vmatpush1.bf16.msra.mxu0 %v1071
        %1935 = vmatprep.subr.bf16.mxu0 %v1078
        %1936 = vmatpush1.bf16.msra.mxu0 %v1077
        %1937 = vmatprep.subr.bf16.mxu0 %v1084
        %1938 = vmatpush1.bf16.msra.mxu0 %v1083
        %1939 = vmatprep.subr.bf16.mxu0 %v1090
        %1940 = vmatpush1.bf16.msra.mxu0 %v1089
        %1941 = vmatprep.subr.bf16.mxu0 %v1096
        %1942 = vmatpush1.bf16.msra.mxu0 %v1095
        %1943 = vmatprep.subr.bf16.mxu0 %v1102
        %1944 = vmatpush1.bf16.msra.mxu0 %v1101
        %1945 = vmatprep.subr.bf16.mxu0 %v1108
        %1946 = vmatpush1.bf16.msra.mxu0 %v1107
        %1947 = vmatprep.subr.bf16.mxu0 %v1114
        %1948 = vmatpush1.bf16.msra.mxu0 %v1113
        %1949 = vmatprep.mubr.bf16.mxu0 %v604
        %1950 = vmatmul.mubr.bf16.gmra.mrb[0].mxu0 %v603
        %v1951 = vpop.f32.mrb[0].mxu0
        %v1952 = vadd.f32 %v400, %v1951
        %v1953 = vpop.f32.mrb[0].mxu0
        %v1954 = vadd.f32 %v404, %v1953
        %v1955 = vpop.f32.mrb[0].mxu0
        %v1956 = vadd.f32 %v400, %v1955
        %v1957 = vpop.f32.mrb[0].mxu0
        %v1958 = vadd.f32 %v404, %v1957
        %1959 = vmatprep.mubr.bf16.mxu0 %v606
        %1960 = vmatmul.mubr.bf16.gmra.mrb[0].mxu0 %v605
        %v1961 = vpop.f32.mrb[0].mxu0
        %v1962 = vadd.f32 %v400, %v1961
        %v1963 = vpop.f32.mrb[0].mxu0
        %v1964 = vadd.f32 %v404, %v1963
        %v1965 = vpop.f32.mrb[0].mxu0
        %v1966 = vadd.f32 %v400, %v1965
        %v1967 = vpop.f32.mrb[0].mxu0
        %v1968 = vadd.f32 %v404, %v1967
        %1969 = vmatprep.mubr.bf16.mxu0 %v608
        %1970 = vmatmul.mubr.bf16.gmra.mrb[0].mxu0 %v607
        %v1971 = vpop.f32.mrb[0].mxu0
        %v1972 = vadd.f32 %v400, %v1971
        %v1973 = vpop.f32.mrb[0].mxu0
        %v1974 = vadd.f32 %v404, %v1973
        %v1975 = vpop.f32.mrb[0].mxu0
        %v1976 = vadd.f32 %v400, %v1975
        %v1977 = vpop.f32.mrb[0].mxu0
        %v1978 = vadd.f32 %v404, %v1977
        %1979 = vmatprep.mubr.bf16.mxu0 %v610
        %1980 = vmatmul.mubr.bf16.gmra.mrb[0].mxu0 %v609
        %v1981 = vpop.f32.mrb[0].mxu0
        %v1982 = vadd.f32 %v400, %v1981
        %v1983 = vpop.f32.mrb[0].mxu0
        %v1984 = vadd.f32 %v404, %v1983
        %v1985 = vpop.f32.mrb[0].mxu0
        %v1986 = vadd.f32 %v400, %v1985
        %v1987 = vpop.f32.mrb[0].mxu0
        %v1988 = vadd.f32 %v404, %v1987
        %1989 = vmatprep.mubr.bf16.mxu0 %v612
        %1990 = vmatmul.mubr.bf16.gmra.mrb[0].mxu0 %v611
        %v1991 = vpop.f32.mrb[0].mxu0
        %v1992 = vadd.f32 %v400, %v1991
        %v1993 = vpop.f32.mrb[0].mxu0
        %v1994 = vadd.f32 %v404, %v1993
        %v1995 = vpop.f32.mrb[0].mxu0
        %v1996 = vadd.f32 %v400, %v1995
        %v1997 = vpop.f32.mrb[0].mxu0
        %v1998 = vadd.f32 %v404, %v1997
        %1999 = vmatprep.mubr.bf16.mxu0 %v614
        %2000 = vmatmul.mubr.bf16.gmra.mrb[0].mxu0 %v613
        %v2001 = vpop.f32.mrb[0].mxu0
        %v2002 = vadd.f32 %v400, %v2001
        %v2003 = vpop.f32.mrb[0].mxu0
        %v2004 = vadd.f32 %v404, %v2003
        %v2005 = vpop.f32.mrb[0].mxu0
        %v2006 = vadd.f32 %v400, %v2005
        %v2007 = vpop.f32.mrb[0].mxu0
        %v2008 = vadd.f32 %v404, %v2007
        %2009 = vmatprep.mubr.bf16.mxu0 %v616
        %2010 = vmatmul.mubr.bf16.gmra.mrb[0].mxu0 %v615
        %v2011 = vpop.f32.mrb[0].mxu0
        %v2012 = vadd.f32 %v400, %v2011
        %v2013 = vpop.f32.mrb[0].mxu0
        %v2014 = vadd.f32 %v404, %v2013
        %v2015 = vpop.f32.mrb[0].mxu0
        %v2016 = vadd.f32 %v400, %v2015
        %v2017 = vpop.f32.mrb[0].mxu0
        %v2018 = vadd.f32 %v404, %v2017
        %2019 = vmatprep.mubr.bf16.mxu0 %v618
        %2020 = vmatmul.mubr.bf16.gmra.mrb[0].mxu0 %v617
        %v2021 = vpop.f32.mrb[0].mxu0
        %v2022 = vadd.f32 %v400, %v2021
        %v2023 = vpop.f32.mrb[0].mxu0
        %v2024 = vadd.f32 %v404, %v2023
        %v2025 = vpop.f32.mrb[0].mxu0
        %v2026 = vadd.f32 %v400, %v2025
        %v2027 = vpop.f32.mrb[0].mxu0
        %v2028 = vadd.f32 %v404, %v2027
        %2029 = vmatprep.mubr.bf16.mxu0 %v620
        %2030 = vmatmul.mubr.bf16.gmra.mrb[0].mxu0 %v619
        %v2031 = vpop.f32.mrb[0].mxu0
        %v2032 = vadd.f32 %v400, %v2031
        %v2033 = vpop.f32.mrb[0].mxu0
        %v2034 = vadd.f32 %v404, %v2033
        %v2035 = vpop.f32.mrb[0].mxu0
        %v2036 = vadd.f32 %v400, %v2035
        %v2037 = vpop.f32.mrb[0].mxu0
        %v2038 = vadd.f32 %v404, %v2037
        %2039 = vmatprep.mubr.bf16.mxu0 %v622
        %2040 = vmatmul.mubr.bf16.gmra.mrb[0].mxu0 %v621
        %v2041 = vpop.f32.mrb[0].mxu0
        %v2042 = vadd.f32 %v400, %v2041
        %v2043 = vpop.f32.mrb[0].mxu0
        %v2044 = vadd.f32 %v404, %v2043
        %v2045 = vpop.f32.mrb[0].mxu0
        %v2046 = vadd.f32 %v400, %v2045
        %v2047 = vpop.f32.mrb[0].mxu0
        %v2048 = vadd.f32 %v404, %v2047
        %2049 = vmatprep.mubr.bf16.mxu0 %v624
        %2050 = vmatmul.mubr.bf16.gmra.mrb[0].mxu0 %v623
        %v2051 = vpop.f32.mrb[0].mxu0
        %v2052 = vadd.f32 %v400, %v2051
        %v2053 = vpop.f32.mrb[0].mxu0
        %v2054 = vadd.f32 %v404, %v2053
        %v2055 = vpop.f32.mrb[0].mxu0
        %v2056 = vadd.f32 %v400, %v2055
        %v2057 = vpop.f32.mrb[0].mxu0
        %v2058 = vadd.f32 %v404, %v2057
        %2059 = vmatprep.mubr.bf16.mxu0 %v626
        %2060 = vmatmul.mubr.bf16.gmra.mrb[0].mxu0 %v625
        %v2061 = vpop.f32.mrb[0].mxu0
        %v2062 = vadd.f32 %v400, %v2061
        %v2063 = vpop.f32.mrb[0].mxu0
        %v2064 = vadd.f32 %v404, %v2063
        %v2065 = vpop.f32.mrb[0].mxu0
        %v2066 = vadd.f32 %v400, %v2065
        %v2067 = vpop.f32.mrb[0].mxu0
        %v2068 = vadd.f32 %v404, %v2067
        %2069 = vmatprep.mubr.bf16.mxu0 %v628
        %2070 = vmatmul.mubr.bf16.gmra.mrb[0].mxu0 %v627
        %v2071 = vpop.f32.mrb[0].mxu0
        %v2072 = vadd.f32 %v400, %v2071
        %v2073 = vpop.f32.mrb[0].mxu0
        %v2074 = vadd.f32 %v404, %v2073
        %v2075 = vpop.f32.mrb[0].mxu0
        %v2076 = vadd.f32 %v400, %v2075
        %v2077 = vpop.f32.mrb[0].mxu0
        %v2078 = vadd.f32 %v404, %v2077
        %2079 = vmatprep.mubr.bf16.mxu0 %v630
        %2080 = vmatmul.mubr.bf16.gmra.mrb[0].mxu0 %v629
        %v2081 = vpop.f32.mrb[0].mxu0
        %v2082 = vadd.f32 %v400, %v2081
        %v2083 = vpop.f32.mrb[0].mxu0
        %v2084 = vadd.f32 %v404, %v2083
        %v2085 = vpop.f32.mrb[0].mxu0
        %v2086 = vadd.f32 %v400, %v2085
        %v2087 = vpop.f32.mrb[0].mxu0
        %v2088 = vadd.f32 %v404, %v2087
        %2089 = vmatprep.mubr.bf16.mxu0 %v632
        %2090 = vmatmul.mubr.bf16.gmra.mrb[0].mxu0 %v631
        %v2091 = vpop.f32.mrb[0].mxu0
        %v2092 = vadd.f32 %v400, %v2091
        %v2093 = vpop.f32.mrb[0].mxu0
        %v2094 = vadd.f32 %v404, %v2093
        %v2095 = vpop.f32.mrb[0].mxu0
        %v2096 = vadd.f32 %v400, %v2095
        %v2097 = vpop.f32.mrb[0].mxu0
        %v2098 = vadd.f32 %v404, %v2097
        %2099 = vmatprep.mubr.bf16.mxu0 %v634
        %2100 = vmatmul.mubr.bf16.gmra.mrb[0].mxu0 %v633
        %v2101 = vpop.f32.mrb[0].mxu0
        %v2102 = vadd.f32 %v400, %v2101
        %v2103 = vpop.f32.mrb[0].mxu0
        %v2104 = vadd.f32 %v404, %v2103
        %v2105 = vpop.f32.mrb[0].mxu0
        %v2106 = vadd.f32 %v400, %v2105
        %v2107 = vpop.f32.mrb[0].mxu0
        %v2108 = vadd.f32 %v404, %v2107
        %2109 = vmatprep.mubr.bf16.mxu0 %v636
        %2110 = vmatmul.mubr.bf16.gmra.mrb[0].mxu0 %v635
        %v2111 = vpop.f32.mrb[0].mxu0
        %v2112 = vadd.f32 %v400, %v2111
        %v2113 = vpop.f32.mrb[0].mxu0
        %v2114 = vadd.f32 %v404, %v2113
        %v2115 = vpop.f32.mrb[0].mxu0
        %v2116 = vadd.f32 %v400, %v2115
        %v2117 = vpop.f32.mrb[0].mxu0
        %v2118 = vadd.f32 %v404, %v2117
        %2119 = vmatprep.mubr.bf16.mxu0 %v638
        %2120 = vmatmul.mubr.bf16.gmra.mrb[0].mxu0 %v637
        %v2121 = vpop.f32.mrb[0].mxu0
        %v2122 = vadd.f32 %v400, %v2121
        %v2123 = vpop.f32.mrb[0].mxu0
        %v2124 = vadd.f32 %v404, %v2123
        %v2125 = vpop.f32.mrb[0].mxu0
        %v2126 = vadd.f32 %v400, %v2125
        %v2127 = vpop.f32.mrb[0].mxu0
        %v2128 = vadd.f32 %v404, %v2127
        %2129 = vmatprep.mubr.bf16.mxu0 %v640
        %2130 = vmatmul.mubr.bf16.gmra.mrb[0].mxu0 %v639
        %v2131 = vpop.f32.mrb[0].mxu0
        %v2132 = vadd.f32 %v400, %v2131
        %v2133 = vpop.f32.mrb[0].mxu0
        %v2134 = vadd.f32 %v404, %v2133
        %v2135 = vpop.f32.mrb[0].mxu0
        %v2136 = vadd.f32 %v400, %v2135
        %v2137 = vpop.f32.mrb[0].mxu0
        %v2138 = vadd.f32 %v404, %v2137
        %2139 = vmatprep.mubr.bf16.mxu0 %v642
        %2140 = vmatmul.mubr.bf16.gmra.mrb[0].mxu0 %v641
        %v2141 = vpop.f32.mrb[0].mxu0
        %v2142 = vadd.f32 %v400, %v2141
        %v2143 = vpop.f32.mrb[0].mxu0
        %v2144 = vadd.f32 %v404, %v2143
        %v2145 = vpop.f32.mrb[0].mxu0
        %v2146 = vadd.f32 %v400, %v2145
        %v2147 = vpop.f32.mrb[0].mxu0
        %v2148 = vadd.f32 %v404, %v2147
        %2149 = vmatprep.mubr.bf16.mxu0 %v644
        %2150 = vmatmul.mubr.bf16.gmra.mrb[0].mxu0 %v643
        %v2151 = vpop.f32.mrb[0].mxu0
        %v2152 = vadd.f32 %v400, %v2151
        %v2153 = vpop.f32.mrb[0].mxu0
        %v2154 = vadd.f32 %v404, %v2153
        %v2155 = vpop.f32.mrb[0].mxu0
        %v2156 = vadd.f32 %v400, %v2155
        %v2157 = vpop.f32.mrb[0].mxu0
        %v2158 = vadd.f32 %v404, %v2157
        %2159 = vmatprep.mubr.bf16.mxu0 %v646
        %2160 = vmatmul.mubr.bf16.gmra.mrb[0].mxu0 %v645
        %v2161 = vpop.f32.mrb[0].mxu0
        %v2162 = vadd.f32 %v400, %v2161
        %v2163 = vpop.f32.mrb[0].mxu0
        %v2164 = vadd.f32 %v404, %v2163
        %v2165 = vpop.f32.mrb[0].mxu0
        %v2166 = vadd.f32 %v400, %v2165
        %v2167 = vpop.f32.mrb[0].mxu0
        %v2168 = vadd.f32 %v404, %v2167
        %2169 = vmatprep.mubr.bf16.mxu0 %v648
        %2170 = vmatmul.mubr.bf16.gmra.mrb[0].mxu0 %v647
        %v2171 = vpop.f32.mrb[0].mxu0
        %v2172 = vadd.f32 %v400, %v2171
        %v2173 = vpop.f32.mrb[0].mxu0
        %v2174 = vadd.f32 %v404, %v2173
        %v2175 = vpop.f32.mrb[0].mxu0
        %v2176 = vadd.f32 %v400, %v2175
        %v2177 = vpop.f32.mrb[0].mxu0
        %v2178 = vadd.f32 %v404, %v2177
        %2179 = vmatprep.mubr.bf16.mxu0 %v650
        %2180 = vmatmul.mubr.bf16.gmra.mrb[0].mxu0 %v649
        %v2181 = vpop.f32.mrb[0].mxu0
        %v2182 = vadd.f32 %v400, %v2181
        %v2183 = vpop.f32.mrb[0].mxu0
        %v2184 = vadd.f32 %v404, %v2183
        %v2185 = vpop.f32.mrb[0].mxu0
        %v2186 = vadd.f32 %v400, %v2185
        %v2187 = vpop.f32.mrb[0].mxu0
        %v2188 = vadd.f32 %v404, %v2187
        %2189 = vmatprep.mubr.bf16.mxu0 %v652
        %2190 = vmatmul.mubr.bf16.gmra.mrb[0].mxu0 %v651
        %v2191 = vpop.f32.mrb[0].mxu0
        %v2192 = vadd.f32 %v400, %v2191
        %v2193 = vpop.f32.mrb[0].mxu0
        %v2194 = vadd.f32 %v404, %v2193
        %v2195 = vpop.f32.mrb[0].mxu0
        %v2196 = vadd.f32 %v400, %v2195
        %v2197 = vpop.f32.mrb[0].mxu0
        %v2198 = vadd.f32 %v404, %v2197
        %2199 = vmatprep.mubr.bf16.mxu0 %v654
        %2200 = vmatmul.mubr.bf16.gmra.mrb[0].mxu0 %v653
        %v2201 = vpop.f32.mrb[0].mxu0
        %v2202 = vadd.f32 %v400, %v2201
        %v2203 = vpop.f32.mrb[0].mxu0
        %v2204 = vadd.f32 %v404, %v2203
        %v2205 = vpop.f32.mrb[0].mxu0
        %v2206 = vadd.f32 %v400, %v2205
        %v2207 = vpop.f32.mrb[0].mxu0
        %v2208 = vadd.f32 %v404, %v2207
        %2209 = vmatprep.mubr.bf16.mxu0 %v656
        %2210 = vmatmul.mubr.bf16.gmra.mrb[0].mxu0 %v655
        %v2211 = vpop.f32.mrb[0].mxu0
        %v2212 = vadd.f32 %v400, %v2211
        %v2213 = vpop.f32.mrb[0].mxu0
        %v2214 = vadd.f32 %v404, %v2213
        %v2215 = vpop.f32.mrb[0].mxu0
        %v2216 = vadd.f32 %v400, %v2215
        %v2217 = vpop.f32.mrb[0].mxu0
        %v2218 = vadd.f32 %v404, %v2217
        %2219 = vmatprep.mubr.bf16.mxu0 %v658
        %2220 = vmatmul.mubr.bf16.gmra.mrb[0].mxu0 %v657
        %v2221 = vpop.f32.mrb[0].mxu0
        %v2222 = vadd.f32 %v400, %v2221
        %v2223 = vpop.f32.mrb[0].mxu0
        %v2224 = vadd.f32 %v404, %v2223
        %v2225 = vpop.f32.mrb[0].mxu0
        %v2226 = vadd.f32 %v400, %v2225
        %v2227 = vpop.f32.mrb[0].mxu0
        %v2228 = vadd.f32 %v404, %v2227
        %2229 = vmatprep.mubr.bf16.mxu0 %v660
        %2230 = vmatmul.mubr.bf16.gmra.mrb[0].mxu0 %v659
        %v2231 = vpop.f32.mrb[0].mxu0
        %v2232 = vadd.f32 %v400, %v2231
        %v2233 = vpop.f32.mrb[0].mxu0
        %v2234 = vadd.f32 %v404, %v2233
        %v2235 = vpop.f32.mrb[0].mxu0
        %v2236 = vadd.f32 %v400, %v2235
        %v2237 = vpop.f32.mrb[0].mxu0
        %v2238 = vadd.f32 %v404, %v2237
        %2239 = vmatprep.mubr.bf16.mxu0 %v662
        %2240 = vmatmul.mubr.bf16.gmra.mrb[0].mxu0 %v661
        %v2241 = vpop.f32.mrb[0].mxu0
        %v2242 = vadd.f32 %v400, %v2241
        %v2243 = vpop.f32.mrb[0].mxu0
        %v2244 = vadd.f32 %v404, %v2243
        %v2245 = vpop.f32.mrb[0].mxu0
        %v2246 = vadd.f32 %v400, %v2245
        %v2247 = vpop.f32.mrb[0].mxu0
        %v2248 = vadd.f32 %v404, %v2247
        %2249 = vmatprep.mubr.bf16.mxu0 %v664
        %2250 = vmatmul.mubr.bf16.gmra.mrb[0].mxu0 %v663
        %v2251 = vpop.f32.mrb[0].mxu0
        %v2252 = vadd.f32 %v400, %v2251
        %v2253 = vpop.f32.mrb[0].mxu0
        %v2254 = vadd.f32 %v404, %v2253
        %v2255 = vpop.f32.mrb[0].mxu0
        %v2256 = vadd.f32 %v400, %v2255
        %v2257 = vpop.f32.mrb[0].mxu0
        %v2258 = vadd.f32 %v404, %v2257
        %2259 = vmatprep.mubr.bf16.mxu0 %v666
        %2260 = vmatmul.mubr.bf16.gmra.mrb[0].mxu0 %v665
        %v2261 = vpop.f32.mrb[0].mxu0
        %v2262 = vadd.f32 %v400, %v2261
        %v2263 = vpop.f32.mrb[0].mxu0
        %v2264 = vadd.f32 %v404, %v2263
        %v2265 = vpop.f32.mrb[0].mxu0
        %v2266 = vadd.f32 %v400, %v2265
        %v2267 = vpop.f32.mrb[0].mxu0
        %v2268 = vadd.f32 %v404, %v2267
        %2269 = vdwg.mxu0
        %v2270 = vpack.c.bf16 %v1250, %v1246
        %v2271 = vpack.c.bf16 %v1252, %v1248
        %v2272 = vpack.c.bf16 %v1603, %v1599
        %v2273 = vpack.c.bf16 %v1605, %v1601
        %v2274 = vpack.c.bf16 %v1956, %v1952
        %v2275 = vpack.c.bf16 %v1958, %v1954
        %v2276 = vpack.c.bf16 %v1260, %v1256
        %v2277 = vpack.c.bf16 %v1262, %v1258
        %v2278 = vpack.c.bf16 %v1613, %v1609
        %v2279 = vpack.c.bf16 %v1615, %v1611
        %v2280 = vpack.c.bf16 %v1966, %v1962
        %v2281 = vpack.c.bf16 %v1968, %v1964
        %v2282 = vpack.c.bf16 %v1270, %v1266
        %v2283 = vpack.c.bf16 %v1272, %v1268
        %v2284 = vpack.c.bf16 %v1623, %v1619
        %v2285 = vpack.c.bf16 %v1625, %v1621
        %v2286 = vpack.c.bf16 %v1976, %v1972
        %v2287 = vpack.c.bf16 %v1978, %v1974
        %v2288 = vpack.c.bf16 %v1280, %v1276
        %v2289 = vpack.c.bf16 %v1282, %v1278
        %v2290 = vpack.c.bf16 %v1633, %v1629
        %v2291 = vpack.c.bf16 %v1635, %v1631
        %v2292 = vpack.c.bf16 %v1986, %v1982
        %v2293 = vpack.c.bf16 %v1988, %v1984
        %v2294 = vpack.c.bf16 %v1290, %v1286
        %v2295 = vpack.c.bf16 %v1292, %v1288
        %v2296 = vpack.c.bf16 %v1643, %v1639
        %v2297 = vpack.c.bf16 %v1645, %v1641
        %v2298 = vpack.c.bf16 %v1996, %v1992
        %v2299 = vpack.c.bf16 %v1998, %v1994
        %v2300 = vpack.c.bf16 %v1300, %v1296
        %v2301 = vpack.c.bf16 %v1302, %v1298
        %v2302 = vpack.c.bf16 %v1653, %v1649
        %v2303 = vpack.c.bf16 %v1655, %v1651
        %v2304 = vpack.c.bf16 %v2006, %v2002
        %v2305 = vpack.c.bf16 %v2008, %v2004
        %v2306 = vpack.c.bf16 %v1310, %v1306
        %v2307 = vpack.c.bf16 %v1312, %v1308
        %v2308 = vpack.c.bf16 %v1663, %v1659
        %v2309 = vpack.c.bf16 %v1665, %v1661
        %v2310 = vpack.c.bf16 %v2016, %v2012
        %v2311 = vpack.c.bf16 %v2018, %v2014
        %v2312 = vpack.c.bf16 %v1320, %v1316
        %v2313 = vpack.c.bf16 %v1322, %v1318
        %v2314 = vpack.c.bf16 %v1673, %v1669
        %v2315 = vpack.c.bf16 %v1675, %v1671
        %v2316 = vpack.c.bf16 %v2026, %v2022
        %v2317 = vpack.c.bf16 %v2028, %v2024
        %v2318 = vpack.c.bf16 %v1330, %v1326
        %v2319 = vpack.c.bf16 %v1332, %v1328
        %v2320 = vpack.c.bf16 %v1683, %v1679
        %v2321 = vpack.c.bf16 %v1685, %v1681
        %v2322 = vpack.c.bf16 %v2036, %v2032
        %v2323 = vpack.c.bf16 %v2038, %v2034
        %v2324 = vpack.c.bf16 %v1340, %v1336
        %v2325 = vpack.c.bf16 %v1342, %v1338
        %v2326 = vpack.c.bf16 %v1693, %v1689
        %v2327 = vpack.c.bf16 %v1695, %v1691
        %v2328 = vpack.c.bf16 %v2046, %v2042
        %v2329 = vpack.c.bf16 %v2048, %v2044
        %v2330 = vpack.c.bf16 %v1350, %v1346
        %v2331 = vpack.c.bf16 %v1352, %v1348
        %v2332 = vpack.c.bf16 %v1703, %v1699
        %v2333 = vpack.c.bf16 %v1705, %v1701
        %v2334 = vpack.c.bf16 %v2056, %v2052
        %v2335 = vpack.c.bf16 %v2058, %v2054
        %v2336 = vpack.c.bf16 %v1360, %v1356
        %v2337 = vpack.c.bf16 %v1362, %v1358
        %v2338 = vpack.c.bf16 %v1713, %v1709
        %v2339 = vpack.c.bf16 %v1715, %v1711
        %v2340 = vpack.c.bf16 %v2066, %v2062
        %v2341 = vpack.c.bf16 %v2068, %v2064
        %v2342 = vpack.c.bf16 %v1370, %v1366
        %v2343 = vpack.c.bf16 %v1372, %v1368
        %v2344 = vpack.c.bf16 %v1723, %v1719
        %v2345 = vpack.c.bf16 %v1725, %v1721
        %v2346 = vpack.c.bf16 %v2076, %v2072
        %v2347 = vpack.c.bf16 %v2078, %v2074
        %v2348 = vpack.c.bf16 %v1380, %v1376
        %v2349 = vpack.c.bf16 %v1382, %v1378
        %v2350 = vpack.c.bf16 %v1733, %v1729
        %v2351 = vpack.c.bf16 %v1735, %v1731
        %v2352 = vpack.c.bf16 %v2086, %v2082
        %v2353 = vpack.c.bf16 %v2088, %v2084
        %v2354 = vpack.c.bf16 %v1390, %v1386
        %v2355 = vpack.c.bf16 %v1392, %v1388
        %v2356 = vpack.c.bf16 %v1743, %v1739
        %v2357 = vpack.c.bf16 %v1745, %v1741
        %v2358 = vpack.c.bf16 %v2096, %v2092
        %v2359 = vpack.c.bf16 %v2098, %v2094
        %v2360 = vpack.c.bf16 %v1400, %v1396
        %v2361 = vpack.c.bf16 %v1402, %v1398
        %v2362 = vpack.c.bf16 %v1753, %v1749
        %v2363 = vpack.c.bf16 %v1755, %v1751
        %v2364 = vpack.c.bf16 %v2106, %v2102
        %v2365 = vpack.c.bf16 %v2108, %v2104
        %v2366 = vpack.c.bf16 %v1410, %v1406
        %v2367 = vpack.c.bf16 %v1412, %v1408
        %v2368 = vpack.c.bf16 %v1763, %v1759
        %v2369 = vpack.c.bf16 %v1765, %v1761
        %v2370 = vpack.c.bf16 %v2116, %v2112
        %v2371 = vpack.c.bf16 %v2118, %v2114
        %v2372 = vpack.c.bf16 %v1420, %v1416
        %v2373 = vpack.c.bf16 %v1422, %v1418
        %v2374 = vpack.c.bf16 %v1773, %v1769
        %v2375 = vpack.c.bf16 %v1775, %v1771
        %v2376 = vpack.c.bf16 %v2126, %v2122
        %v2377 = vpack.c.bf16 %v2128, %v2124
        %v2378 = vpack.c.bf16 %v1430, %v1426
        %v2379 = vpack.c.bf16 %v1432, %v1428
        %v2380 = vpack.c.bf16 %v1783, %v1779
        %v2381 = vpack.c.bf16 %v1785, %v1781
        %v2382 = vpack.c.bf16 %v2136, %v2132
        %v2383 = vpack.c.bf16 %v2138, %v2134
        %v2384 = vpack.c.bf16 %v1440, %v1436
        %v2385 = vpack.c.bf16 %v1442, %v1438
        %v2386 = vpack.c.bf16 %v1793, %v1789
        %v2387 = vpack.c.bf16 %v1795, %v1791
        %v2388 = vpack.c.bf16 %v2146, %v2142
        %v2389 = vpack.c.bf16 %v2148, %v2144
        %v2390 = vpack.c.bf16 %v1450, %v1446
        %v2391 = vpack.c.bf16 %v1452, %v1448
        %v2392 = vpack.c.bf16 %v1803, %v1799
        %v2393 = vpack.c.bf16 %v1805, %v1801
        %v2394 = vpack.c.bf16 %v2156, %v2152
        %v2395 = vpack.c.bf16 %v2158, %v2154
        %v2396 = vpack.c.bf16 %v1460, %v1456
        %v2397 = vpack.c.bf16 %v1462, %v1458
        %v2398 = vpack.c.bf16 %v1813, %v1809
        %v2399 = vpack.c.bf16 %v1815, %v1811
        %v2400 = vpack.c.bf16 %v2166, %v2162
        %v2401 = vpack.c.bf16 %v2168, %v2164
        %v2402 = vpack.c.bf16 %v1470, %v1466
        %v2403 = vpack.c.bf16 %v1472, %v1468
        %v2404 = vpack.c.bf16 %v1823, %v1819
        %v2405 = vpack.c.bf16 %v1825, %v1821
        %v2406 = vpack.c.bf16 %v2176, %v2172
        %v2407 = vpack.c.bf16 %v2178, %v2174
        %v2408 = vpack.c.bf16 %v1480, %v1476
        %v2409 = vpack.c.bf16 %v1482, %v1478
        %v2410 = vpack.c.bf16 %v1833, %v1829
        %v2411 = vpack.c.bf16 %v1835, %v1831
        %v2412 = vpack.c.bf16 %v2186, %v2182
        %v2413 = vpack.c.bf16 %v2188, %v2184
        %v2414 = vpack.c.bf16 %v1490, %v1486
        %v2415 = vpack.c.bf16 %v1492, %v1488
        %v2416 = vpack.c.bf16 %v1843, %v1839
        %v2417 = vpack.c.bf16 %v1845, %v1841
        %v2418 = vpack.c.bf16 %v2196, %v2192
        %v2419 = vpack.c.bf16 %v2198, %v2194
        %v2420 = vpack.c.bf16 %v1500, %v1496
        %v2421 = vpack.c.bf16 %v1502, %v1498
        %v2422 = vpack.c.bf16 %v1853, %v1849
        %v2423 = vpack.c.bf16 %v1855, %v1851
        %v2424 = vpack.c.bf16 %v2206, %v2202
        %v2425 = vpack.c.bf16 %v2208, %v2204
        %v2426 = vpack.c.bf16 %v1510, %v1506
        %v2427 = vpack.c.bf16 %v1512, %v1508
        %v2428 = vpack.c.bf16 %v1863, %v1859
        %v2429 = vpack.c.bf16 %v1865, %v1861
        %v2430 = vpack.c.bf16 %v2216, %v2212
        %v2431 = vpack.c.bf16 %v2218, %v2214
        %v2432 = vpack.c.bf16 %v1520, %v1516
        %v2433 = vpack.c.bf16 %v1522, %v1518
        %v2434 = vpack.c.bf16 %v1873, %v1869
        %v2435 = vpack.c.bf16 %v1875, %v1871
        %v2436 = vpack.c.bf16 %v2226, %v2222
        %v2437 = vpack.c.bf16 %v2228, %v2224
        %v2438 = vpack.c.bf16 %v1530, %v1526
        %v2439 = vpack.c.bf16 %v1532, %v1528
        %v2440 = vpack.c.bf16 %v1883, %v1879
        %v2441 = vpack.c.bf16 %v1885, %v1881
        %v2442 = vpack.c.bf16 %v2236, %v2232
        %v2443 = vpack.c.bf16 %v2238, %v2234
        %v2444 = vpack.c.bf16 %v1540, %v1536
        %v2445 = vpack.c.bf16 %v1542, %v1538
        %v2446 = vpack.c.bf16 %v1893, %v1889
        %v2447 = vpack.c.bf16 %v1895, %v1891
        %v2448 = vpack.c.bf16 %v2246, %v2242
        %v2449 = vpack.c.bf16 %v2248, %v2244
        %v2450 = vpack.c.bf16 %v1550, %v1546
        %v2451 = vpack.c.bf16 %v1552, %v1548
        %v2452 = vpack.c.bf16 %v1903, %v1899
        %v2453 = vpack.c.bf16 %v1905, %v1901
        %v2454 = vpack.c.bf16 %v2256, %v2252
        %v2455 = vpack.c.bf16 %v2258, %v2254
        %v2456 = vpack.c.bf16 %v1560, %v1556
        %v2457 = vpack.c.bf16 %v1562, %v1558
        %v2458 = vpack.c.bf16 %v1913, %v1909
        %v2459 = vpack.c.bf16 %v1915, %v1911
        %v2460 = vpack.c.bf16 %v2266, %v2262
        %v2461 = vpack.c.bf16 %v2268, %v2264
        %v2654 = vunpack.c.l.b16 %v2270
        %v2655 = vunpack.c.l.b16 %v2271
        %v2656 = vunpack.c.l.b16 %v2272
        %v2657 = vunpack.c.l.b16 %v2273
        %v2658 = vunpack.c.l.b16 %v2274
        %v2659 = vunpack.c.l.b16 %v2275
        %v2660 = vunpack.c.h.b16 %v2270
        %v2661 = vunpack.c.h.b16 %v2271
        %v2662 = vunpack.c.h.b16 %v2272
        %v2663 = vunpack.c.h.b16 %v2273
        %v2664 = vunpack.c.h.b16 %v2274
        %v2665 = vunpack.c.h.b16 %v2275
        %v2666 = vunpack.c.l.b16 %v2276
        %v2667 = vunpack.c.l.b16 %v2277
        %v2668 = vunpack.c.l.b16 %v2278
        %v2669 = vunpack.c.l.b16 %v2279
        %v2670 = vunpack.c.l.b16 %v2280
        %v2671 = vunpack.c.l.b16 %v2281
        %v2672 = vunpack.c.h.b16 %v2276
        %v2673 = vunpack.c.h.b16 %v2277
        %v2674 = vunpack.c.h.b16 %v2278
        %v2675 = vunpack.c.h.b16 %v2279
        %v2676 = vunpack.c.h.b16 %v2280
        %v2677 = vunpack.c.h.b16 %v2281
        %v2678 = vunpack.c.l.b16 %v2282
        %v2679 = vunpack.c.l.b16 %v2283
        %v2680 = vunpack.c.l.b16 %v2284
        %v2681 = vunpack.c.l.b16 %v2285
        %v2682 = vunpack.c.l.b16 %v2286
        %v2683 = vunpack.c.l.b16 %v2287
        %v2684 = vunpack.c.h.b16 %v2282
        %v2685 = vunpack.c.h.b16 %v2283
        %v2686 = vunpack.c.h.b16 %v2284
        %v2687 = vunpack.c.h.b16 %v2285
        %v2688 = vunpack.c.h.b16 %v2286
        %v2689 = vunpack.c.h.b16 %v2287
        %v2690 = vunpack.c.l.b16 %v2288
        %v2691 = vunpack.c.l.b16 %v2289
        %v2692 = vunpack.c.l.b16 %v2290
        %v2693 = vunpack.c.l.b16 %v2291
        %v2694 = vunpack.c.l.b16 %v2292
        %v2695 = vunpack.c.l.b16 %v2293
        %v2696 = vunpack.c.h.b16 %v2288
        %v2697 = vunpack.c.h.b16 %v2289
        %v2698 = vunpack.c.h.b16 %v2290
        %v2699 = vunpack.c.h.b16 %v2291
        %v2700 = vunpack.c.h.b16 %v2292
        %v2701 = vunpack.c.h.b16 %v2293
        %v2702 = vunpack.c.l.b16 %v2294
        %v2703 = vunpack.c.l.b16 %v2295
        %v2704 = vunpack.c.l.b16 %v2296
        %v2705 = vunpack.c.l.b16 %v2297
        %v2706 = vunpack.c.l.b16 %v2298
        %v2707 = vunpack.c.l.b16 %v2299
        %v2708 = vunpack.c.h.b16 %v2294
        %v2709 = vunpack.c.h.b16 %v2295
        %v2710 = vunpack.c.h.b16 %v2296
        %v2711 = vunpack.c.h.b16 %v2297
        %v2712 = vunpack.c.h.b16 %v2298
        %v2713 = vunpack.c.h.b16 %v2299
        %v2714 = vunpack.c.l.b16 %v2300
        %v2715 = vunpack.c.l.b16 %v2301
        %v2716 = vunpack.c.l.b16 %v2302
        %v2717 = vunpack.c.l.b16 %v2303
        %v2718 = vunpack.c.l.b16 %v2304
        %v2719 = vunpack.c.l.b16 %v2305
        %v2720 = vunpack.c.h.b16 %v2300
        %v2721 = vunpack.c.h.b16 %v2301
        %v2722 = vunpack.c.h.b16 %v2302
        %v2723 = vunpack.c.h.b16 %v2303
        %v2724 = vunpack.c.h.b16 %v2304
        %v2725 = vunpack.c.h.b16 %v2305
        %v2726 = vunpack.c.l.b16 %v2306
        %v2727 = vunpack.c.l.b16 %v2307
        %v2728 = vunpack.c.l.b16 %v2308
        %v2729 = vunpack.c.l.b16 %v2309
        %v2730 = vunpack.c.l.b16 %v2310
        %v2731 = vunpack.c.l.b16 %v2311
        %v2732 = vunpack.c.h.b16 %v2306
        %v2733 = vunpack.c.h.b16 %v2307
        %v2734 = vunpack.c.h.b16 %v2308
        %v2735 = vunpack.c.h.b16 %v2309
        %v2736 = vunpack.c.h.b16 %v2310
        %v2737 = vunpack.c.h.b16 %v2311
        %v2738 = vunpack.c.l.b16 %v2312
        %v2739 = vunpack.c.l.b16 %v2313
        %v2740 = vunpack.c.l.b16 %v2314
        %v2741 = vunpack.c.l.b16 %v2315
        %v2742 = vunpack.c.l.b16 %v2316
        %v2743 = vunpack.c.l.b16 %v2317
        %v2744 = vunpack.c.h.b16 %v2312
        %v2745 = vunpack.c.h.b16 %v2313
        %v2746 = vunpack.c.h.b16 %v2314
        %v2747 = vunpack.c.h.b16 %v2315
        %v2748 = vunpack.c.h.b16 %v2316
        %v2749 = vunpack.c.h.b16 %v2317
        %v2750 = vunpack.c.l.b16 %v2318
        %v2751 = vunpack.c.l.b16 %v2319
        %v2752 = vunpack.c.l.b16 %v2320
        %v2753 = vunpack.c.l.b16 %v2321
        %v2754 = vunpack.c.l.b16 %v2322
        %v2755 = vunpack.c.l.b16 %v2323
        %v2756 = vunpack.c.h.b16 %v2318
        %v2757 = vunpack.c.h.b16 %v2319
        %v2758 = vunpack.c.h.b16 %v2320
        %v2759 = vunpack.c.h.b16 %v2321
        %v2760 = vunpack.c.h.b16 %v2322
        %v2761 = vunpack.c.h.b16 %v2323
        %v2762 = vunpack.c.l.b16 %v2324
        %v2763 = vunpack.c.l.b16 %v2325
        %v2764 = vunpack.c.l.b16 %v2326
        %v2765 = vunpack.c.l.b16 %v2327
        %v2766 = vunpack.c.l.b16 %v2328
        %v2767 = vunpack.c.l.b16 %v2329
        %v2768 = vunpack.c.h.b16 %v2324
        %v2769 = vunpack.c.h.b16 %v2325
        %v2770 = vunpack.c.h.b16 %v2326
        %v2771 = vunpack.c.h.b16 %v2327
        %v2772 = vunpack.c.h.b16 %v2328
        %v2773 = vunpack.c.h.b16 %v2329
        %v2774 = vunpack.c.l.b16 %v2330
        %v2775 = vunpack.c.l.b16 %v2331
        %v2776 = vunpack.c.l.b16 %v2332
        %v2777 = vunpack.c.l.b16 %v2333
        %v2778 = vunpack.c.l.b16 %v2334
        %v2779 = vunpack.c.l.b16 %v2335
        %v2780 = vunpack.c.h.b16 %v2330
        %v2781 = vunpack.c.h.b16 %v2331
        %v2782 = vunpack.c.h.b16 %v2332
        %v2783 = vunpack.c.h.b16 %v2333
        %v2784 = vunpack.c.h.b16 %v2334
        %v2785 = vunpack.c.h.b16 %v2335
        %v2786 = vunpack.c.l.b16 %v2336
        %v2787 = vunpack.c.l.b16 %v2337
        %v2788 = vunpack.c.l.b16 %v2338
        %v2789 = vunpack.c.l.b16 %v2339
        %v2790 = vunpack.c.l.b16 %v2340
        %v2791 = vunpack.c.l.b16 %v2341
        %v2792 = vunpack.c.h.b16 %v2336
        %v2793 = vunpack.c.h.b16 %v2337
        %v2794 = vunpack.c.h.b16 %v2338
        %v2795 = vunpack.c.h.b16 %v2339
        %v2796 = vunpack.c.h.b16 %v2340
        %v2797 = vunpack.c.h.b16 %v2341
        %v2798 = vunpack.c.l.b16 %v2342
        %v2799 = vunpack.c.l.b16 %v2343
        %v2800 = vunpack.c.l.b16 %v2344
        %v2801 = vunpack.c.l.b16 %v2345
        %v2802 = vunpack.c.l.b16 %v2346
        %v2803 = vunpack.c.l.b16 %v2347
        %v2804 = vunpack.c.h.b16 %v2342
        %v2805 = vunpack.c.h.b16 %v2343
        %v2806 = vunpack.c.h.b16 %v2344
        %v2807 = vunpack.c.h.b16 %v2345
        %v2808 = vunpack.c.h.b16 %v2346
        %v2809 = vunpack.c.h.b16 %v2347
        %v2810 = vunpack.c.l.b16 %v2348
        %v2811 = vunpack.c.l.b16 %v2349
        %v2812 = vunpack.c.l.b16 %v2350
        %v2813 = vunpack.c.l.b16 %v2351
        %v2814 = vunpack.c.l.b16 %v2352
        %v2815 = vunpack.c.l.b16 %v2353
        %v2816 = vunpack.c.h.b16 %v2348
        %v2817 = vunpack.c.h.b16 %v2349
        %v2818 = vunpack.c.h.b16 %v2350
        %v2819 = vunpack.c.h.b16 %v2351
        %v2820 = vunpack.c.h.b16 %v2352
        %v2821 = vunpack.c.h.b16 %v2353
        %v2822 = vunpack.c.l.b16 %v2354
        %v2823 = vunpack.c.l.b16 %v2355
        %v2824 = vunpack.c.l.b16 %v2356
        %v2825 = vunpack.c.l.b16 %v2357
        %v2826 = vunpack.c.l.b16 %v2358
        %v2827 = vunpack.c.l.b16 %v2359
        %v2828 = vunpack.c.h.b16 %v2354
        %v2829 = vunpack.c.h.b16 %v2355
        %v2830 = vunpack.c.h.b16 %v2356
        %v2831 = vunpack.c.h.b16 %v2357
        %v2832 = vunpack.c.h.b16 %v2358
        %v2833 = vunpack.c.h.b16 %v2359
        %v2834 = vunpack.c.l.b16 %v2360
        %v2835 = vunpack.c.l.b16 %v2361
        %v2836 = vunpack.c.l.b16 %v2362
        %v2837 = vunpack.c.l.b16 %v2363
        %v2838 = vunpack.c.l.b16 %v2364
        %v2839 = vunpack.c.l.b16 %v2365
        %v2840 = vunpack.c.h.b16 %v2360
        %v2841 = vunpack.c.h.b16 %v2361
        %v2842 = vunpack.c.h.b16 %v2362
        %v2843 = vunpack.c.h.b16 %v2363
        %v2844 = vunpack.c.h.b16 %v2364
        %v2845 = vunpack.c.h.b16 %v2365
        %v2846 = vunpack.c.l.b16 %v2366
        %v2847 = vunpack.c.l.b16 %v2367
        %v2848 = vunpack.c.l.b16 %v2368
        %v2849 = vunpack.c.l.b16 %v2369
        %v2850 = vunpack.c.l.b16 %v2370
        %v2851 = vunpack.c.l.b16 %v2371
        %v2852 = vunpack.c.h.b16 %v2366
        %v2853 = vunpack.c.h.b16 %v2367
        %v2854 = vunpack.c.h.b16 %v2368
        %v2855 = vunpack.c.h.b16 %v2369
        %v2856 = vunpack.c.h.b16 %v2370
        %v2857 = vunpack.c.h.b16 %v2371
        %v2858 = vunpack.c.l.b16 %v2372
        %v2859 = vunpack.c.l.b16 %v2373
        %v2860 = vunpack.c.l.b16 %v2374
        %v2861 = vunpack.c.l.b16 %v2375
        %v2862 = vunpack.c.l.b16 %v2376
        %v2863 = vunpack.c.l.b16 %v2377
        %v2864 = vunpack.c.h.b16 %v2372
        %v2865 = vunpack.c.h.b16 %v2373
        %v2866 = vunpack.c.h.b16 %v2374
        %v2867 = vunpack.c.h.b16 %v2375
        %v2868 = vunpack.c.h.b16 %v2376
        %v2869 = vunpack.c.h.b16 %v2377
        %v2870 = vunpack.c.l.b16 %v2378
        %v2871 = vunpack.c.l.b16 %v2379
        %v2872 = vunpack.c.l.b16 %v2380
        %v2873 = vunpack.c.l.b16 %v2381
        %v2874 = vunpack.c.l.b16 %v2382
        %v2875 = vunpack.c.l.b16 %v2383
        %v2876 = vunpack.c.h.b16 %v2378
        %v2877 = vunpack.c.h.b16 %v2379
        %v2878 = vunpack.c.h.b16 %v2380
        %v2879 = vunpack.c.h.b16 %v2381
        %v2880 = vunpack.c.h.b16 %v2382
        %v2881 = vunpack.c.h.b16 %v2383
        %v2882 = vunpack.c.l.b16 %v2384
        %v2883 = vunpack.c.l.b16 %v2385
        %v2884 = vunpack.c.l.b16 %v2386
        %v2885 = vunpack.c.l.b16 %v2387
        %v2886 = vunpack.c.l.b16 %v2388
        %v2887 = vunpack.c.l.b16 %v2389
        %v2888 = vunpack.c.h.b16 %v2384
        %v2889 = vunpack.c.h.b16 %v2385
        %v2890 = vunpack.c.h.b16 %v2386
        %v2891 = vunpack.c.h.b16 %v2387
        %v2892 = vunpack.c.h.b16 %v2388
        %v2893 = vunpack.c.h.b16 %v2389
        %v2894 = vunpack.c.l.b16 %v2390
        %v2895 = vunpack.c.l.b16 %v2391
        %v2896 = vunpack.c.l.b16 %v2392
        %v2897 = vunpack.c.l.b16 %v2393
        %v2898 = vunpack.c.l.b16 %v2394
        %v2899 = vunpack.c.l.b16 %v2395
        %v2900 = vunpack.c.h.b16 %v2390
        %v2901 = vunpack.c.h.b16 %v2391
        %v2902 = vunpack.c.h.b16 %v2392
        %v2903 = vunpack.c.h.b16 %v2393
        %v2904 = vunpack.c.h.b16 %v2394
        %v2905 = vunpack.c.h.b16 %v2395
        %v2906 = vunpack.c.l.b16 %v2396
        %v2907 = vunpack.c.l.b16 %v2397
        %v2908 = vunpack.c.l.b16 %v2398
        %v2909 = vunpack.c.l.b16 %v2399
        %v2910 = vunpack.c.l.b16 %v2400
        %v2911 = vunpack.c.l.b16 %v2401
        %v2912 = vunpack.c.h.b16 %v2396
        %v2913 = vunpack.c.h.b16 %v2397
        %v2914 = vunpack.c.h.b16 %v2398
        %v2915 = vunpack.c.h.b16 %v2399
        %v2916 = vunpack.c.h.b16 %v2400
        %v2917 = vunpack.c.h.b16 %v2401
        %v2918 = vunpack.c.l.b16 %v2402
        %v2919 = vunpack.c.l.b16 %v2403
        %v2920 = vunpack.c.l.b16 %v2404
        %v2921 = vunpack.c.l.b16 %v2405
        %v2922 = vunpack.c.l.b16 %v2406
        %v2923 = vunpack.c.l.b16 %v2407
        %v2924 = vunpack.c.h.b16 %v2402
        %v2925 = vunpack.c.h.b16 %v2403
        %v2926 = vunpack.c.h.b16 %v2404
        %v2927 = vunpack.c.h.b16 %v2405
        %v2928 = vunpack.c.h.b16 %v2406
        %v2929 = vunpack.c.h.b16 %v2407
        %v2930 = vunpack.c.l.b16 %v2408
        %v2931 = vunpack.c.l.b16 %v2409
        %v2932 = vunpack.c.l.b16 %v2410
        %v2933 = vunpack.c.l.b16 %v2411
        %v2934 = vunpack.c.l.b16 %v2412
        %v2935 = vunpack.c.l.b16 %v2413
        %v2936 = vunpack.c.h.b16 %v2408
        %v2937 = vunpack.c.h.b16 %v2409
        %v2938 = vunpack.c.h.b16 %v2410
        %v2939 = vunpack.c.h.b16 %v2411
        %v2940 = vunpack.c.h.b16 %v2412
        %v2941 = vunpack.c.h.b16 %v2413
        %v2942 = vunpack.c.l.b16 %v2414
        %v2943 = vunpack.c.l.b16 %v2415
        %v2944 = vunpack.c.l.b16 %v2416
        %v2945 = vunpack.c.l.b16 %v2417
        %v2946 = vunpack.c.l.b16 %v2418
        %v2947 = vunpack.c.l.b16 %v2419
        %v2948 = vunpack.c.h.b16 %v2414
        %v2949 = vunpack.c.h.b16 %v2415
        %v2950 = vunpack.c.h.b16 %v2416
        %v2951 = vunpack.c.h.b16 %v2417
        %v2952 = vunpack.c.h.b16 %v2418
        %v2953 = vunpack.c.h.b16 %v2419
        %v2954 = vunpack.c.l.b16 %v2420
        %v2955 = vunpack.c.l.b16 %v2421
        %v2956 = vunpack.c.l.b16 %v2422
        %v2957 = vunpack.c.l.b16 %v2423
        %v2958 = vunpack.c.l.b16 %v2424
        %v2959 = vunpack.c.l.b16 %v2425
        %v2960 = vunpack.c.h.b16 %v2420
        %v2961 = vunpack.c.h.b16 %v2421
        %v2962 = vunpack.c.h.b16 %v2422
        %v2963 = vunpack.c.h.b16 %v2423
        %v2964 = vunpack.c.h.b16 %v2424
        %v2965 = vunpack.c.h.b16 %v2425
        %v2966 = vunpack.c.l.b16 %v2426
        %v2967 = vunpack.c.l.b16 %v2427
        %v2968 = vunpack.c.l.b16 %v2428
        %v2969 = vunpack.c.l.b16 %v2429
        %v2970 = vunpack.c.l.b16 %v2430
        %v2971 = vunpack.c.l.b16 %v2431
        %v2972 = vunpack.c.h.b16 %v2426
        %v2973 = vunpack.c.h.b16 %v2427
        %v2974 = vunpack.c.h.b16 %v2428
        %v2975 = vunpack.c.h.b16 %v2429
        %v2976 = vunpack.c.h.b16 %v2430
        %v2977 = vunpack.c.h.b16 %v2431
        %v2978 = vunpack.c.l.b16 %v2432
        %v2979 = vunpack.c.l.b16 %v2433
        %v2980 = vunpack.c.l.b16 %v2434
        %v2981 = vunpack.c.l.b16 %v2435
        %v2982 = vunpack.c.l.b16 %v2436
        %v2983 = vunpack.c.l.b16 %v2437
        %v2984 = vunpack.c.h.b16 %v2432
        %v2985 = vunpack.c.h.b16 %v2433
        %v2986 = vunpack.c.h.b16 %v2434
        %v2987 = vunpack.c.h.b16 %v2435
        %v2988 = vunpack.c.h.b16 %v2436
        %v2989 = vunpack.c.h.b16 %v2437
        %v2990 = vunpack.c.l.b16 %v2438
        %v2991 = vunpack.c.l.b16 %v2439
        %v2992 = vunpack.c.l.b16 %v2440
        %v2993 = vunpack.c.l.b16 %v2441
        %v2994 = vunpack.c.l.b16 %v2442
        %v2995 = vunpack.c.l.b16 %v2443
        %v2996 = vunpack.c.h.b16 %v2438
        %v2997 = vunpack.c.h.b16 %v2439
        %v2998 = vunpack.c.h.b16 %v2440
        %v2999 = vunpack.c.h.b16 %v2441
        %v3000 = vunpack.c.h.b16 %v2442
        %v3001 = vunpack.c.h.b16 %v2443
        %v3002 = vunpack.c.l.b16 %v2444
        %v3003 = vunpack.c.l.b16 %v2445
        %v3004 = vunpack.c.l.b16 %v2446
        %v3005 = vunpack.c.l.b16 %v2447
        %v3006 = vunpack.c.l.b16 %v2448
        %v3007 = vunpack.c.l.b16 %v2449
        %v3008 = vunpack.c.h.b16 %v2444
        %v3009 = vunpack.c.h.b16 %v2445
        %v3010 = vunpack.c.h.b16 %v2446
        %v3011 = vunpack.c.h.b16 %v2447
        %v3012 = vunpack.c.h.b16 %v2448
        %v3013 = vunpack.c.h.b16 %v2449
        %v3014 = vunpack.c.l.b16 %v2450
        %v3015 = vunpack.c.l.b16 %v2451
        %v3016 = vunpack.c.l.b16 %v2452
        %v3017 = vunpack.c.l.b16 %v2453
        %v3018 = vunpack.c.l.b16 %v2454
        %v3019 = vunpack.c.l.b16 %v2455
        %v3020 = vunpack.c.h.b16 %v2450
        %v3021 = vunpack.c.h.b16 %v2451
        %v3022 = vunpack.c.h.b16 %v2452
        %v3023 = vunpack.c.h.b16 %v2453
        %v3024 = vunpack.c.h.b16 %v2454
        %v3025 = vunpack.c.h.b16 %v2455
        %v3026 = vunpack.c.l.b16 %v2456
        %v3027 = vunpack.c.l.b16 %v2457
        %v3028 = vunpack.c.l.b16 %v2458
        %v3029 = vunpack.c.l.b16 %v2459
        %v3030 = vunpack.c.l.b16 %v2460
        %v3031 = vunpack.c.l.b16 %v2461
        %v3032 = vunpack.c.h.b16 %v2456
        %v3033 = vunpack.c.h.b16 %v2457
        %v3034 = vunpack.c.h.b16 %v2458
        %v3035 = vunpack.c.h.b16 %v2459
        %v3036 = vunpack.c.h.b16 %v2460
        %v3037 = vunpack.c.h.b16 %v2461
        %v3038 = vpack.c.b16 %v2655, %v2654
        %v3039 = vpack.c.b16 %v2657, %v2656
        %v3040 = vpack.c.b16 %v2659, %v2658
        %v3041 = vpack.c.b16 %v2661, %v2660
        %v3042 = vpack.c.b16 %v2663, %v2662
        %v3043 = vpack.c.b16 %v2665, %v2664
        %v3044 = vpack.c.b16 %v2667, %v2666
        %v3045 = vpack.c.b16 %v2669, %v2668
        %v3046 = vpack.c.b16 %v2671, %v2670
        %v3047 = vpack.c.b16 %v2673, %v2672
        %v3048 = vpack.c.b16 %v2675, %v2674
        %v3049 = vpack.c.b16 %v2677, %v2676
        %v3050 = vpack.c.b16 %v2679, %v2678
        %v3051 = vpack.c.b16 %v2681, %v2680
        %v3052 = vpack.c.b16 %v2683, %v2682
        %v3053 = vpack.c.b16 %v2685, %v2684
        %v3054 = vpack.c.b16 %v2687, %v2686
        %v3055 = vpack.c.b16 %v2689, %v2688
        %v3056 = vpack.c.b16 %v2691, %v2690
        %v3057 = vpack.c.b16 %v2693, %v2692
        %v3058 = vpack.c.b16 %v2695, %v2694
        %v3059 = vpack.c.b16 %v2697, %v2696
        %v3060 = vpack.c.b16 %v2699, %v2698
        %v3061 = vpack.c.b16 %v2701, %v2700
        %v3062 = vpack.c.b16 %v2703, %v2702
        %v3063 = vpack.c.b16 %v2705, %v2704
        %v3064 = vpack.c.b16 %v2707, %v2706
        %v3065 = vpack.c.b16 %v2709, %v2708
        %v3066 = vpack.c.b16 %v2711, %v2710
        %v3067 = vpack.c.b16 %v2713, %v2712
        %v3068 = vpack.c.b16 %v2715, %v2714
        %v3069 = vpack.c.b16 %v2717, %v2716
        %v3070 = vpack.c.b16 %v2719, %v2718
        %v3071 = vpack.c.b16 %v2721, %v2720
        %v3072 = vpack.c.b16 %v2723, %v2722
        %v3073 = vpack.c.b16 %v2725, %v2724
        %v3074 = vpack.c.b16 %v2727, %v2726
        %v3075 = vpack.c.b16 %v2729, %v2728
        %v3076 = vpack.c.b16 %v2731, %v2730
        %v3077 = vpack.c.b16 %v2733, %v2732
        %v3078 = vpack.c.b16 %v2735, %v2734
        %v3079 = vpack.c.b16 %v2737, %v2736
        %v3080 = vpack.c.b16 %v2739, %v2738
        %v3081 = vpack.c.b16 %v2741, %v2740
        %v3082 = vpack.c.b16 %v2743, %v2742
        %v3083 = vpack.c.b16 %v2745, %v2744
        %v3084 = vpack.c.b16 %v2747, %v2746
        %v3085 = vpack.c.b16 %v2749, %v2748
        %v3086 = vpack.c.b16 %v2751, %v2750
        %v3087 = vpack.c.b16 %v2753, %v2752
        %v3088 = vpack.c.b16 %v2755, %v2754
        %v3089 = vpack.c.b16 %v2757, %v2756
        %v3090 = vpack.c.b16 %v2759, %v2758
        %v3091 = vpack.c.b16 %v2761, %v2760
        %v3092 = vpack.c.b16 %v2763, %v2762
        %v3093 = vpack.c.b16 %v2765, %v2764
        %v3094 = vpack.c.b16 %v2767, %v2766
        %v3095 = vpack.c.b16 %v2769, %v2768
        %v3096 = vpack.c.b16 %v2771, %v2770
        %v3097 = vpack.c.b16 %v2773, %v2772
        %v3098 = vpack.c.b16 %v2775, %v2774
        %v3099 = vpack.c.b16 %v2777, %v2776
        %v3100 = vpack.c.b16 %v2779, %v2778
        %v3101 = vpack.c.b16 %v2781, %v2780
        %v3102 = vpack.c.b16 %v2783, %v2782
        %v3103 = vpack.c.b16 %v2785, %v2784
        %v3104 = vpack.c.b16 %v2787, %v2786
        %v3105 = vpack.c.b16 %v2789, %v2788
        %v3106 = vpack.c.b16 %v2791, %v2790
        %v3107 = vpack.c.b16 %v2793, %v2792
        %v3108 = vpack.c.b16 %v2795, %v2794
        %v3109 = vpack.c.b16 %v2797, %v2796
        %v3110 = vpack.c.b16 %v2799, %v2798
        %v3111 = vpack.c.b16 %v2801, %v2800
        %v3112 = vpack.c.b16 %v2803, %v2802
        %v3113 = vpack.c.b16 %v2805, %v2804
        %v3114 = vpack.c.b16 %v2807, %v2806
        %v3115 = vpack.c.b16 %v2809, %v2808
        %v3116 = vpack.c.b16 %v2811, %v2810
        %v3117 = vpack.c.b16 %v2813, %v2812
        %v3118 = vpack.c.b16 %v2815, %v2814
        %v3119 = vpack.c.b16 %v2817, %v2816
        %v3120 = vpack.c.b16 %v2819, %v2818
        %v3121 = vpack.c.b16 %v2821, %v2820
        %v3122 = vpack.c.b16 %v2823, %v2822
        %v3123 = vpack.c.b16 %v2825, %v2824
        %v3124 = vpack.c.b16 %v2827, %v2826
        %v3125 = vpack.c.b16 %v2829, %v2828
        %v3126 = vpack.c.b16 %v2831, %v2830
        %v3127 = vpack.c.b16 %v2833, %v2832
        %v3128 = vpack.c.b16 %v2835, %v2834
        %v3129 = vpack.c.b16 %v2837, %v2836
        %v3130 = vpack.c.b16 %v2839, %v2838
        %v3131 = vpack.c.b16 %v2841, %v2840
        %v3132 = vpack.c.b16 %v2843, %v2842
        %v3133 = vpack.c.b16 %v2845, %v2844
        %v3134 = vpack.c.b16 %v2847, %v2846
        %v3135 = vpack.c.b16 %v2849, %v2848
        %v3136 = vpack.c.b16 %v2851, %v2850
        %v3137 = vpack.c.b16 %v2853, %v2852
        %v3138 = vpack.c.b16 %v2855, %v2854
        %v3139 = vpack.c.b16 %v2857, %v2856
        %v3140 = vpack.c.b16 %v2859, %v2858
        %v3141 = vpack.c.b16 %v2861, %v2860
        %v3142 = vpack.c.b16 %v2863, %v2862
        %v3143 = vpack.c.b16 %v2865, %v2864
        %v3144 = vpack.c.b16 %v2867, %v2866
        %v3145 = vpack.c.b16 %v2869, %v2868
        %v3146 = vpack.c.b16 %v2871, %v2870
        %v3147 = vpack.c.b16 %v2873, %v2872
        %v3148 = vpack.c.b16 %v2875, %v2874
        %v3149 = vpack.c.b16 %v2877, %v2876
        %v3150 = vpack.c.b16 %v2879, %v2878
        %v3151 = vpack.c.b16 %v2881, %v2880
        %v3152 = vpack.c.b16 %v2883, %v2882
        %v3153 = vpack.c.b16 %v2885, %v2884
        %v3154 = vpack.c.b16 %v2887, %v2886
        %v3155 = vpack.c.b16 %v2889, %v2888
        %v3156 = vpack.c.b16 %v2891, %v2890
        %v3157 = vpack.c.b16 %v2893, %v2892
        %v3158 = vpack.c.b16 %v2895, %v2894
        %v3159 = vpack.c.b16 %v2897, %v2896
        %v3160 = vpack.c.b16 %v2899, %v2898
        %v3161 = vpack.c.b16 %v2901, %v2900
        %v3162 = vpack.c.b16 %v2903, %v2902
        %v3163 = vpack.c.b16 %v2905, %v2904
        %v3164 = vpack.c.b16 %v2907, %v2906
        %v3165 = vpack.c.b16 %v2909, %v2908
        %v3166 = vpack.c.b16 %v2911, %v2910
        %v3167 = vpack.c.b16 %v2913, %v2912
        %v3168 = vpack.c.b16 %v2915, %v2914
        %v3169 = vpack.c.b16 %v2917, %v2916
        %v3170 = vpack.c.b16 %v2919, %v2918
        %v3171 = vpack.c.b16 %v2921, %v2920
        %v3172 = vpack.c.b16 %v2923, %v2922
        %v3173 = vpack.c.b16 %v2925, %v2924
        %v3174 = vpack.c.b16 %v2927, %v2926
        %v3175 = vpack.c.b16 %v2929, %v2928
        %v3176 = vpack.c.b16 %v2931, %v2930
        %v3177 = vpack.c.b16 %v2933, %v2932
        %v3178 = vpack.c.b16 %v2935, %v2934
        %v3179 = vpack.c.b16 %v2937, %v2936
        %v3180 = vpack.c.b16 %v2939, %v2938
        %v3181 = vpack.c.b16 %v2941, %v2940
        %v3182 = vpack.c.b16 %v2943, %v2942
        %v3183 = vpack.c.b16 %v2945, %v2944
        %v3184 = vpack.c.b16 %v2947, %v2946
        %v3185 = vpack.c.b16 %v2949, %v2948
        %v3186 = vpack.c.b16 %v2951, %v2950
        %v3187 = vpack.c.b16 %v2953, %v2952
        %v3188 = vpack.c.b16 %v2955, %v2954
        %v3189 = vpack.c.b16 %v2957, %v2956
        %v3190 = vpack.c.b16 %v2959, %v2958
        %v3191 = vpack.c.b16 %v2961, %v2960
        %v3192 = vpack.c.b16 %v2963, %v2962
        %v3193 = vpack.c.b16 %v2965, %v2964
        %v3194 = vpack.c.b16 %v2967, %v2966
        %v3195 = vpack.c.b16 %v2969, %v2968
        %v3196 = vpack.c.b16 %v2971, %v2970
        %v3197 = vpack.c.b16 %v2973, %v2972
        %v3198 = vpack.c.b16 %v2975, %v2974
        %v3199 = vpack.c.b16 %v2977, %v2976
        %v3200 = vpack.c.b16 %v2979, %v2978
        %v3201 = vpack.c.b16 %v2981, %v2980
        %v3202 = vpack.c.b16 %v2983, %v2982
        %v3203 = vpack.c.b16 %v2985, %v2984
        %v3204 = vpack.c.b16 %v2987, %v2986
        %v3205 = vpack.c.b16 %v2989, %v2988
        %v3206 = vpack.c.b16 %v2991, %v2990
        %v3207 = vpack.c.b16 %v2993, %v2992
        %v3208 = vpack.c.b16 %v2995, %v2994
        %v3209 = vpack.c.b16 %v2997, %v2996
        %v3210 = vpack.c.b16 %v2999, %v2998
        %v3211 = vpack.c.b16 %v3001, %v3000
        %v3212 = vpack.c.b16 %v3003, %v3002
        %v3213 = vpack.c.b16 %v3005, %v3004
        %v3214 = vpack.c.b16 %v3007, %v3006
        %v3215 = vpack.c.b16 %v3009, %v3008
        %v3216 = vpack.c.b16 %v3011, %v3010
        %v3217 = vpack.c.b16 %v3013, %v3012
        %v3218 = vpack.c.b16 %v3015, %v3014
        %v3219 = vpack.c.b16 %v3017, %v3016
        %v3220 = vpack.c.b16 %v3019, %v3018
        %v3221 = vpack.c.b16 %v3021, %v3020
        %v3222 = vpack.c.b16 %v3023, %v3022
        %v3223 = vpack.c.b16 %v3025, %v3024
        %v3224 = vpack.c.b16 %v3027, %v3026
        %v3225 = vpack.c.b16 %v3029, %v3028
        %v3226 = vpack.c.b16 %v3031, %v3030
        %v3227 = vpack.c.b16 %v3033, %v3032
        %v3228 = vpack.c.b16 %v3035, %v3034
        %v3229 = vpack.c.b16 %v3037, %v3036
        %3422 = vst [vmem:[%s216] sm:$0xff] %v3038
        %3423 = vst [vmem:[%s216 + $0x8] sm:$0xff] %v3039
        %3424 = vst [vmem:[%s216 + $0x10] sm:$0xff] %v3040
        %3425 = vst [vmem:[%s216 + $0x18] sm:$0xff] %v3041
        %3426 = vst [vmem:[%s216 + $0x20] sm:$0xff] %v3042
        %3427 = vst [vmem:[%s216 + $0x28] sm:$0xff] %v3043
        %3428 = vst [vmem:[%s216 + $0x30] sm:$0xff] %v3044
        %3429 = vst [vmem:[%s216 + $0x38] sm:$0xff] %v3045
        %3430 = vst [vmem:[%s216 + $0x40] sm:$0xff] %v3046
        %3431 = vst [vmem:[%s216 + $0x48] sm:$0xff] %v3047
        %3432 = vst [vmem:[%s216 + $0x50] sm:$0xff] %v3048
        %3433 = vst [vmem:[%s216 + $0x58] sm:$0xff] %v3049
        %3434 = vst [vmem:[%s216 + $0x60] sm:$0xff] %v3050
        %3435 = vst [vmem:[%s216 + $0x68] sm:$0xff] %v3051
        %3436 = vst [vmem:[%s216 + $0x70] sm:$0xff] %v3052
        %3437 = vst [vmem:[%s216 + $0x78] sm:$0xff] %v3053
        %3438 = vst [vmem:[%s216 + $0x80] sm:$0xff] %v3054
        %3439 = vst [vmem:[%s216 + $0x88] sm:$0xff] %v3055
        %3440 = vst [vmem:[%s216 + $0x90] sm:$0xff] %v3056
        %3441 = vst [vmem:[%s216 + $0x98] sm:$0xff] %v3057
        %3442 = vst [vmem:[%s216 + $0xa0] sm:$0xff] %v3058
        %3443 = vst [vmem:[%s216 + $0xa8] sm:$0xff] %v3059
        %3444 = vst [vmem:[%s216 + $0xb0] sm:$0xff] %v3060
        %3445 = vst [vmem:[%s216 + $0xb8] sm:$0xff] %v3061
        %3446 = vst [vmem:[%s216 + $0xc0] sm:$0xff] %v3062
        %3447 = vst [vmem:[%s216 + $0xc8] sm:$0xff] %v3063
        %3448 = vst [vmem:[%s216 + $0xd0] sm:$0xff] %v3064
        %3449 = vst [vmem:[%s216 + $0xd8] sm:$0xff] %v3065
        %3450 = vst [vmem:[%s216 + $0xe0] sm:$0xff] %v3066
        %3451 = vst [vmem:[%s216 + $0xe8] sm:$0xff] %v3067
        %3452 = vst [vmem:[%s216 + $0xf0] sm:$0xff] %v3068
        %3453 = vst [vmem:[%s216 + $0xf8] sm:$0xff] %v3069
        %3454 = vst [vmem:[%s216 + $0x100] sm:$0xff] %v3070
        %3455 = vst [vmem:[%s216 + $0x108] sm:$0xff] %v3071
        %3456 = vst [vmem:[%s216 + $0x110] sm:$0xff] %v3072
        %3457 = vst [vmem:[%s216 + $0x118] sm:$0xff] %v3073
        %3458 = vst [vmem:[%s216 + $0x120] sm:$0xff] %v3074
        %3459 = vst [vmem:[%s216 + $0x128] sm:$0xff] %v3075
        %3460 = vst [vmem:[%s216 + $0x130] sm:$0xff] %v3076
        %3461 = vst [vmem:[%s216 + $0x138] sm:$0xff] %v3077
        %3462 = vst [vmem:[%s216 + $0x140] sm:$0xff] %v3078
        %3463 = vst [vmem:[%s216 + $0x148] sm:$0xff] %v3079
        %3464 = vst [vmem:[%s216 + $0x150] sm:$0xff] %v3080
        %3465 = vst [vmem:[%s216 + $0x158] sm:$0xff] %v3081
        %3466 = vst [vmem:[%s216 + $0x160] sm:$0xff] %v3082
        %3467 = vst [vmem:[%s216 + $0x168] sm:$0xff] %v3083
        %3468 = vst [vmem:[%s216 + $0x170] sm:$0xff] %v3084
        %3469 = vst [vmem:[%s216 + $0x178] sm:$0xff] %v3085
        %3470 = vst [vmem:[%s216 + $0x180] sm:$0xff] %v3086
        %3471 = vst [vmem:[%s216 + $0x188] sm:$0xff] %v3087
        %3472 = vst [vmem:[%s216 + $0x190] sm:$0xff] %v3088
        %3473 = vst [vmem:[%s216 + $0x198] sm:$0xff] %v3089
        %3474 = vst [vmem:[%s216 + $0x1a0] sm:$0xff] %v3090
        %3475 = vst [vmem:[%s216 + $0x1a8] sm:$0xff] %v3091
        %3476 = vst [vmem:[%s216 + $0x1b0] sm:$0xff] %v3092
        %3477 = vst [vmem:[%s216 + $0x1b8] sm:$0xff] %v3093
        %3478 = vst [vmem:[%s216 + $0x1c0] sm:$0xff] %v3094
        %3479 = vst [vmem:[%s216 + $0x1c8] sm:$0xff] %v3095
        %3480 = vst [vmem:[%s216 + $0x1d0] sm:$0xff] %v3096
        %3481 = vst [vmem:[%s216 + $0x1d8] sm:$0xff] %v3097
        %3482 = vst [vmem:[%s216 + $0x1e0] sm:$0xff] %v3098
        %3483 = vst [vmem:[%s216 + $0x1e8] sm:$0xff] %v3099
        %3484 = vst [vmem:[%s216 + $0x1f0] sm:$0xff] %v3100
        %3485 = vst [vmem:[%s216 + $0x1f8] sm:$0xff] %v3101
        %3486 = vst [vmem:[%s216 + $0x200] sm:$0xff] %v3102
        %3487 = vst [vmem:[%s216 + $0x208] sm:$0xff] %v3103
        %3488 = vst [vmem:[%s216 + $0x210] sm:$0xff] %v3104
        %3489 = vst [vmem:[%s216 + $0x218] sm:$0xff] %v3105
        %3490 = vst [vmem:[%s216 + $0x220] sm:$0xff] %v3106
        %3491 = vst [vmem:[%s216 + $0x228] sm:$0xff] %v3107
        %3492 = vst [vmem:[%s216 + $0x230] sm:$0xff] %v3108
        %3493 = vst [vmem:[%s216 + $0x238] sm:$0xff] %v3109
        %3494 = vst [vmem:[%s216 + $0x240] sm:$0xff] %v3110
        %3495 = vst [vmem:[%s216 + $0x248] sm:$0xff] %v3111
        %3496 = vst [vmem:[%s216 + $0x250] sm:$0xff] %v3112
        %3497 = vst [vmem:[%s216 + $0x258] sm:$0xff] %v3113
        %3498 = vst [vmem:[%s216 + $0x260] sm:$0xff] %v3114
        %3499 = vst [vmem:[%s216 + $0x268] sm:$0xff] %v3115
        %3500 = vst [vmem:[%s216 + $0x270] sm:$0xff] %v3116
        %3501 = vst [vmem:[%s216 + $0x278] sm:$0xff] %v3117
        %3502 = vst [vmem:[%s216 + $0x280] sm:$0xff] %v3118
        %3503 = vst [vmem:[%s216 + $0x288] sm:$0xff] %v3119
        %3504 = vst [vmem:[%s216 + $0x290] sm:$0xff] %v3120
        %3505 = vst [vmem:[%s216 + $0x298] sm:$0xff] %v3121
        %3506 = vst [vmem:[%s216 + $0x2a0] sm:$0xff] %v3122
        %3507 = vst [vmem:[%s216 + $0x2a8] sm:$0xff] %v3123
        %3508 = vst [vmem:[%s216 + $0x2b0] sm:$0xff] %v3124
        %3509 = vst [vmem:[%s216 + $0x2b8] sm:$0xff] %v3125
        %3510 = vst [vmem:[%s216 + $0x2c0] sm:$0xff] %v3126
        %3511 = vst [vmem:[%s216 + $0x2c8] sm:$0xff] %v3127
        %3512 = vst [vmem:[%s216 + $0x2d0] sm:$0xff] %v3128
        %3513 = vst [vmem:[%s216 + $0x2d8] sm:$0xff] %v3129
        %3514 = vst [vmem:[%s216 + $0x2e0] sm:$0xff] %v3130
        %3515 = vst [vmem:[%s216 + $0x2e8] sm:$0xff] %v3131
        %3516 = vst [vmem:[%s216 + $0x2f0] sm:$0xff] %v3132
        %3517 = vst [vmem:[%s216 + $0x2f8] sm:$0xff] %v3133
        %3518 = vst [vmem:[%s216 + $0x300] sm:$0xff] %v3134
        %3519 = vst [vmem:[%s216 + $0x308] sm:$0xff] %v3135
        %3520 = vst [vmem:[%s216 + $0x310] sm:$0xff] %v3136
        %3521 = vst [vmem:[%s216 + $0x318] sm:$0xff] %v3137
        %3522 = vst [vmem:[%s216 + $0x320] sm:$0xff] %v3138
        %3523 = vst [vmem:[%s216 + $0x328] sm:$0xff] %v3139
        %3524 = vst [vmem:[%s216 + $0x330] sm:$0xff] %v3140
        %3525 = vst [vmem:[%s216 + $0x338] sm:$0xff] %v3141
        %3526 = vst [vmem:[%s216 + $0x340] sm:$0xff] %v3142
        %3527 = vst [vmem:[%s216 + $0x348] sm:$0xff] %v3143
        %3528 = vst [vmem:[%s216 + $0x350] sm:$0xff] %v3144
        %3529 = vst [vmem:[%s216 + $0x358] sm:$0xff] %v3145
        %3530 = vst [vmem:[%s216 + $0x360] sm:$0xff] %v3146
        %3531 = vst [vmem:[%s216 + $0x368] sm:$0xff] %v3147
        %3532 = vst [vmem:[%s216 + $0x370] sm:$0xff] %v3148
        %3533 = vst [vmem:[%s216 + $0x378] sm:$0xff] %v3149
        %3534 = vst [vmem:[%s216 + $0x380] sm:$0xff] %v3150
        %3535 = vst [vmem:[%s216 + $0x388] sm:$0xff] %v3151
        %3536 = vst [vmem:[%s216 + $0x390] sm:$0xff] %v3152
        %3537 = vst [vmem:[%s216 + $0x398] sm:$0xff] %v3153
        %3538 = vst [vmem:[%s216 + $0x3a0] sm:$0xff] %v3154
        %3539 = vst [vmem:[%s216 + $0x3a8] sm:$0xff] %v3155
        %3540 = vst [vmem:[%s216 + $0x3b0] sm:$0xff] %v3156
        %3541 = vst [vmem:[%s216 + $0x3b8] sm:$0xff] %v3157
        %3542 = vst [vmem:[%s216 + $0x3c0] sm:$0xff] %v3158
        %3543 = vst [vmem:[%s216 + $0x3c8] sm:$0xff] %v3159
        %3544 = vst [vmem:[%s216 + $0x3d0] sm:$0xff] %v3160
        %3545 = vst [vmem:[%s216 + $0x3d8] sm:$0xff] %v3161
        %3546 = vst [vmem:[%s216 + $0x3e0] sm:$0xff] %v3162
        %3547 = vst [vmem:[%s216 + $0x3e8] sm:$0xff] %v3163
        %3548 = vst [vmem:[%s216 + $0x3f0] sm:$0xff] %v3164
        %3549 = vst [vmem:[%s216 + $0x3f8] sm:$0xff] %v3165
        %3550 = vst [vmem:[%s216 + $0x400] sm:$0xff] %v3166
        %3551 = vst [vmem:[%s216 + $0x408] sm:$0xff] %v3167
        %3552 = vst [vmem:[%s216 + $0x410] sm:$0xff] %v3168
        %3553 = vst [vmem:[%s216 + $0x418] sm:$0xff] %v3169
        %3554 = vst [vmem:[%s216 + $0x420] sm:$0xff] %v3170
        %3555 = vst [vmem:[%s216 + $0x428] sm:$0xff] %v3171
        %3556 = vst [vmem:[%s216 + $0x430] sm:$0xff] %v3172
        %3557 = vst [vmem:[%s216 + $0x438] sm:$0xff] %v3173
        %3558 = vst [vmem:[%s216 + $0x440] sm:$0xff] %v3174
        %3559 = vst [vmem:[%s216 + $0x448] sm:$0xff] %v3175
        %3560 = vst [vmem:[%s216 + $0x450] sm:$0xff] %v3176
        %3561 = vst [vmem:[%s216 + $0x458] sm:$0xff] %v3177
        %3562 = vst [vmem:[%s216 + $0x460] sm:$0xff] %v3178
        %3563 = vst [vmem:[%s216 + $0x468] sm:$0xff] %v3179
        %3564 = vst [vmem:[%s216 + $0x470] sm:$0xff] %v3180
        %3565 = vst [vmem:[%s216 + $0x478] sm:$0xff] %v3181
        %3566 = vst [vmem:[%s216 + $0x480] sm:$0xff] %v3182
        %3567 = vst [vmem:[%s216 + $0x488] sm:$0xff] %v3183
        %3568 = vst [vmem:[%s216 + $0x490] sm:$0xff] %v3184
        %3569 = vst [vmem:[%s216 + $0x498] sm:$0xff] %v3185
        %3570 = vst [vmem:[%s216 + $0x4a0] sm:$0xff] %v3186
        %3571 = vst [vmem:[%s216 + $0x4a8] sm:$0xff] %v3187
        %3572 = vst [vmem:[%s216 + $0x4b0] sm:$0xff] %v3188
        %3573 = vst [vmem:[%s216 + $0x4b8] sm:$0xff] %v3189
        %3574 = vst [vmem:[%s216 + $0x4c0] sm:$0xff] %v3190
        %3575 = vst [vmem:[%s216 + $0x4c8] sm:$0xff] %v3191
        %3576 = vst [vmem:[%s216 + $0x4d0] sm:$0xff] %v3192
        %3577 = vst [vmem:[%s216 + $0x4d8] sm:$0xff] %v3193
        %3578 = vst [vmem:[%s216 + $0x4e0] sm:$0xff] %v3194
        %3579 = vst [vmem:[%s216 + $0x4e8] sm:$0xff] %v3195
        %3580 = vst [vmem:[%s216 + $0x4f0] sm:$0xff] %v3196
        %3581 = vst [vmem:[%s216 + $0x4f8] sm:$0xff] %v3197
        %3582 = vst [vmem:[%s216 + $0x500] sm:$0xff] %v3198
        %3583 = vst [vmem:[%s216 + $0x508] sm:$0xff] %v3199
        %3584 = vst [vmem:[%s216 + $0x510] sm:$0xff] %v3200
        %3585 = vst [vmem:[%s216 + $0x518] sm:$0xff] %v3201
        %3586 = vst [vmem:[%s216 + $0x520] sm:$0xff] %v3202
        %3587 = vst [vmem:[%s216 + $0x528] sm:$0xff] %v3203
        %3588 = vst [vmem:[%s216 + $0x530] sm:$0xff] %v3204
        %3589 = vst [vmem:[%s216 + $0x538] sm:$0xff] %v3205
        %3590 = vst [vmem:[%s216 + $0x540] sm:$0xff] %v3206
        %3591 = vst [vmem:[%s216 + $0x548] sm:$0xff] %v3207
        %3592 = vst [vmem:[%s216 + $0x550] sm:$0xff] %v3208
        %3593 = vst [vmem:[%s216 + $0x558] sm:$0xff] %v3209
        %3594 = vst [vmem:[%s216 + $0x560] sm:$0xff] %v3210
        %3595 = vst [vmem:[%s216 + $0x568] sm:$0xff] %v3211
        %3596 = vst [vmem:[%s216 + $0x570] sm:$0xff] %v3212
        %3597 = vst [vmem:[%s216 + $0x578] sm:$0xff] %v3213
        %3598 = vst [vmem:[%s216 + $0x580] sm:$0xff] %v3214
        %3599 = vst [vmem:[%s216 + $0x588] sm:$0xff] %v3215
        %3600 = vst [vmem:[%s216 + $0x590] sm:$0xff] %v3216
        %3601 = vst [vmem:[%s216 + $0x598] sm:$0xff] %v3217
        %3602 = vst [vmem:[%s216 + $0x5a0] sm:$0xff] %v3218
        %3603 = vst [vmem:[%s216 + $0x5a8] sm:$0xff] %v3219
        %3604 = vst [vmem:[%s216 + $0x5b0] sm:$0xff] %v3220
        %3605 = vst [vmem:[%s216 + $0x5b8] sm:$0xff] %v3221
        %3606 = vst [vmem:[%s216 + $0x5c0] sm:$0xff] %v3222
        %3607 = vst [vmem:[%s216 + $0x5c8] sm:$0xff] %v3223
        %3608 = vst [vmem:[%s216 + $0x5d0] sm:$0xff] %v3224
        %3609 = vst [vmem:[%s216 + $0x5d8] sm:$0xff] %v3225
        %3610 = vst [vmem:[%s216 + $0x5e0] sm:$0xff] %v3226
        %3611 = vst [vmem:[%s216 + $0x5e8] sm:$0xff] %v3227
        %3612 = vst [vmem:[%s216 + $0x5f0] sm:$0xff] %v3228
        %3613 = vst [vmem:[%s216 + $0x5f8] sm:$0xff] %v3229
        %s3614 = sand.u32 %s97, 1
        %s3615 = scalar_lea.sflag [#allocation4], %s3614
        %s3616 = sand.u32 %s97, 1
        %s3617 = smul.addr %s3616, 1536
        %s3618 = scalar_lea.vmem [#allocation8], %s3617
        // Predicated region
        $region45: #{tpu_custom_call.1} parent=31 // pred_check
          %p3619 = pneg %p107
        $region46: #{tpu_custom_call.1} parent=31 // pred_check_branch
          %3621 = sbr.rel (%p3619) target = $region48
        $region47: #{tpu_custom_call.1} parent=31 // pred_region
          %s3622 = smul.u32 64, %s21
          %s3624 = ssub.s32 24576, 24576
          %3625 = vsyncadd %s3615, %s3624
          %s3626 = smul.addr %s3622, 6
          %s3627 = smul.addr %s3626, 64
          %s3628 = scalar_lea.hbm %s3, %s3627
          %s3629 = sshll.u32 %s3618, 4
          %s3630 = int_to_ptr.vmem [resolvable:$true] %s3629
          %3635 = dma.vmem_to_hbm [thread:$0]  %s3630, 24576, %s3628, %s3615, 384, 384, 24
        $region48: #{tpu_custom_call.1} parent=31 // pred_fallthru
          _
      $region32: #{tpu_custom_call.1} parent=5 // pred_fallthru
        _
      %p3636 = scmp.le.s32.totalorder 2, %s16
      // Predicated region
      $region49: #{tpu_custom_call.1} parent=5 // pred_check
        %p3637 = pneg %p3636
      $region50: #{tpu_custom_call.1} parent=5 // pred_check_branch
        %3639 = sbr.rel (%p3637) target = $region52
      $region51: #{tpu_custom_call.1} parent=5 // pred_region
        %s3640 = ssub.s32 %s16, 2
        // Predicated region
        $region53: #{tpu_custom_call.1} parent=51 // pred_check
          %p3641 = pneg %p113
        $region54: #{tpu_custom_call.1} parent=51 // pred_check_branch
          %3643 = sbr.rel (%p3641) target = $region56
        $region55: #{tpu_custom_call.1} parent=51 // pred_region
          %s3644 = sand.u32 %s98, 1
          %s3645 = scalar_lea.sflag [#allocation4], %s3644
          %s3646 = sand.u32 %s98, 1
          %s3647 = smul.addr %s3646, 1536
          %s3648 = scalar_lea.vmem [#allocation8], %s3647
          %3649 = dma.done %s3645, 24576
        $region56: #{tpu_custom_call.1} parent=51 // pred_fallthru
          _
      $region52: #{tpu_custom_call.1} parent=5 // pred_fallthru
        _
    $region6: #{tpu_custom_call.1} parent=1 // loop_footer
      %s20 = sadd.s32 1, %s16
    $region7: #{tpu_custom_call.1} parent=1 // loop_footer_branch
      %15 = sbr.rel target = $region3
    $region8: #{tpu_custom_call.1} parent=1 // loop_exit
      _
    %3650 = vsyncpa [#allocation3], 1
    %s3651 = scalar_lea.sflag [#allocation3], 1
    %3652 = vsyncpa %s3651, 1
    %3653 = vsyncpa [#allocation6], 1
    %3654 = vsyncpa [#allocation4], 1
    %s3655 = scalar_lea.sflag [#allocation4], 1
    %3656 = vsyncpa %s3655, 1

</llo_original>
